<compile_context>
chip_gen: v5e
topology: v5e:2x2
jax: 0.10.0
libtpu: 0.0.40
codegen_flags: <defaults>
</compile_context>

<pallas_src>
import functools
import math

import jax
import jax.numpy as jnp
from jax.experimental import pallas as pl
from jax.experimental.pallas import tpu as pltpu


# ------------------------------ helpers -------------------------------------

def _bf16(x):
    return x.astype(jnp.bfloat16)


def _layernorm(h, g, b, eps=1e-5):
    mean = jnp.mean(h, axis=-1, keepdims=True)
    c = h - mean
    var = jnp.mean(c * c, axis=-1, keepdims=True)
    return c * jax.lax.rsqrt(var + eps) * g + b


def _nbytes(shape, dtype):
    n = 1
    for d in shape:
        n *= int(d)
    return n * jnp.dtype(dtype).itemsize


# ------------------------------ fused kernel --------------------------------

def _encoder_kernel(x_ref, eps_ref,
                    embed_w_ref, embed_b_ref,
                    in_w_ref, in_b_ref, out_w_ref, out_b_ref,
                    w1_ref, b1_ref, w2_ref, b2_ref,
                    ln1_g_ref, ln1_b_ref, ln2_g_ref, ln2_b_ref,
                    mulv_w_ref, mulv_b_ref,
                    zml_ref, hin_ref, tout_ref,
                    y_scr,
                    *, n_heads, out_size, zml_width):
    f32 = jnp.float32
    l = pl.program_id(0)
    last = pl.num_programs(0) - 1

    # ---------------- embed (first grid step only) ----------------
    @pl.when(l == 0)
    def _():
        y0 = (jnp.dot(_bf16(x_ref[...]), embed_w_ref[...],
                      preferred_element_type=f32) + embed_b_ref[...])
        y_scr[...] = y0
        hin_ref[...] = y0

    y = y_scr[...]
    N, E = y.shape
    Dh = E // n_heads
    scale = 1.0 / math.sqrt(Dh)

    # ---------------- self-attention ----------------
    # fused QKV projection: (N, 3E)
    qkv = (jnp.dot(_bf16(y), in_w_ref[...], preferred_element_type=f32)
           + in_b_ref[...])

    heads = []
    for h in range(n_heads):
        q = qkv[:, h * Dh:(h + 1) * Dh] * scale            # 1/sqrt(Dh) folded
        k = qkv[:, E + h * Dh:E + (h + 1) * Dh]
        v = qkv[:, 2 * E + h * Dh:2 * E + (h + 1) * Dh]
        s = jax.lax.dot_general(_bf16(q), _bf16(k),
                                (((1,), (1,)), ((), ())),
                                preferred_element_type=f32)      # (N, N)
        s = s - jnp.max(s, axis=-1, keepdims=True)
        p = jnp.exp(s)
        p = p * pl.reciprocal(jnp.sum(p, axis=-1, keepdims=True), approx=True)
        heads.append(jnp.dot(_bf16(p), _bf16(v),
                             preferred_element_type=f32))        # (N, Dh)

    # concat heads once, then ONE full-width (N,E)@(E,E) out-proj matmul (bf16)
    attn_in = jnp.concatenate(heads, axis=-1)                    # (N, E)
    attn = (jnp.dot(_bf16(attn_in), out_w_ref[...],
                    preferred_element_type=f32) + out_b_ref[...])
    y = _layernorm(y + attn, ln1_g_ref[...], ln1_b_ref[...])

    # ---------------- feed-forward ----------------
    h1 = (jnp.dot(_bf16(y), w1_ref[...], preferred_element_type=f32)
          + b1_ref[...])
    h1 = jnp.maximum(h1, 0.0)
    ff = (jnp.dot(_bf16(h1), w2_ref[...], preferred_element_type=f32)
          + b2_ref[...])
    y = _layernorm(y + ff, ln2_g_ref[...], ln2_b_ref[...])
    y_scr[...] = y

    # -------- tail (last grid step): mu/logvar + reparameterize --------
    @pl.when(l == last)
    def _():
        tout_ref[...] = y
        mulv = (jnp.dot(_bf16(y), mulv_w_ref[...],
                        preferred_element_type=f32) + mulv_b_ref[...])
        mu = mulv[:, :out_size]
        lv = mulv[:, out_size:]
        z = eps_ref[...] * jnp.exp(0.5 * lv) + mu
        pad = jnp.zeros((N, zml_width - 3 * out_size), f32)
        # lane-dense fused output: [ z | mu | logvar | 0-pad ]  (width 128k)
        zml_ref[...] = jnp.concatenate([z, mu, lv, pad], axis=-1)


# ------------------------- parameters & forward ------------------------------

def init_params(key, input_size, output_size, hidden_size, n_layers, dim_ff=2048):
    """Deterministic synthetic params; Linear weights stored (in, out)."""
    def dense(k, fan_in, fan_out):
        kw, kb = jax.random.split(k)
        lim = 1.0 / math.sqrt(fan_in)
        w = jax.random.uniform(kw, (fan_in, fan_out), jnp.float32, -lim, lim)
        b = jax.random.uniform(kb, (fan_out,), jnp.float32, -lim, lim)
        return w, b

    keys = jax.random.split(key, 3 + n_layers)
    params = {
        "embed": dense(keys[0], input_size, hidden_size),
        "mu": dense(keys[1], hidden_size, output_size),
        "logvar": dense(keys[2], hidden_size, output_size),
        "layers": [],
    }
    for l in range(n_layers):
        lk = jax.random.split(keys[3 + l], 4)
        in_w, in_b = dense(lk[0], hidden_size, 3 * hidden_size)   # in_proj (QKV)
        out_w, out_b = dense(lk[1], hidden_size, hidden_size)     # attn out_proj
        w1, b1 = dense(lk[2], hidden_size, dim_ff)                # linear1
        w2, b2 = dense(lk[3], dim_ff, hidden_size)                # linear2
        params["layers"].append(dict(
            in_w=in_w, in_b=in_b, out_w=out_w, out_b=out_b,
            w1=w1, b1=b1, w2=w2, b2=b2,
            ln1_g=jnp.ones((hidden_size,), jnp.float32),
            ln1_b=jnp.zeros((hidden_size,), jnp.float32),
            ln2_g=jnp.ones((hidden_size,), jnp.float32),
            ln2_b=jnp.zeros((hidden_size,), jnp.float32),
        ))
    return params


def encoder_forward(params, inputs, eps, n_heads, input_size):
    x = inputs.reshape(-1, input_size).astype(jnp.float32)   # inputs.view(-1, I)
    N = x.shape[0]
    E = params["embed"][0].shape[1]
    out_size = params["mu"][0].shape[1]
    n_layers = len(params["layers"])
    F = params["layers"][0]["w1"].shape[1]

    # Stack per-layer params on a leading layer axis (streamed by the grid) and
    # cast every MXU weight to bf16 (f32 accumulation inside the kernel).
    stk = lambda name: jnp.stack([lp[name] for lp in params["layers"]])
    embed_w = _bf16(params["embed"][0])                        # (I, E)
    embed_b = params["embed"][1].reshape(1, E)
    in_w = _bf16(stk("in_w"))                                  # (L, E, 3E)
    in_b = stk("in_b").reshape(n_layers, 1, 3 * E)
    out_w = _bf16(stk("out_w"))                                # (L, E, E) bf16
    out_b = stk("out_b").reshape(n_layers, 1, E)
    w1 = _bf16(stk("w1"))                                      # (L, E, F)
    b1 = stk("b1").reshape(n_layers, 1, F)
    w2 = _bf16(stk("w2"))                                      # (L, F, E)
    b2 = stk("b2").reshape(n_layers, 1, E)
    ln1_g = stk("ln1_g").reshape(n_layers, 1, E)
    ln1_b = stk("ln1_b").reshape(n_layers, 1, E)
    ln2_g = stk("ln2_g").reshape(n_layers, 1, E)
    ln2_b = stk("ln2_b").reshape(n_layers, 1, E)
    # fused mu/logvar projection
    mulv_w = _bf16(jnp.concatenate([params["mu"][0], params["logvar"][0]], axis=1))
    mulv_b = jnp.concatenate([params["mu"][1], params["logvar"][1]]
                             ).reshape(1, 2 * out_size)

    zml_width = ((3 * out_size + 127) // 128) * 128            # lane-dense pad

    const_ops = (x, eps, embed_w, embed_b)                     # grid-invariant
    layer_ops = (in_w, in_b, out_w, out_b, w1, b1, w2, b2,
                 ln1_g, ln1_b, ln2_g, ln2_b)                   # streamed per layer
    tail_ops = (mulv_w, mulv_b)                                # grid-invariant

    def _const_spec(shape):
        nd = len(shape)
        return pl.BlockSpec(tuple(shape), lambda l, _nd=nd: (0,) * _nd)

    def _layer_spec(arr):
        rest = tuple(arr.shape[1:])
        nd = len(rest)
        return pl.BlockSpec((None,) + rest, lambda l, _nd=nd: (l,) + (0,) * _nd)

    in_specs = ([_const_spec(a.shape) for a in const_ops]
                + [_layer_spec(a) for a in layer_ops]
                + [_const_spec(a.shape) for a in tail_ops])

    out_shapes = (
        jax.ShapeDtypeStruct((N, zml_width), jnp.float32),     # z | mu | logvar
        jax.ShapeDtypeStruct((N, E), jnp.float32),             # h_in
        jax.ShapeDtypeStruct((N, E), jnp.float32),             # t_out
    )
    out_specs = tuple(_const_spec(s.shape) for s in out_shapes)

    # Size the scoped VMEM limit from actual residency: constants + one layer
    # block (x2 for double buffering) + outputs + activation scratch + slack.
    resident = sum(_nbytes(a.shape, a.dtype) for a in const_ops + tail_ops)
    per_layer = sum(_nbytes(a.shape[1:], a.dtype) for a in layer_ops)
    out_bytes = sum(_nbytes(s.shape, s.dtype) for s in out_shapes)
    scratch_bytes = _nbytes((N, E), jnp.float32)
    need = 2 * (resident + per_layer + out_bytes) + scratch_bytes + (4 << 20)
    vmem_limit = int(min(max(need, 32 << 20), 64 << 20))       # cap at v7x phys

    kernel = functools.partial(_encoder_kernel, n_heads=n_heads,
                               out_size=out_size, zml_width=zml_width)

    zml, h_in, t_out = pl.pallas_call(
        kernel,
        out_shape=out_shapes,
        grid=(n_layers,),
        in_specs=in_specs,
        out_specs=out_specs,
        scratch_shapes=[pltpu.VMEM((N, E), jnp.float32)],      # activation carry
        compiler_params=pltpu.CompilerParams(
            dimension_semantics=("arbitrary",),
            vmem_limit_bytes=vmem_limit),
    )(*const_ops, *layer_ops, *tail_ops)

    z = zml[:, :out_size]
    mu = zml[:, out_size:2 * out_size]
    logvar = zml[:, 2 * out_size:3 * out_size]

    # TODO(synk): PyTorch draws eps with torch RNG (.normal_()); here eps comes
    # from jax.random in the wrapper, so z matches in distribution, not bitwise.
    # TODO(synk): E=32 / out=8 underfill the 256-wide MXU and 128-lane vregs;
    # padding hidden/out to 128 end-to-end would need masked LayerNorm and is
    # only worth it at production sizes.
    return z, mu, logvar, h_in, t_out


# --------------------------------- main --------------------------------------

if __name__ == "__main__":
    input_size, output_size, hidden_size = 16, 8, 32
    n_heads, n_layers = 4, 2
    B, T = 2, 8                        # inputs (B, T, input_size) -> N = 16 tokens

    key = jax.random.PRNGKey(0)
    kp, kx, ke = jax.random.split(key, 3)
    params = init_params(kp, input_size, output_size, hidden_size, n_layers)
    inputs = jax.random.normal(kx, (B, T, input_size), jnp.float32)
    N = B * T
    eps = jax.random.normal(ke, (N, output_size), jnp.float32)

    fwd = jax.jit(lambda p, x, e: encoder_forward(p, x, e, n_heads, input_size))
    z, mu, logvar, h_in, t_out = fwd(params, inputs, eps)
    jax.block_until_ready(z)
    jax.block_until_ready(t_out)

    assert z.shape == (N, output_size)
    assert mu.shape == (N, output_size) and logvar.shape == (N, output_size)
    assert h_in.shape == (N, hidden_size) and t_out.shape == (N, hidden_size)
    assert bool(jnp.all(jnp.isfinite(z)))
    assert bool(jnp.all(jnp.isfinite(mu))) and bool(jnp.all(jnp.isfinite(logvar)))
    assert bool(jnp.all(jnp.isfinite(h_in))) and bool(jnp.all(jnp.isfinite(t_out)))
    print("KERNEL_OK")
</pallas_src>

<mosaic_0001>
module attributes {stable_mosaic.version = 11 : i64} {
  func.func @_encoder_kernel(%arg0: i32, %arg1: memref<16x16xf32, #tpu.memory_space<vmem>>, %arg2: memref<16x8xf32, #tpu.memory_space<vmem>>, %arg3: memref<16x32xbf16, #tpu.memory_space<vmem>>, %arg4: memref<1x32xf32, #tpu.memory_space<vmem>>, %arg5: memref<1x32x96xbf16, #tpu.memory_space<vmem>>, %arg6: memref<1x1x96xf32, #tpu.memory_space<vmem>>, %arg7: memref<1x32x32xbf16, #tpu.memory_space<vmem>>, %arg8: memref<1x1x32xf32, #tpu.memory_space<vmem>>, %arg9: memref<1x32x2048xbf16, #tpu.memory_space<vmem>>, %arg10: memref<1x1x2048xf32, #tpu.memory_space<vmem>>, %arg11: memref<1x2048x32xbf16, #tpu.memory_space<vmem>>, %arg12: memref<1x1x32xf32, #tpu.memory_space<vmem>>, %arg13: memref<1x1x32xf32, #tpu.memory_space<vmem>>, %arg14: memref<1x1x32xf32, #tpu.memory_space<vmem>>, %arg15: memref<1x1x32xf32, #tpu.memory_space<vmem>>, %arg16: memref<1x1x32xf32, #tpu.memory_space<vmem>>, %arg17: memref<32x16xbf16, #tpu.memory_space<vmem>>, %arg18: memref<1x16xf32, #tpu.memory_space<vmem>>, %arg19: memref<16x128xf32, #tpu.memory_space<vmem>>, %arg20: memref<16x32xf32, #tpu.memory_space<vmem>>, %arg21: memref<16x32xf32, #tpu.memory_space<vmem>>, %arg22: memref<16x32xf32, #tpu.memory_space<vmem>>) attributes {dimension_semantics = [#tpu.dimension_semantics<arbitrary>], iteration_bounds = array<i64: 2>, scalar_prefetch = 0 : i64, scratch_operands = 1 : i64, tpu.core_type = #tpu.core_type<tc>, window_params = [{pipeline_mode = #tpu.pipeline_mode<synchronous>, transform_indices = @transform_0, window_bounds = array<i64: 16, 16>}, {pipeline_mode = #tpu.pipeline_mode<synchronous>, transform_indices = @transform_1, window_bounds = array<i64: 16, 8>}, {pipeline_mode = #tpu.pipeline_mode<synchronous>, transform_indices = @transform_2, window_bounds = array<i64: 16, 32>}, {pipeline_mode = #tpu.pipeline_mode<synchronous>, transform_indices = @transform_3, window_bounds = array<i64: 1, 32>}, {transform_indices = @transform_4, window_bounds = array<i64: 1, 32, 96>}, {transform_indices = @transform_5, window_bounds = array<i64: 1, 1, 96>}, {transform_indices = @transform_6, window_bounds = array<i64: 1, 32, 32>}, {transform_indices = @transform_7, window_bounds = array<i64: 1, 1, 32>}, {transform_indices = @transform_8, window_bounds = array<i64: 1, 32, 2048>}, {transform_indices = @transform_9, window_bounds = array<i64: 1, 1, 2048>}, {transform_indices = @transform_10, window_bounds = array<i64: 1, 2048, 32>}, {transform_indices = @transform_11, window_bounds = array<i64: 1, 1, 32>}, {transform_indices = @transform_12, window_bounds = array<i64: 1, 1, 32>}, {transform_indices = @transform_13, window_bounds = array<i64: 1, 1, 32>}, {transform_indices = @transform_14, window_bounds = array<i64: 1, 1, 32>}, {transform_indices = @transform_15, window_bounds = array<i64: 1, 1, 32>}, {pipeline_mode = #tpu.pipeline_mode<synchronous>, transform_indices = @transform_16, window_bounds = array<i64: 32, 16>}, {pipeline_mode = #tpu.pipeline_mode<synchronous>, transform_indices = @transform_17, window_bounds = array<i64: 1, 16>}, {pipeline_mode = #tpu.pipeline_mode<synchronous>, transform_indices = @transform_18, window_bounds = array<i64: 16, 128>}, {pipeline_mode = #tpu.pipeline_mode<synchronous>, transform_indices = @transform_19, window_bounds = array<i64: 16, 32>}, {pipeline_mode = #tpu.pipeline_mode<synchronous>, transform_indices = @transform_20, window_bounds = array<i64: 16, 32>}]} {
    %c0_i32 = arith.constant 0 : i32
    %0 = arith.cmpi eq, %arg0, %c0_i32 : i32
    %1 = arith.extui %0 : i1 to i32
    %c0_i32_0 = arith.constant 0 : i32
    %2 = arith.cmpi ne, %1, %c0_i32_0 : i32
    scf.if %2 {
      %c0_75 = arith.constant 0 : index
      %c0_76 = arith.constant 0 : index
      %177 = vector.load %arg1[%c0_75, %c0_76] : memref<16x16xf32, #tpu.memory_space<vmem>>, vector<16x16xf32>
      %178 = arith.truncf %177 : vector<16x16xf32> to vector<16x16xbf16>
      %c0_77 = arith.constant 0 : index
      %c0_78 = arith.constant 0 : index
      %179 = vector.load %arg3[%c0_77, %c0_78] : memref<16x32xbf16, #tpu.memory_space<vmem>>, vector<16x32xbf16>
      %cst_79 = arith.constant dense<0.000000e+00> : vector<16x32xf32>
      %180 = tpu.matmul %178, %179, %cst_79 {dimension_numbers = #tpu.dot_dimension_numbers<[1], [0], [0], [1], [0, 0, 1, 1], [], []>} : vector<16x16xbf16>, vector<16x32xbf16>, vector<16x32xf32> -> vector<16x32xf32>
      %c0_80 = arith.constant 0 : index
      %c0_81 = arith.constant 0 : index
      %181 = vector.load %arg4[%c0_80, %c0_81] : memref<1x32xf32, #tpu.memory_space<vmem>>, vector<1x32xf32>
      %182 = vector.broadcast %181 : vector<1x32xf32> to vector<16x32xf32>
      %183 = arith.addf %180, %182 : vector<16x32xf32>
      %c0_82 = arith.constant 0 : index
      %c0_83 = arith.constant 0 : index
      %184 = vector.load %arg22[%c0_82, %c0_83] : memref<16x32xf32, #tpu.memory_space<vmem>>, vector<16x32xf32>
      tpu.vector_store %arg22[%c0_82, %c0_83], %183 {strides = array<i32>} : memref<16x32xf32, #tpu.memory_space<vmem>>, vector<16x32xf32>,
      %c0_84 = arith.constant 0 : index
      %c0_85 = arith.constant 0 : index
      %185 = vector.load %arg20[%c0_84, %c0_85] : memref<16x32xf32, #tpu.memory_space<vmem>>, vector<16x32xf32>
      tpu.vector_store %arg20[%c0_84, %c0_85], %183 {strides = array<i32>} : memref<16x32xf32, #tpu.memory_space<vmem>>, vector<16x32xf32>,
    } else {
    }
    %c0 = arith.constant 0 : index
    %c0_1 = arith.constant 0 : index
    %3 = vector.load %arg22[%c0, %c0_1] : memref<16x32xf32, #tpu.memory_space<vmem>>, vector<16x32xf32>
    %4 = arith.truncf %3 : vector<16x32xf32> to vector<16x32xbf16>
    %c0_2 = arith.constant 0 : index
    %c0_3 = arith.constant 0 : index
    %c0_4 = arith.constant 0 : index
    %5 = vector.load %arg5[%c0_2, %c0_3, %c0_4] : memref<1x32x96xbf16, #tpu.memory_space<vmem>>, vector<1x32x96xbf16>
    %6 = vector.shape_cast %5 : vector<1x32x96xbf16> to vector<32x96xbf16>
    %cst = arith.constant dense<0.000000e+00> : vector<16x96xf32>
    %7 = tpu.matmul %4, %6, %cst {dimension_numbers = #tpu.dot_dimension_numbers<[1], [0], [0], [1], [0, 0, 1, 1], [], []>} : vector<16x32xbf16>, vector<32x96xbf16>, vector<16x96xf32> -> vector<16x96xf32>
    %c0_5 = arith.constant 0 : index
    %c0_6 = arith.constant 0 : index
    %c0_7 = arith.constant 0 : index
    %8 = vector.load %arg6[%c0_5, %c0_6, %c0_7] : memref<1x1x96xf32, #tpu.memory_space<vmem>>, vector<1x1x96xf32>
    %9 = vector.shape_cast %8 : vector<1x1x96xf32> to vector<1x96xf32>
    %10 = vector.broadcast %9 : vector<1x96xf32> to vector<16x96xf32>
    %11 = arith.addf %7, %10 : vector<16x96xf32>
    %12 = vector.extract_strided_slice %11 {offsets = [0, 0], sizes = [16, 8], strides = [1, 1]} : vector<16x96xf32> to vector<16x8xf32>
    %cst_8 = arith.constant 0.353553385 : f32
    %13 = vector.broadcast %cst_8 : f32 to vector<16x8xf32>
    %14 = arith.mulf %12, %13 : vector<16x8xf32>
    %15 = vector.extract_strided_slice %11 {offsets = [0, 32], sizes = [16, 8], strides = [1, 1]} : vector<16x96xf32> to vector<16x8xf32>
    %16 = vector.extract_strided_slice %11 {offsets = [0, 64], sizes = [16, 8], strides = [1, 1]} : vector<16x96xf32> to vector<16x8xf32>
    %17 = arith.truncf %14 : vector<16x8xf32> to vector<16x8xbf16>
    %18 = arith.truncf %15 : vector<16x8xf32> to vector<16x8xbf16>
    %cst_9 = arith.constant dense<0.000000e+00> : vector<16x16xf32>
    %19 = tpu.matmul %17, %18, %cst_9 {dimension_numbers = #tpu.dot_dimension_numbers<[1], [1], [0], [0], [0, 0, 1, 0], [], []>} : vector<16x8xbf16>, vector<16x8xbf16>, vector<16x16xf32> -> vector<16x16xf32>
    %cst_10 = arith.constant dense<0xFF800000> : vector<16xf32>
    %20 = vector.multi_reduction <maximumf>, %19, %cst_10 [1] : vector<16x16xf32> to vector<16xf32>
    %21 = vector.shape_cast %20 : vector<16xf32> to vector<16x1xf32>
    %22 = vector.broadcast %21 : vector<16x1xf32> to vector<16x16xf32>
    %23 = arith.subf %19, %22 : vector<16x16xf32>
    %24 = math.exp %23 : vector<16x16xf32>
    %cst_11 = arith.constant dense<0.000000e+00> : vector<16xf32>
    %25 = vector.multi_reduction <add>, %24, %cst_11 [1] : vector<16x16xf32> to vector<16xf32>
    %26 = vector.shape_cast %25 : vector<16xf32> to vector<16x1xf32>
    %27 = tpu.reciprocal %26 {approx = true} : vector<16x1xf32> -> vector<16x1xf32>
    %28 = vector.broadcast %27 : vector<16x1xf32> to vector<16x16xf32>
    %29 = arith.mulf %24, %28 : vector<16x16xf32>
    %30 = arith.truncf %29 : vector<16x16xf32> to vector<16x16xbf16>
    %31 = arith.truncf %16 : vector<16x8xf32> to vector<16x8xbf16>
    %cst_12 = arith.constant dense<0.000000e+00> : vector<16x8xf32>
    %32 = tpu.matmul %30, %31, %cst_12 {dimension_numbers = #tpu.dot_dimension_numbers<[1], [0], [0], [1], [0, 0, 1, 1], [], []>} : vector<16x16xbf16>, vector<16x8xbf16>, vector<16x8xf32> -> vector<16x8xf32>
    %33 = vector.extract_strided_slice %11 {offsets = [0, 8], sizes = [16, 8], strides = [1, 1]} : vector<16x96xf32> to vector<16x8xf32>
    %cst_13 = arith.constant 0.353553385 : f32
    %34 = vector.broadcast %cst_13 : f32 to vector<16x8xf32>
    %35 = arith.mulf %33, %34 : vector<16x8xf32>
    %36 = vector.extract_strided_slice %11 {offsets = [0, 40], sizes = [16, 8], strides = [1, 1]} : vector<16x96xf32> to vector<16x8xf32>
    %37 = vector.extract_strided_slice %11 {offsets = [0, 72], sizes = [16, 8], strides = [1, 1]} : vector<16x96xf32> to vector<16x8xf32>
    %38 = arith.truncf %35 : vector<16x8xf32> to vector<16x8xbf16>
    %39 = arith.truncf %36 : vector<16x8xf32> to vector<16x8xbf16>
    %cst_14 = arith.constant dense<0.000000e+00> : vector<16x16xf32>
    %40 = tpu.matmul %38, %39, %cst_14 {dimension_numbers = #tpu.dot_dimension_numbers<[1], [1], [0], [0], [0, 0, 1, 0], [], []>} : vector<16x8xbf16>, vector<16x8xbf16>, vector<16x16xf32> -> vector<16x16xf32>
    %cst_15 = arith.constant dense<0xFF800000> : vector<16xf32>
    %41 = vector.multi_reduction <maximumf>, %40, %cst_15 [1] : vector<16x16xf32> to vector<16xf32>
    %42 = vector.shape_cast %41 : vector<16xf32> to vector<16x1xf32>
    %43 = vector.broadcast %42 : vector<16x1xf32> to vector<16x16xf32>
    %44 = arith.subf %40, %43 : vector<16x16xf32>
    %45 = math.exp %44 : vector<16x16xf32>
    %cst_16 = arith.constant dense<0.000000e+00> : vector<16xf32>
    %46 = vector.multi_reduction <add>, %45, %cst_16 [1] : vector<16x16xf32> to vector<16xf32>
    %47 = vector.shape_cast %46 : vector<16xf32> to vector<16x1xf32>
    %48 = tpu.reciprocal %47 {approx = true} : vector<16x1xf32> -> vector<16x1xf32>
    %49 = vector.broadcast %48 : vector<16x1xf32> to vector<16x16xf32>
    %50 = arith.mulf %45, %49 : vector<16x16xf32>
    %51 = arith.truncf %50 : vector<16x16xf32> to vector<16x16xbf16>
    %52 = arith.truncf %37 : vector<16x8xf32> to vector<16x8xbf16>
    %cst_17 = arith.constant dense<0.000000e+00> : vector<16x8xf32>
    %53 = tpu.matmul %51, %52, %cst_17 {dimension_numbers = #tpu.dot_dimension_numbers<[1], [0], [0], [1], [0, 0, 1, 1], [], []>} : vector<16x16xbf16>, vector<16x8xbf16>, vector<16x8xf32> -> vector<16x8xf32>
    %54 = vector.extract_strided_slice %11 {offsets = [0, 16], sizes = [16, 8], strides = [1, 1]} : vector<16x96xf32> to vector<16x8xf32>
    %cst_18 = arith.constant 0.353553385 : f32
    %55 = vector.broadcast %cst_18 : f32 to vector<16x8xf32>
    %56 = arith.mulf %54, %55 : vector<16x8xf32>
    %57 = vector.extract_strided_slice %11 {offsets = [0, 48], sizes = [16, 8], strides = [1, 1]} : vector<16x96xf32> to vector<16x8xf32>
    %58 = vector.extract_strided_slice %11 {offsets = [0, 80], sizes = [16, 8], strides = [1, 1]} : vector<16x96xf32> to vector<16x8xf32>
    %59 = arith.truncf %56 : vector<16x8xf32> to vector<16x8xbf16>
    %60 = arith.truncf %57 : vector<16x8xf32> to vector<16x8xbf16>
    %cst_19 = arith.constant dense<0.000000e+00> : vector<16x16xf32>
    %61 = tpu.matmul %59, %60, %cst_19 {dimension_numbers = #tpu.dot_dimension_numbers<[1], [1], [0], [0], [0, 0, 1, 0], [], []>} : vector<16x8xbf16>, vector<16x8xbf16>, vector<16x16xf32> -> vector<16x16xf32>
    %cst_20 = arith.constant dense<0xFF800000> : vector<16xf32>
    %62 = vector.multi_reduction <maximumf>, %61, %cst_20 [1] : vector<16x16xf32> to vector<16xf32>
    %63 = vector.shape_cast %62 : vector<16xf32> to vector<16x1xf32>
    %64 = vector.broadcast %63 : vector<16x1xf32> to vector<16x16xf32>
    %65 = arith.subf %61, %64 : vector<16x16xf32>
    %66 = math.exp %65 : vector<16x16xf32>
    %cst_21 = arith.constant dense<0.000000e+00> : vector<16xf32>
    %67 = vector.multi_reduction <add>, %66, %cst_21 [1] : vector<16x16xf32> to vector<16xf32>
    %68 = vector.shape_cast %67 : vector<16xf32> to vector<16x1xf32>
    %69 = tpu.reciprocal %68 {approx = true} : vector<16x1xf32> -> vector<16x1xf32>
    %70 = vector.broadcast %69 : vector<16x1xf32> to vector<16x16xf32>
    %71 = arith.mulf %66, %70 : vector<16x16xf32>
    %72 = arith.truncf %71 : vector<16x16xf32> to vector<16x16xbf16>
    %73 = arith.truncf %58 : vector<16x8xf32> to vector<16x8xbf16>
    %cst_22 = arith.constant dense<0.000000e+00> : vector<16x8xf32>
    %74 = tpu.matmul %72, %73, %cst_22 {dimension_numbers = #tpu.dot_dimension_numbers<[1], [0], [0], [1], [0, 0, 1, 1], [], []>} : vector<16x16xbf16>, vector<16x8xbf16>, vector<16x8xf32> -> vector<16x8xf32>
    %75 = vector.extract_strided_slice %11 {offsets = [0, 24], sizes = [16, 8], strides = [1, 1]} : vector<16x96xf32> to vector<16x8xf32>
    %cst_23 = arith.constant 0.353553385 : f32
    %76 = vector.broadcast %cst_23 : f32 to vector<16x8xf32>
    %77 = arith.mulf %75, %76 : vector<16x8xf32>
    %78 = vector.extract_strided_slice %11 {offsets = [0, 56], sizes = [16, 8], strides = [1, 1]} : vector<16x96xf32> to vector<16x8xf32>
    %79 = vector.extract_strided_slice %11 {offsets = [0, 88], sizes = [16, 8], strides = [1, 1]} : vector<16x96xf32> to vector<16x8xf32>
    %80 = arith.truncf %77 : vector<16x8xf32> to vector<16x8xbf16>
    %81 = arith.truncf %78 : vector<16x8xf32> to vector<16x8xbf16>
    %cst_24 = arith.constant dense<0.000000e+00> : vector<16x16xf32>
    %82 = tpu.matmul %80, %81, %cst_24 {dimension_numbers = #tpu.dot_dimension_numbers<[1], [1], [0], [0], [0, 0, 1, 0], [], []>} : vector<16x8xbf16>, vector<16x8xbf16>, vector<16x16xf32> -> vector<16x16xf32>
    %cst_25 = arith.constant dense<0xFF800000> : vector<16xf32>
    %83 = vector.multi_reduction <maximumf>, %82, %cst_25 [1] : vector<16x16xf32> to vector<16xf32>
    %84 = vector.shape_cast %83 : vector<16xf32> to vector<16x1xf32>
    %85 = vector.broadcast %84 : vector<16x1xf32> to vector<16x16xf32>
    %86 = arith.subf %82, %85 : vector<16x16xf32>
    %87 = math.exp %86 : vector<16x16xf32>
    %cst_26 = arith.constant dense<0.000000e+00> : vector<16xf32>
    %88 = vector.multi_reduction <add>, %87, %cst_26 [1] : vector<16x16xf32> to vector<16xf32>
    %89 = vector.shape_cast %88 : vector<16xf32> to vector<16x1xf32>
    %90 = tpu.reciprocal %89 {approx = true} : vector<16x1xf32> -> vector<16x1xf32>
    %91 = vector.broadcast %90 : vector<16x1xf32> to vector<16x16xf32>
    %92 = arith.mulf %87, %91 : vector<16x16xf32>
    %93 = arith.truncf %92 : vector<16x16xf32> to vector<16x16xbf16>
    %94 = arith.truncf %79 : vector<16x8xf32> to vector<16x8xbf16>
    %cst_27 = arith.constant dense<0.000000e+00> : vector<16x8xf32>
    %95 = tpu.matmul %93, %94, %cst_27 {dimension_numbers = #tpu.dot_dimension_numbers<[1], [0], [0], [1], [0, 0, 1, 1], [], []>} : vector<16x16xbf16>, vector<16x8xbf16>, vector<16x8xf32> -> vector<16x8xf32>
    %96 = tpu.concatenate %32, %53, %74, %95 in 1 : vector<16x8xf32>, vector<16x8xf32>, vector<16x8xf32>, vector<16x8xf32> -> vector<16x32xf32>
    %97 = arith.truncf %96 : vector<16x32xf32> to vector<16x32xbf16>
    %c0_28 = arith.constant 0 : index
    %c0_29 = arith.constant 0 : index
    %c0_30 = arith.constant 0 : index
    %98 = vector.load %arg7[%c0_28, %c0_29, %c0_30] : memref<1x32x32xbf16, #tpu.memory_space<vmem>>, vector<1x32x32xbf16>
    %99 = vector.shape_cast %98 : vector<1x32x32xbf16> to vector<32x32xbf16>
    %cst_31 = arith.constant dense<0.000000e+00> : vector<16x32xf32>
    %100 = tpu.matmul %97, %99, %cst_31 {dimension_numbers = #tpu.dot_dimension_numbers<[1], [0], [0], [1], [0, 0, 1, 1], [], []>} : vector<16x32xbf16>, vector<32x32xbf16>, vector<16x32xf32> -> vector<16x32xf32>
    %c0_32 = arith.constant 0 : index
    %c0_33 = arith.constant 0 : index
    %c0_34 = arith.constant 0 : index
    %101 = vector.load %arg8[%c0_32, %c0_33, %c0_34] : memref<1x1x32xf32, #tpu.memory_space<vmem>>, vector<1x1x32xf32>
    %102 = vector.shape_cast %101 : vector<1x1x32xf32> to vector<1x32xf32>
    %103 = vector.broadcast %102 : vector<1x32xf32> to vector<16x32xf32>
    %104 = arith.addf %100, %103 : vector<16x32xf32>
    %105 = arith.addf %3, %104 : vector<16x32xf32>
    %c0_35 = arith.constant 0 : index
    %c0_36 = arith.constant 0 : index
    %c0_37 = arith.constant 0 : index
    %106 = vector.load %arg13[%c0_35, %c0_36, %c0_37] : memref<1x1x32xf32, #tpu.memory_space<vmem>>, vector<1x1x32xf32>
    %107 = vector.shape_cast %106 : vector<1x1x32xf32> to vector<1x32xf32>
    %c0_38 = arith.constant 0 : index
    %c0_39 = arith.constant 0 : index
    %c0_40 = arith.constant 0 : index
    %108 = vector.load %arg14[%c0_38, %c0_39, %c0_40] : memref<1x1x32xf32, #tpu.memory_space<vmem>>, vector<1x1x32xf32>
    %109 = vector.shape_cast %108 : vector<1x1x32xf32> to vector<1x32xf32>
    %cst_41 = arith.constant dense<0.000000e+00> : vector<16xf32>
    %110 = vector.multi_reduction <add>, %105, %cst_41 [1] : vector<16x32xf32> to vector<16xf32>
    %111 = vector.shape_cast %110 : vector<16xf32> to vector<16x1xf32>
    %cst_42 = arith.constant 3.200000e+01 : f32
    %112 = vector.broadcast %cst_42 : f32 to vector<16x1xf32>
    %113 = arith.divf %111, %112 : vector<16x1xf32>
    %114 = vector.broadcast %113 : vector<16x1xf32> to vector<16x32xf32>
    %115 = arith.subf %105, %114 : vector<16x32xf32>
    %116 = arith.mulf %115, %115 : vector<16x32xf32>
    %cst_43 = arith.constant dense<0.000000e+00> : vector<16xf32>
    %117 = vector.multi_reduction <add>, %116, %cst_43 [1] : vector<16x32xf32> to vector<16xf32>
    %118 = vector.shape_cast %117 : vector<16xf32> to vector<16x1xf32>
    %cst_44 = arith.constant 3.200000e+01 : f32
    %119 = vector.broadcast %cst_44 : f32 to vector<16x1xf32>
    %120 = arith.divf %118, %119 : vector<16x1xf32>
    %cst_45 = arith.constant 9.99999974E-6 : f32
    %121 = vector.broadcast %cst_45 : f32 to vector<16x1xf32>
    %122 = arith.addf %120, %121 : vector<16x1xf32>
    %123 = math.rsqrt %122 : vector<16x1xf32>
    %124 = vector.broadcast %123 : vector<16x1xf32> to vector<16x32xf32>
    %125 = arith.mulf %115, %124 : vector<16x32xf32>
    %126 = vector.broadcast %107 : vector<1x32xf32> to vector<16x32xf32>
    %127 = arith.mulf %125, %126 : vector<16x32xf32>
    %128 = vector.broadcast %109 : vector<1x32xf32> to vector<16x32xf32>
    %129 = arith.addf %127, %128 : vector<16x32xf32>
    %130 = arith.truncf %129 : vector<16x32xf32> to vector<16x32xbf16>
    %c0_46 = arith.constant 0 : index
    %c0_47 = arith.constant 0 : index
    %c0_48 = arith.constant 0 : index
    %131 = vector.load %arg9[%c0_46, %c0_47, %c0_48] : memref<1x32x2048xbf16, #tpu.memory_space<vmem>>, vector<1x32x2048xbf16>
    %132 = vector.shape_cast %131 : vector<1x32x2048xbf16> to vector<32x2048xbf16>
    %cst_49 = arith.constant dense<0.000000e+00> : vector<16x2048xf32>
    %133 = tpu.matmul %130, %132, %cst_49 {dimension_numbers = #tpu.dot_dimension_numbers<[1], [0], [0], [1], [0, 0, 1, 1], [], []>} : vector<16x32xbf16>, vector<32x2048xbf16>, vector<16x2048xf32> -> vector<16x2048xf32>
    %c0_50 = arith.constant 0 : index
    %c0_51 = arith.constant 0 : index
    %c0_52 = arith.constant 0 : index
    %134 = vector.load %arg10[%c0_50, %c0_51, %c0_52] : memref<1x1x2048xf32, #tpu.memory_space<vmem>>, vector<1x1x2048xf32>
    %135 = vector.shape_cast %134 : vector<1x1x2048xf32> to vector<1x2048xf32>
    %136 = vector.broadcast %135 : vector<1x2048xf32> to vector<16x2048xf32>
    %137 = arith.addf %133, %136 : vector<16x2048xf32>
    %cst_53 = arith.constant 0.000000e+00 : f32
    %138 = vector.broadcast %cst_53 : f32 to vector<16x2048xf32>
    %139 = arith.maximumf %137, %138 : vector<16x2048xf32>
    %140 = arith.truncf %139 : vector<16x2048xf32> to vector<16x2048xbf16>
    %c0_54 = arith.constant 0 : index
    %c0_55 = arith.constant 0 : index
    %c0_56 = arith.constant 0 : index
    %141 = vector.load %arg11[%c0_54, %c0_55, %c0_56] : memref<1x2048x32xbf16, #tpu.memory_space<vmem>>, vector<1x2048x32xbf16>
    %142 = vector.shape_cast %141 : vector<1x2048x32xbf16> to vector<2048x32xbf16>
    %cst_57 = arith.constant dense<0.000000e+00> : vector<16x32xf32>
    %143 = tpu.matmul %140, %142, %cst_57 {dimension_numbers = #tpu.dot_dimension_numbers<[1], [0], [0], [1], [0, 0, 1, 1], [], []>} : vector<16x2048xbf16>, vector<2048x32xbf16>, vector<16x32xf32> -> vector<16x32xf32>
    %c0_58 = arith.constant 0 : index
    %c0_59 = arith.constant 0 : index
    %c0_60 = arith.constant 0 : index
    %144 = vector.load %arg12[%c0_58, %c0_59, %c0_60] : memref<1x1x32xf32, #tpu.memory_space<vmem>>, vector<1x1x32xf32>
    %145 = vector.shape_cast %144 : vector<1x1x32xf32> to vector<1x32xf32>
    %146 = vector.broadcast %145 : vector<1x32xf32> to vector<16x32xf32>
    %147 = arith.addf %143, %146 : vector<16x32xf32>
    %148 = arith.addf %129, %147 : vector<16x32xf32>
    %c0_61 = arith.constant 0 : index
    %c0_62 = arith.constant 0 : index
    %c0_63 = arith.constant 0 : index
    %149 = vector.load %arg15[%c0_61, %c0_62, %c0_63] : memref<1x1x32xf32, #tpu.memory_space<vmem>>, vector<1x1x32xf32>
    %150 = vector.shape_cast %149 : vector<1x1x32xf32> to vector<1x32xf32>
    %c0_64 = arith.constant 0 : index
    %c0_65 = arith.constant 0 : index
    %c0_66 = arith.constant 0 : index
    %151 = vector.load %arg16[%c0_64, %c0_65, %c0_66] : memref<1x1x32xf32, #tpu.memory_space<vmem>>, vector<1x1x32xf32>
    %152 = vector.shape_cast %151 : vector<1x1x32xf32> to vector<1x32xf32>
    %cst_67 = arith.constant dense<0.000000e+00> : vector<16xf32>
    %153 = vector.multi_reduction <add>, %148, %cst_67 [1] : vector<16x32xf32> to vector<16xf32>
    %154 = vector.shape_cast %153 : vector<16xf32> to vector<16x1xf32>
    %cst_68 = arith.constant 3.200000e+01 : f32
    %155 = vector.broadcast %cst_68 : f32 to vector<16x1xf32>
    %156 = arith.divf %154, %155 : vector<16x1xf32>
    %157 = vector.broadcast %156 : vector<16x1xf32> to vector<16x32xf32>
    %158 = arith.subf %148, %157 : vector<16x32xf32>
    %159 = arith.mulf %158, %158 : vector<16x32xf32>
    %cst_69 = arith.constant dense<0.000000e+00> : vector<16xf32>
    %160 = vector.multi_reduction <add>, %159, %cst_69 [1] : vector<16x32xf32> to vector<16xf32>
    %161 = vector.shape_cast %160 : vector<16xf32> to vector<16x1xf32>
    %cst_70 = arith.constant 3.200000e+01 : f32
    %162 = vector.broadcast %cst_70 : f32 to vector<16x1xf32>
    %163 = arith.divf %161, %162 : vector<16x1xf32>
    %cst_71 = arith.constant 9.99999974E-6 : f32
    %164 = vector.broadcast %cst_71 : f32 to vector<16x1xf32>
    %165 = arith.addf %163, %164 : vector<16x1xf32>
    %166 = math.rsqrt %165 : vector<16x1xf32>
    %167 = vector.broadcast %166 : vector<16x1xf32> to vector<16x32xf32>
    %168 = arith.mulf %158, %167 : vector<16x32xf32>
    %169 = vector.broadcast %150 : vector<1x32xf32> to vector<16x32xf32>
    %170 = arith.mulf %168, %169 : vector<16x32xf32>
    %171 = vector.broadcast %152 : vector<1x32xf32> to vector<16x32xf32>
    %172 = arith.addf %170, %171 : vector<16x32xf32>
    %c0_72 = arith.constant 0 : index
    %c0_73 = arith.constant 0 : index
    %173 = vector.load %arg22[%c0_72, %c0_73] : memref<16x32xf32, #tpu.memory_space<vmem>>, vector<16x32xf32>
    tpu.vector_store %arg22[%c0_72, %c0_73], %172 {strides = array<i32>} : memref<16x32xf32, #tpu.memory_space<vmem>>, vector<16x32xf32>,
    %c1_i32 = arith.constant 1 : i32
    %174 = arith.cmpi eq, %arg0, %c1_i32 : i32
    %175 = arith.extui %174 : i1 to i32
    %c0_i32_74 = arith.constant 0 : i32
    %176 = arith.cmpi ne, %175, %c0_i32_74 : i32
    scf.if %176 {
      %c0_75 = arith.constant 0 : index
      %c0_76 = arith.constant 0 : index
      %177 = vector.load %arg21[%c0_75, %c0_76] : memref<16x32xf32, #tpu.memory_space<vmem>>, vector<16x32xf32>
      tpu.vector_store %arg21[%c0_75, %c0_76], %172 {strides = array<i32>} : memref<16x32xf32, #tpu.memory_space<vmem>>, vector<16x32xf32>,
      %178 = arith.truncf %172 : vector<16x32xf32> to vector<16x32xbf16>
      %c0_77 = arith.constant 0 : index
      %c0_78 = arith.constant 0 : index
      %179 = vector.load %arg17[%c0_77, %c0_78] : memref<32x16xbf16, #tpu.memory_space<vmem>>, vector<32x16xbf16>
      %cst_79 = arith.constant dense<0.000000e+00> : vector<16x16xf32>
      %180 = tpu.matmul %178, %179, %cst_79 {dimension_numbers = #tpu.dot_dimension_numbers<[1], [0], [0], [1], [0, 0, 1, 1], [], []>} : vector<16x32xbf16>, vector<32x16xbf16>, vector<16x16xf32> -> vector<16x16xf32>
      %c0_80 = arith.constant 0 : index
      %c0_81 = arith.constant 0 : index
      %181 = vector.load %arg18[%c0_80, %c0_81] : memref<1x16xf32, #tpu.memory_space<vmem>>, vector<1x16xf32>
      %182 = vector.broadcast %181 : vector<1x16xf32> to vector<16x16xf32>
      %183 = arith.addf %180, %182 : vector<16x16xf32>
      %184 = vector.extract_strided_slice %183 {offsets = [0, 0], sizes = [16, 8], strides = [1, 1]} : vector<16x16xf32> to vector<16x8xf32>
      %185 = vector.extract_strided_slice %183 {offsets = [0, 8], sizes = [16, 8], strides = [1, 1]} : vector<16x16xf32> to vector<16x8xf32>
      %c0_82 = arith.constant 0 : index
      %c0_83 = arith.constant 0 : index
      %186 = vector.load %arg2[%c0_82, %c0_83] : memref<16x8xf32, #tpu.memory_space<vmem>>, vector<16x8xf32>
      %cst_84 = arith.constant 5.000000e-01 : f32
      %187 = vector.broadcast %cst_84 : f32 to vector<16x8xf32>
      %188 = arith.mulf %187, %185 : vector<16x8xf32>
      %189 = math.exp %188 : vector<16x8xf32>
      %190 = arith.mulf %186, %189 : vector<16x8xf32>
      %191 = arith.addf %190, %184 : vector<16x8xf32>
      %cst_85 = arith.constant 0.000000e+00 : f32
      %192 = vector.broadcast %cst_85 : f32 to vector<16x104xf32>
      %193 = tpu.concatenate %191, %184, %185, %192 in 1 : vector<16x8xf32>, vector<16x8xf32>, vector<16x8xf32>, vector<16x104xf32> -> vector<16x128xf32>
      %c0_86 = arith.constant 0 : index
      %c0_87 = arith.constant 0 : index
      %194 = vector.load %arg19[%c0_86, %c0_87] : memref<16x128xf32, #tpu.memory_space<vmem>>, vector<16x128xf32>
      tpu.vector_store %arg19[%c0_86, %c0_87], %193 {strides = array<i32>} : memref<16x128xf32, #tpu.memory_space<vmem>>, vector<16x128xf32>,
    } else {
    }
    return
  }
  func.func @transform_0(%arg0: i32) -> (i32, i32) {
    %c0_i32 = arith.constant 0 : i32
    %c0_i32_0 = arith.constant 0 : i32
    %c0_i32_1 = arith.constant 0 : i32
    return %c0_i32, %c0_i32_0 : i32, i32
  }
  func.func @transform_1(%arg0: i32) -> (i32, i32) {
    %c0_i32 = arith.constant 0 : i32
    %c0_i32_0 = arith.constant 0 : i32
    %c0_i32_1 = arith.constant 0 : i32
    return %c0_i32, %c0_i32_0 : i32, i32
  }
  func.func @transform_2(%arg0: i32) -> (i32, i32) {
    %c0_i32 = arith.constant 0 : i32
    %c0_i32_0 = arith.constant 0 : i32
    %c0_i32_1 = arith.constant 0 : i32
    return %c0_i32, %c0_i32_0 : i32, i32
  }
  func.func @transform_3(%arg0: i32) -> (i32, i32) {
    %c0_i32 = arith.constant 0 : i32
    %c0_i32_0 = arith.constant 0 : i32
    %c0_i32_1 = arith.constant 0 : i32
    return %c0_i32, %c0_i32_0 : i32, i32
  }
  func.func @transform_4(%arg0: i32) -> (i32, i32, i32) {
    %c0_i32 = arith.constant 0 : i32
    %c0_i32_0 = arith.constant 0 : i32
    %c0_i32_1 = arith.constant 0 : i32
    return %arg0, %c0_i32, %c0_i32_0 : i32, i32, i32
  }
  func.func @transform_5(%arg0: i32) -> (i32, i32, i32) {
    %c0_i32 = arith.constant 0 : i32
    %c0_i32_0 = arith.constant 0 : i32
    %c0_i32_1 = arith.constant 0 : i32
    return %arg0, %c0_i32, %c0_i32_0 : i32, i32, i32
  }
  func.func @transform_6(%arg0: i32) -> (i32, i32, i32) {
    %c0_i32 = arith.constant 0 : i32
    %c0_i32_0 = arith.constant 0 : i32
    %c0_i32_1 = arith.constant 0 : i32
    return %arg0, %c0_i32, %c0_i32_0 : i32, i32, i32
  }
  func.func @transform_7(%arg0: i32) -> (i32, i32, i32) {
    %c0_i32 = arith.constant 0 : i32
    %c0_i32_0 = arith.constant 0 : i32
    %c0_i32_1 = arith.constant 0 : i32
    return %arg0, %c0_i32, %c0_i32_0 : i32, i32, i32
  }
  func.func @transform_8(%arg0: i32) -> (i32, i32, i32) {
    %c0_i32 = arith.constant 0 : i32
    %c0_i32_0 = arith.constant 0 : i32
    %c0_i32_1 = arith.constant 0 : i32
    return %arg0, %c0_i32, %c0_i32_0 : i32, i32, i32
  }
  func.func @transform_9(%arg0: i32) -> (i32, i32, i32) {
    %c0_i32 = arith.constant 0 : i32
    %c0_i32_0 = arith.constant 0 : i32
    %c0_i32_1 = arith.constant 0 : i32
    return %arg0, %c0_i32, %c0_i32_0 : i32, i32, i32
  }
  func.func @transform_10(%arg0: i32) -> (i32, i32, i32) {
    %c0_i32 = arith.constant 0 : i32
    %c0_i32_0 = arith.constant 0 : i32
    %c0_i32_1 = arith.constant 0 : i32
    return %arg0, %c0_i32, %c0_i32_0 : i32, i32, i32
  }
  func.func @transform_11(%arg0: i32) -> (i32, i32, i32) {
    %c0_i32 = arith.constant 0 : i32
    %c0_i32_0 = arith.constant 0 : i32
    %c0_i32_1 = arith.constant 0 : i32
    return %arg0, %c0_i32, %c0_i32_0 : i32, i32, i32
  }
  func.func @transform_12(%arg0: i32) -> (i32, i32, i32) {
    %c0_i32 = arith.constant 0 : i32
    %c0_i32_0 = arith.constant 0 : i32
    %c0_i32_1 = arith.constant 0 : i32
    return %arg0, %c0_i32, %c0_i32_0 : i32, i32, i32
  }
  func.func @transform_13(%arg0: i32) -> (i32, i32, i32) {
    %c0_i32 = arith.constant 0 : i32
    %c0_i32_0 = arith.constant 0 : i32
    %c0_i32_1 = arith.constant 0 : i32
    return %arg0, %c0_i32, %c0_i32_0 : i32, i32, i32
  }
  func.func @transform_14(%arg0: i32) -> (i32, i32, i32) {
    %c0_i32 = arith.constant 0 : i32
    %c0_i32_0 = arith.constant 0 : i32
    %c0_i32_1 = arith.constant 0 : i32
    return %arg0, %c0_i32, %c0_i32_0 : i32, i32, i32
  }
  func.func @transform_15(%arg0: i32) -> (i32, i32, i32) {
    %c0_i32 = arith.constant 0 : i32
    %c0_i32_0 = arith.constant 0 : i32
    %c0_i32_1 = arith.constant 0 : i32
    return %arg0, %c0_i32, %c0_i32_0 : i32, i32, i32
  }
  func.func @transform_16(%arg0: i32) -> (i32, i32) {
    %c0_i32 = arith.constant 0 : i32
    %c0_i32_0 = arith.constant 0 : i32
    %c0_i32_1 = arith.constant 0 : i32
    return %c0_i32, %c0_i32_0 : i32, i32
  }
  func.func @transform_17(%arg0: i32) -> (i32, i32) {
    %c0_i32 = arith.constant 0 : i32
    %c0_i32_0 = arith.constant 0 : i32
    %c0_i32_1 = arith.constant 0 : i32
    return %c0_i32, %c0_i32_0 : i32, i32
  }
  func.func @transform_18(%arg0: i32) -> (i32, i32) {
    %c0_i32 = arith.constant 0 : i32
    %c0_i32_0 = arith.constant 0 : i32
    %c0_i32_1 = arith.constant 0 : i32
    return %c0_i32, %c0_i32_0 : i32, i32
  }
  func.func @transform_19(%arg0: i32) -> (i32, i32) {
    %c0_i32 = arith.constant 0 : i32
    %c0_i32_0 = arith.constant 0 : i32
    %c0_i32_1 = arith.constant 0 : i32
    return %c0_i32, %c0_i32_0 : i32, i32
  }
  func.func @transform_20(%arg0: i32) -> (i32, i32) {
    %c0_i32 = arith.constant 0 : i32
    %c0_i32_0 = arith.constant 0 : i32
    %c0_i32_1 = arith.constant 0 : i32
    return %c0_i32, %c0_i32_0 : i32, i32
  }
}

</mosaic_0001>

<llo_original>
// kernel: _lambda_.1
$region0: #{_lambda_.1}
  #allocation0 [shape = 'u32[]', space=smem, size = 0x4, offset = 0x4, fixed_abs, tag = 'smem constant byte address 0x4 - core index']
  #allocation1 [shape = 'u32[72,128]{1,0:T(1,128)}', space=vmem, size = 0x9000, scoped, tag = 'internal scratch']
  #allocation2 [shape = 'f32[16,32]{1,0:T(8,128)}', space=vmem, size = 0x2000, scoped, tag = 'scratch operand']
  %s0 = inlined_call_operand.vmem [shape: f32[16,16], index: 0, kind: input, shape index: {}]
  %s1 = inlined_call_operand.vmem [shape: f32[16,8], index: 1, kind: input, shape index: {}]
  %s2 = inlined_call_operand.vmem [shape: bf16[16,32], index: 2, kind: input, shape index: {}]
  %s3 = inlined_call_operand.vmem [shape: f32[1,32], index: 3, kind: input, shape index: {}]
  %s4 = inlined_call_operand.vmem [shape: bf16[2,32,96], index: 4, kind: input, shape index: {}]
  %s5 = inlined_call_operand.vmem [shape: f32[2,1,96], index: 5, kind: input, shape index: {}]
  %s6 = inlined_call_operand.vmem [shape: bf16[2,32,32], index: 6, kind: input, shape index: {}]
  %s7 = inlined_call_operand.vmem [shape: f32[2,1,32], index: 7, kind: input, shape index: {}]
  %s8 = inlined_call_operand.vmem [shape: bf16[2,32,2048], index: 8, kind: input, shape index: {}]
  %s9 = inlined_call_operand.vmem [shape: f32[2,1,2048], index: 9, kind: input, shape index: {}]
  %s10 = inlined_call_operand.vmem [shape: bf16[2,2048,32], index: 10, kind: input, shape index: {}]
  %s11 = inlined_call_operand.vmem [shape: f32[2,1,32], index: 11, kind: input, shape index: {}]
  %s12 = inlined_call_operand.vmem [shape: f32[2,1,32], index: 12, kind: input, shape index: {}]
  %s13 = inlined_call_operand.vmem [shape: f32[2,1,32], index: 13, kind: input, shape index: {}]
  %s14 = inlined_call_operand.vmem [shape: f32[2,1,32], index: 14, kind: input, shape index: {}]
  %s15 = inlined_call_operand.vmem [shape: f32[2,1,32], index: 15, kind: input, shape index: {}]
  %s16 = inlined_call_operand.vmem [shape: bf16[32,16], index: 16, kind: input, shape index: {}]
  %s17 = inlined_call_operand.vmem [shape: f32[1,16], index: 17, kind: input, shape index: {}]
  %s18 = inlined_call_operand.vmem [shape: f32[16,128], index: 18, kind: output, shape index: {0}]
  %s19 = inlined_call_operand.hbm [shape: f32[16,32], index: 19, kind: output, shape index: {1}]
  %s20 = inlined_call_operand.hbm [shape: f32[16,32], index: 20, kind: output, shape index: {2}]
  %21 = xla_tuple %s18, %s19, %s20
  %s22 = sld [smem:[#allocation0]]
  $region129: #{_lambda_.1} parent=0
    _
  %s24 = ssub.s32 1, %s22
  %s25 = scalar_select 0, %s24, %s22
  $region1: #{_lambda_.1} parent=0
    #allocation3 [shape = 'u8[8192]{0}', space=vmem, size = 0x2000, scoped, tag = 'output window, operand 1, single buffered']
    #allocation4 [shape = 's32[2]{0}', space=sflag, size = 0x8, scoped, tag = 'scoped memory for _lambda_.1']
    #allocation5 [shape = 'u8[8192]{0}', space=vmem, size = 0x2000, scoped, tag = 'output window, operand 2, single buffered']
    #allocation6 [shape = 's32[1]{0}', space=sflag, size = 0x4, scoped, tag = 'scoped memory for _lambda_.1']
    %26 = vsyncpa [#allocation4], 0
    %27 = vsyncpa [#allocation6], 0
    loop: start=0, step=1, limit=4
    $region2: #{_lambda_.1} parent=1 // loop_pre_header
      _
    $region3: #{_lambda_.1} parent=1 // loop_header
      %s29 = sphi 0, %s33
      %p30 = scmp.ge.s32.totalorder %s29, 4
      %s37 = sphi 0, %s37
      %s39 = sphi 0, %s37
      %s40 = sphi 0, %s39
      %s54 = sphi 0, %s40
      %s58 = sphi 0, %s58
      %s60 = sphi 0, %s58
      %s61 = sphi 0, %s60
      %s75 = sphi 0, %s61
      %s79 = sphi 0, %s79
      %s81 = sphi 0, %s79
      %s82 = sphi 0, %s81
      %s96 = sphi 0, %s82
      %s100 = sphi 0, %s100
      %s102 = sphi 0, %s100
      %s103 = sphi 0, %s102
      %s117 = sphi 0, %s103
      %s123 = sphi 0, %s125
      %s126 = sphi 0, %s123
      %s127 = sphi 0, %s126
      %s143 = sphi 0, %s127
      %s149 = sphi 0, %s151
      %s152 = sphi 0, %s149
      %s153 = sphi 0, %s152
      %s169 = sphi 0, %s153
      %s175 = sphi 0, %s177
      %s178 = sphi 0, %s175
      %s179 = sphi 0, %s178
      %s195 = sphi 0, %s179
      %s201 = sphi 0, %s203
      %s204 = sphi 0, %s201
      %s205 = sphi 0, %s204
      %s221 = sphi 0, %s205
      %s227 = sphi 0, %s229
      %s230 = sphi 0, %s227
      %s231 = sphi 0, %s230
      %s247 = sphi 0, %s231
      %s253 = sphi 0, %s255
      %s256 = sphi 0, %s253
      %s257 = sphi 0, %s256
      %s273 = sphi 0, %s257
      %s279 = sphi 0, %s281
      %s282 = sphi 0, %s279
      %s283 = sphi 0, %s282
      %s299 = sphi 0, %s283
      %s305 = sphi 0, %s307
      %s308 = sphi 0, %s305
      %s309 = sphi 0, %s308
      %s325 = sphi 0, %s309
      %s331 = sphi 0, %s333
      %s334 = sphi 0, %s331
      %s335 = sphi 0, %s334
      %s351 = sphi 0, %s335
      %s357 = sphi 0, %s359
      %s360 = sphi 0, %s357
      %s361 = sphi 0, %s360
      %s377 = sphi 0, %s361
      %s383 = sphi 0, %s385
      %s386 = sphi 0, %s383
      %s387 = sphi 0, %s386
      %s403 = sphi 0, %s387
      %s409 = sphi 0, %s411
      %s412 = sphi 0, %s409
      %s413 = sphi 0, %s412
      %s429 = sphi 0, %s413
      %s433 = sphi 0, %s433
      %s435 = sphi 0, %s433
      %s436 = sphi 0, %s435
      %s450 = sphi 0, %s436
      %s454 = sphi 0, %s454
      %s456 = sphi 0, %s454
      %s457 = sphi 0, %s456
      %s471 = sphi 0, %s457
      %s475 = sphi 0, %s475
      %s477 = sphi 0, %s475
      %s478 = sphi 0, %s477
      %s492 = sphi 0, %s478
      %s496 = sphi 0, %s496
      %s498 = sphi 0, %s496
      %s499 = sphi 0, %s498
      %s513 = sphi 0, %s499
      %s517 = sphi 0, %s517
      %s519 = sphi 0, %s517
      %s520 = sphi 0, %s519
      %s534 = sphi 0, %s520
    $region4: #{_lambda_.1} parent=1 // loop_header_branch
      %32 = sbr.rel (%p30) target = $region8
    $region5: #{_lambda_.1} parent=1 // loop_body
      %s34 = ssub.s32 %s29, 1
      %s35 = ssub.s32 %s29, 2
      %s36 = sadd.s32 %s29, 1
      %s38 = sadd.s32 %s37, 1
      %p41 = scmp.eq.s32.totalorder %s29, 1
      %p42 = scmp.ne.s32.totalorder %s37, %s39
      %p43 = scmp.eq.s32.totalorder %s29, 0
      %p44 = por %p42, %p43
      %p45 = scmp.ne.s32.totalorder %s37, %s39
      %p46 = scmp.eq.s32.totalorder %s34, 1
      %p47 = por %p45, %p46
      %p48 = scmp.ne.s32.totalorder %s39, %s40
      %p49 = scmp.eq.s32.totalorder %s34, 0
      %p50 = por %p48, %p49
      %p51 = scmp.ne.s32.totalorder %s39, %s40
      %p52 = scmp.eq.s32.totalorder %s35, 1
      %p53 = por %p51, %p52
      %p55 = scmp.ne.s32.totalorder %s40, %s54
      %p56 = scmp.eq.s32.totalorder %s35, 0
      %p57 = por %p55, %p56
      %s59 = sadd.s32 %s58, 1
      %p62 = scmp.eq.s32.totalorder %s29, 1
      %p63 = scmp.ne.s32.totalorder %s58, %s60
      %p64 = scmp.eq.s32.totalorder %s29, 0
      %p65 = por %p63, %p64
      %p66 = scmp.ne.s32.totalorder %s58, %s60
      %p67 = scmp.eq.s32.totalorder %s34, 1
      %p68 = por %p66, %p67
      %p69 = scmp.ne.s32.totalorder %s60, %s61
      %p70 = scmp.eq.s32.totalorder %s34, 0
      %p71 = por %p69, %p70
      %p72 = scmp.ne.s32.totalorder %s60, %s61
      %p73 = scmp.eq.s32.totalorder %s35, 1
      %p74 = por %p72, %p73
      %p76 = scmp.ne.s32.totalorder %s61, %s75
      %p77 = scmp.eq.s32.totalorder %s35, 0
      %p78 = por %p76, %p77
      %s80 = sadd.s32 %s79, 1
      %p83 = scmp.eq.s32.totalorder %s29, 1
      %p84 = scmp.ne.s32.totalorder %s79, %s81
      %p85 = scmp.eq.s32.totalorder %s29, 0
      %p86 = por %p84, %p85
      %p87 = scmp.ne.s32.totalorder %s79, %s81
      %p88 = scmp.eq.s32.totalorder %s34, 1
      %p89 = por %p87, %p88
      %p90 = scmp.ne.s32.totalorder %s81, %s82
      %p91 = scmp.eq.s32.totalorder %s34, 0
      %p92 = por %p90, %p91
      %p93 = scmp.ne.s32.totalorder %s81, %s82
      %p94 = scmp.eq.s32.totalorder %s35, 1
      %p95 = por %p93, %p94
      %p97 = scmp.ne.s32.totalorder %s82, %s96
      %p98 = scmp.eq.s32.totalorder %s35, 0
      %p99 = por %p97, %p98
      %s101 = sadd.s32 %s100, 1
      %p104 = scmp.eq.s32.totalorder %s29, 1
      %p105 = scmp.ne.s32.totalorder %s100, %s102
      %p106 = scmp.eq.s32.totalorder %s29, 0
      %p107 = por %p105, %p106
      %p108 = scmp.ne.s32.totalorder %s100, %s102
      %p109 = scmp.eq.s32.totalorder %s34, 1
      %p110 = por %p108, %p109
      %p111 = scmp.ne.s32.totalorder %s102, %s103
      %p112 = scmp.eq.s32.totalorder %s34, 0
      %p113 = por %p111, %p112
      %p114 = scmp.ne.s32.totalorder %s102, %s103
      %p115 = scmp.eq.s32.totalorder %s35, 1
      %p116 = por %p114, %p115
      %p118 = scmp.ne.s32.totalorder %s103, %s117
      %p119 = scmp.eq.s32.totalorder %s35, 0
      %p120 = por %p118, %p119
      %s121 = ssub.s32 %s29, %s36
      %p122 = scmp.eq.s32.totalorder %s121, 0
      %s124 = sadd.s32 %s123, 1
      %s125 = scalar_select %p122, %s123, %s124
      %p128 = pneg %p122
      %p129 = scmp.eq.s32.totalorder %s29, 1
      %p130 = por %p128, %p129
      %p131 = scmp.ne.s32.totalorder %s123, %s126
      %p132 = scmp.eq.s32.totalorder %s29, 0
      %p133 = por %p131, %p132
      %p134 = scmp.ne.s32.totalorder %s123, %s126
      %p135 = scmp.eq.s32.totalorder %s34, 1
      %p136 = por %p134, %p135
      %p137 = scmp.ne.s32.totalorder %s126, %s127
      %p138 = scmp.eq.s32.totalorder %s34, 0
      %p139 = por %p137, %p138
      %p140 = scmp.ne.s32.totalorder %s126, %s127
      %p141 = scmp.eq.s32.totalorder %s35, 1
      %p142 = por %p140, %p141
      %p144 = scmp.ne.s32.totalorder %s127, %s143
      %p145 = scmp.eq.s32.totalorder %s35, 0
      %p146 = por %p144, %p145
      %s147 = ssub.s32 %s29, %s36
      %p148 = scmp.eq.s32.totalorder %s147, 0
      %s150 = sadd.s32 %s149, 1
      %s151 = scalar_select %p148, %s149, %s150
      %p154 = pneg %p148
      %p155 = scmp.eq.s32.totalorder %s29, 1
      %p156 = por %p154, %p155
      %p157 = scmp.ne.s32.totalorder %s149, %s152
      %p158 = scmp.eq.s32.totalorder %s29, 0
      %p159 = por %p157, %p158
      %p160 = scmp.ne.s32.totalorder %s149, %s152
      %p161 = scmp.eq.s32.totalorder %s34, 1
      %p162 = por %p160, %p161
      %p163 = scmp.ne.s32.totalorder %s152, %s153
      %p164 = scmp.eq.s32.totalorder %s34, 0
      %p165 = por %p163, %p164
      %p166 = scmp.ne.s32.totalorder %s152, %s153
      %p167 = scmp.eq.s32.totalorder %s35, 1
      %p168 = por %p166, %p167
      %p170 = scmp.ne.s32.totalorder %s153, %s169
      %p171 = scmp.eq.s32.totalorder %s35, 0
      %p172 = por %p170, %p171
      %s173 = ssub.s32 %s29, %s36
      %p174 = scmp.eq.s32.totalorder %s173, 0
      %s176 = sadd.s32 %s175, 1
      %s177 = scalar_select %p174, %s175, %s176
      %p180 = pneg %p174
      %p181 = scmp.eq.s32.totalorder %s29, 1
      %p182 = por %p180, %p181
      %p183 = scmp.ne.s32.totalorder %s175, %s178
      %p184 = scmp.eq.s32.totalorder %s29, 0
      %p185 = por %p183, %p184
      %p186 = scmp.ne.s32.totalorder %s175, %s178
      %p187 = scmp.eq.s32.totalorder %s34, 1
      %p188 = por %p186, %p187
      %p189 = scmp.ne.s32.totalorder %s178, %s179
      %p190 = scmp.eq.s32.totalorder %s34, 0
      %p191 = por %p189, %p190
      %p192 = scmp.ne.s32.totalorder %s178, %s179
      %p193 = scmp.eq.s32.totalorder %s35, 1
      %p194 = por %p192, %p193
      %p196 = scmp.ne.s32.totalorder %s179, %s195
      %p197 = scmp.eq.s32.totalorder %s35, 0
      %p198 = por %p196, %p197
      %s199 = ssub.s32 %s29, %s36
      %p200 = scmp.eq.s32.totalorder %s199, 0
      %s202 = sadd.s32 %s201, 1
      %s203 = scalar_select %p200, %s201, %s202
      %p206 = pneg %p200
      %p207 = scmp.eq.s32.totalorder %s29, 1
      %p208 = por %p206, %p207
      %p209 = scmp.ne.s32.totalorder %s201, %s204
      %p210 = scmp.eq.s32.totalorder %s29, 0
      %p211 = por %p209, %p210
      %p212 = scmp.ne.s32.totalorder %s201, %s204
      %p213 = scmp.eq.s32.totalorder %s34, 1
      %p214 = por %p212, %p213
      %p215 = scmp.ne.s32.totalorder %s204, %s205
      %p216 = scmp.eq.s32.totalorder %s34, 0
      %p217 = por %p215, %p216
      %p218 = scmp.ne.s32.totalorder %s204, %s205
      %p219 = scmp.eq.s32.totalorder %s35, 1
      %p220 = por %p218, %p219
      %p222 = scmp.ne.s32.totalorder %s205, %s221
      %p223 = scmp.eq.s32.totalorder %s35, 0
      %p224 = por %p222, %p223
      %s225 = ssub.s32 %s29, %s36
      %p226 = scmp.eq.s32.totalorder %s225, 0
      %s228 = sadd.s32 %s227, 1
      %s229 = scalar_select %p226, %s227, %s228
      %p232 = pneg %p226
      %p233 = scmp.eq.s32.totalorder %s29, 1
      %p234 = por %p232, %p233
      %p235 = scmp.ne.s32.totalorder %s227, %s230
      %p236 = scmp.eq.s32.totalorder %s29, 0
      %p237 = por %p235, %p236
      %p238 = scmp.ne.s32.totalorder %s227, %s230
      %p239 = scmp.eq.s32.totalorder %s34, 1
      %p240 = por %p238, %p239
      %p241 = scmp.ne.s32.totalorder %s230, %s231
      %p242 = scmp.eq.s32.totalorder %s34, 0
      %p243 = por %p241, %p242
      %p244 = scmp.ne.s32.totalorder %s230, %s231
      %p245 = scmp.eq.s32.totalorder %s35, 1
      %p246 = por %p244, %p245
      %p248 = scmp.ne.s32.totalorder %s231, %s247
      %p249 = scmp.eq.s32.totalorder %s35, 0
      %p250 = por %p248, %p249
      %s251 = ssub.s32 %s29, %s36
      %p252 = scmp.eq.s32.totalorder %s251, 0
      %s254 = sadd.s32 %s253, 1
      %s255 = scalar_select %p252, %s253, %s254
      %p258 = pneg %p252
      %p259 = scmp.eq.s32.totalorder %s29, 1
      %p260 = por %p258, %p259
      %p261 = scmp.ne.s32.totalorder %s253, %s256
      %p262 = scmp.eq.s32.totalorder %s29, 0
      %p263 = por %p261, %p262
      %p264 = scmp.ne.s32.totalorder %s253, %s256
      %p265 = scmp.eq.s32.totalorder %s34, 1
      %p266 = por %p264, %p265
      %p267 = scmp.ne.s32.totalorder %s256, %s257
      %p268 = scmp.eq.s32.totalorder %s34, 0
      %p269 = por %p267, %p268
      %p270 = scmp.ne.s32.totalorder %s256, %s257
      %p271 = scmp.eq.s32.totalorder %s35, 1
      %p272 = por %p270, %p271
      %p274 = scmp.ne.s32.totalorder %s257, %s273
      %p275 = scmp.eq.s32.totalorder %s35, 0
      %p276 = por %p274, %p275
      %s277 = ssub.s32 %s29, %s36
      %p278 = scmp.eq.s32.totalorder %s277, 0
      %s280 = sadd.s32 %s279, 1
      %s281 = scalar_select %p278, %s279, %s280
      %p284 = pneg %p278
      %p285 = scmp.eq.s32.totalorder %s29, 1
      %p286 = por %p284, %p285
      %p287 = scmp.ne.s32.totalorder %s279, %s282
      %p288 = scmp.eq.s32.totalorder %s29, 0
      %p289 = por %p287, %p288
      %p290 = scmp.ne.s32.totalorder %s279, %s282
      %p291 = scmp.eq.s32.totalorder %s34, 1
      %p292 = por %p290, %p291
      %p293 = scmp.ne.s32.totalorder %s282, %s283
      %p294 = scmp.eq.s32.totalorder %s34, 0
      %p295 = por %p293, %p294
      %p296 = scmp.ne.s32.totalorder %s282, %s283
      %p297 = scmp.eq.s32.totalorder %s35, 1
      %p298 = por %p296, %p297
      %p300 = scmp.ne.s32.totalorder %s283, %s299
      %p301 = scmp.eq.s32.totalorder %s35, 0
      %p302 = por %p300, %p301
      %s303 = ssub.s32 %s29, %s36
      %p304 = scmp.eq.s32.totalorder %s303, 0
      %s306 = sadd.s32 %s305, 1
      %s307 = scalar_select %p304, %s305, %s306
      %p310 = pneg %p304
      %p311 = scmp.eq.s32.totalorder %s29, 1
      %p312 = por %p310, %p311
      %p313 = scmp.ne.s32.totalorder %s305, %s308
      %p314 = scmp.eq.s32.totalorder %s29, 0
      %p315 = por %p313, %p314
      %p316 = scmp.ne.s32.totalorder %s305, %s308
      %p317 = scmp.eq.s32.totalorder %s34, 1
      %p318 = por %p316, %p317
      %p319 = scmp.ne.s32.totalorder %s308, %s309
      %p320 = scmp.eq.s32.totalorder %s34, 0
      %p321 = por %p319, %p320
      %p322 = scmp.ne.s32.totalorder %s308, %s309
      %p323 = scmp.eq.s32.totalorder %s35, 1
      %p324 = por %p322, %p323
      %p326 = scmp.ne.s32.totalorder %s309, %s325
      %p327 = scmp.eq.s32.totalorder %s35, 0
      %p328 = por %p326, %p327
      %s329 = ssub.s32 %s29, %s36
      %p330 = scmp.eq.s32.totalorder %s329, 0
      %s332 = sadd.s32 %s331, 1
      %s333 = scalar_select %p330, %s331, %s332
      %p336 = pneg %p330
      %p337 = scmp.eq.s32.totalorder %s29, 1
      %p338 = por %p336, %p337
      %p339 = scmp.ne.s32.totalorder %s331, %s334
      %p340 = scmp.eq.s32.totalorder %s29, 0
      %p341 = por %p339, %p340
      %p342 = scmp.ne.s32.totalorder %s331, %s334
      %p343 = scmp.eq.s32.totalorder %s34, 1
      %p344 = por %p342, %p343
      %p345 = scmp.ne.s32.totalorder %s334, %s335
      %p346 = scmp.eq.s32.totalorder %s34, 0
      %p347 = por %p345, %p346
      %p348 = scmp.ne.s32.totalorder %s334, %s335
      %p349 = scmp.eq.s32.totalorder %s35, 1
      %p350 = por %p348, %p349
      %p352 = scmp.ne.s32.totalorder %s335, %s351
      %p353 = scmp.eq.s32.totalorder %s35, 0
      %p354 = por %p352, %p353
      %s355 = ssub.s32 %s29, %s36
      %p356 = scmp.eq.s32.totalorder %s355, 0
      %s358 = sadd.s32 %s357, 1
      %s359 = scalar_select %p356, %s357, %s358
      %p362 = pneg %p356
      %p363 = scmp.eq.s32.totalorder %s29, 1
      %p364 = por %p362, %p363
      %p365 = scmp.ne.s32.totalorder %s357, %s360
      %p366 = scmp.eq.s32.totalorder %s29, 0
      %p367 = por %p365, %p366
      %p368 = scmp.ne.s32.totalorder %s357, %s360
      %p369 = scmp.eq.s32.totalorder %s34, 1
      %p370 = por %p368, %p369
      %p371 = scmp.ne.s32.totalorder %s360, %s361
      %p372 = scmp.eq.s32.totalorder %s34, 0
      %p373 = por %p371, %p372
      %p374 = scmp.ne.s32.totalorder %s360, %s361
      %p375 = scmp.eq.s32.totalorder %s35, 1
      %p376 = por %p374, %p375
      %p378 = scmp.ne.s32.totalorder %s361, %s377
      %p379 = scmp.eq.s32.totalorder %s35, 0
      %p380 = por %p378, %p379
      %s381 = ssub.s32 %s29, %s36
      %p382 = scmp.eq.s32.totalorder %s381, 0
      %s384 = sadd.s32 %s383, 1
      %s385 = scalar_select %p382, %s383, %s384
      %p388 = pneg %p382
      %p389 = scmp.eq.s32.totalorder %s29, 1
      %p390 = por %p388, %p389
      %p391 = scmp.ne.s32.totalorder %s383, %s386
      %p392 = scmp.eq.s32.totalorder %s29, 0
      %p393 = por %p391, %p392
      %p394 = scmp.ne.s32.totalorder %s383, %s386
      %p395 = scmp.eq.s32.totalorder %s34, 1
      %p396 = por %p394, %p395
      %p397 = scmp.ne.s32.totalorder %s386, %s387
      %p398 = scmp.eq.s32.totalorder %s34, 0
      %p399 = por %p397, %p398
      %p400 = scmp.ne.s32.totalorder %s386, %s387
      %p401 = scmp.eq.s32.totalorder %s35, 1
      %p402 = por %p400, %p401
      %p404 = scmp.ne.s32.totalorder %s387, %s403
      %p405 = scmp.eq.s32.totalorder %s35, 0
      %p406 = por %p404, %p405
      %s407 = ssub.s32 %s29, %s36
      %p408 = scmp.eq.s32.totalorder %s407, 0
      %s410 = sadd.s32 %s409, 1
      %s411 = scalar_select %p408, %s409, %s410
      %p414 = pneg %p408
      %p415 = scmp.eq.s32.totalorder %s29, 1
      %p416 = por %p414, %p415
      %p417 = scmp.ne.s32.totalorder %s409, %s412
      %p418 = scmp.eq.s32.totalorder %s29, 0
      %p419 = por %p417, %p418
      %p420 = scmp.ne.s32.totalorder %s409, %s412
      %p421 = scmp.eq.s32.totalorder %s34, 1
      %p422 = por %p420, %p421
      %p423 = scmp.ne.s32.totalorder %s412, %s413
      %p424 = scmp.eq.s32.totalorder %s34, 0
      %p425 = por %p423, %p424
      %p426 = scmp.ne.s32.totalorder %s412, %s413
      %p427 = scmp.eq.s32.totalorder %s35, 1
      %p428 = por %p426, %p427
      %p430 = scmp.ne.s32.totalorder %s413, %s429
      %p431 = scmp.eq.s32.totalorder %s35, 0
      %p432 = por %p430, %p431
      %s434 = sadd.s32 %s433, 1
      %p437 = scmp.eq.s32.totalorder %s29, 1
      %p438 = scmp.ne.s32.totalorder %s433, %s435
      %p439 = scmp.eq.s32.totalorder %s29, 0
      %p440 = por %p438, %p439
      %p441 = scmp.ne.s32.totalorder %s433, %s435
      %p442 = scmp.eq.s32.totalorder %s34, 1
      %p443 = por %p441, %p442
      %p444 = scmp.ne.s32.totalorder %s435, %s436
      %p445 = scmp.eq.s32.totalorder %s34, 0
      %p446 = por %p444, %p445
      %p447 = scmp.ne.s32.totalorder %s435, %s436
      %p448 = scmp.eq.s32.totalorder %s35, 1
      %p449 = por %p447, %p448
      %p451 = scmp.ne.s32.totalorder %s436, %s450
      %p452 = scmp.eq.s32.totalorder %s35, 0
      %p453 = por %p451, %p452
      %s455 = sadd.s32 %s454, 1
      %p458 = scmp.eq.s32.totalorder %s29, 1
      %p459 = scmp.ne.s32.totalorder %s454, %s456
      %p460 = scmp.eq.s32.totalorder %s29, 0
      %p461 = por %p459, %p460
      %p462 = scmp.ne.s32.totalorder %s454, %s456
      %p463 = scmp.eq.s32.totalorder %s34, 1
      %p464 = por %p462, %p463
      %p465 = scmp.ne.s32.totalorder %s456, %s457
      %p466 = scmp.eq.s32.totalorder %s34, 0
      %p467 = por %p465, %p466
      %p468 = scmp.ne.s32.totalorder %s456, %s457
      %p469 = scmp.eq.s32.totalorder %s35, 1
      %p470 = por %p468, %p469
      %p472 = scmp.ne.s32.totalorder %s457, %s471
      %p473 = scmp.eq.s32.totalorder %s35, 0
      %p474 = por %p472, %p473
      %s476 = sadd.s32 %s475, 1
      %p479 = scmp.eq.s32.totalorder %s29, 1
      %p480 = scmp.ne.s32.totalorder %s475, %s477
      %p481 = scmp.eq.s32.totalorder %s29, 0
      %p482 = por %p480, %p481
      %p483 = scmp.ne.s32.totalorder %s475, %s477
      %p484 = scmp.eq.s32.totalorder %s34, 1
      %p485 = por %p483, %p484
      %p486 = scmp.ne.s32.totalorder %s477, %s478
      %p487 = scmp.eq.s32.totalorder %s34, 0
      %p488 = por %p486, %p487
      %p489 = scmp.ne.s32.totalorder %s477, %s478
      %p490 = scmp.eq.s32.totalorder %s35, 1
      %p491 = por %p489, %p490
      %p493 = scmp.ne.s32.totalorder %s478, %s492
      %p494 = scmp.eq.s32.totalorder %s35, 0
      %p495 = por %p493, %p494
      %s497 = sadd.s32 %s496, 1
      %p500 = scmp.eq.s32.totalorder %s29, 1
      %p501 = scmp.ne.s32.totalorder %s496, %s498
      %p502 = scmp.eq.s32.totalorder %s29, 0
      %p503 = por %p501, %p502
      %p504 = scmp.ne.s32.totalorder %s496, %s498
      %p505 = scmp.eq.s32.totalorder %s34, 1
      %p506 = por %p504, %p505
      %p507 = scmp.ne.s32.totalorder %s498, %s499
      %p508 = scmp.eq.s32.totalorder %s34, 0
      %p509 = por %p507, %p508
      %p510 = scmp.ne.s32.totalorder %s498, %s499
      %p511 = scmp.eq.s32.totalorder %s35, 1
      %p512 = por %p510, %p511
      %p514 = scmp.ne.s32.totalorder %s499, %s513
      %p515 = scmp.eq.s32.totalorder %s35, 0
      %p516 = por %p514, %p515
      %s518 = sadd.s32 %s517, 1
      %p521 = scmp.eq.s32.totalorder %s29, 1
      %p522 = scmp.ne.s32.totalorder %s517, %s519
      %p523 = scmp.eq.s32.totalorder %s29, 0
      %p524 = por %p522, %p523
      %p525 = scmp.ne.s32.totalorder %s517, %s519
      %p526 = scmp.eq.s32.totalorder %s34, 1
      %p527 = por %p525, %p526
      %p528 = scmp.ne.s32.totalorder %s519, %s520
      %p529 = scmp.eq.s32.totalorder %s34, 0
      %p530 = por %p528, %p529
      %p531 = scmp.ne.s32.totalorder %s519, %s520
      %p532 = scmp.eq.s32.totalorder %s35, 1
      %p533 = por %p531, %p532
      %p535 = scmp.ne.s32.totalorder %s520, %s534
      %p536 = scmp.eq.s32.totalorder %s35, 0
      %p537 = por %p535, %p536
      %p538 = scmp.le.s32.totalorder 1, %s29
      %p539 = scmp.lt.s32.totalorder %s29, 3
      %p540 = pnand %p538, %p539
      %p541 = pneg %p540
      // Predicated region
      $region9: #{_lambda_.1} parent=5 // pred_check
        _
      $region10: #{_lambda_.1} parent=5 // pred_check_branch
        %543 = sbr.rel (%p540) target = $region12
      $region11: #{_lambda_.1} parent=5 // pred_region
        %s544 = ssub.s32 %s29, 1
        // Predicated region
        $region13: #{_lambda_.1} parent=11 // pred_check
          %p545 = pneg %p50
        $region14: #{_lambda_.1} parent=11 // pred_check_branch
          %547 = sbr.rel (%p545) target = $region16
        $region15: #{_lambda_.1} parent=11 // pred_region
          _
        $region16: #{_lambda_.1} parent=11 // pred_fallthru
          _
        // Predicated region
        $region17: #{_lambda_.1} parent=11 // pred_check
          %p548 = pneg %p71
        $region18: #{_lambda_.1} parent=11 // pred_check_branch
          %550 = sbr.rel (%p548) target = $region20
        $region19: #{_lambda_.1} parent=11 // pred_region
          _
        $region20: #{_lambda_.1} parent=11 // pred_fallthru
          _
        // Predicated region
        $region21: #{_lambda_.1} parent=11 // pred_check
          %p551 = pneg %p92
        $region22: #{_lambda_.1} parent=11 // pred_check_branch
          %553 = sbr.rel (%p551) target = $region24
        $region23: #{_lambda_.1} parent=11 // pred_region
          _
        $region24: #{_lambda_.1} parent=11 // pred_fallthru
          _
        // Predicated region
        $region25: #{_lambda_.1} parent=11 // pred_check
          %p554 = pneg %p113
        $region26: #{_lambda_.1} parent=11 // pred_check_branch
          %556 = sbr.rel (%p554) target = $region28
        $region27: #{_lambda_.1} parent=11 // pred_region
          _
        $region28: #{_lambda_.1} parent=11 // pred_fallthru
          _
        // Predicated region
        $region29: #{_lambda_.1} parent=11 // pred_check
          %p557 = pneg %p446
        $region30: #{_lambda_.1} parent=11 // pred_check_branch
          %559 = sbr.rel (%p557) target = $region32
        $region31: #{_lambda_.1} parent=11 // pred_region
          _
        $region32: #{_lambda_.1} parent=11 // pred_fallthru
          _
        // Predicated region
        $region33: #{_lambda_.1} parent=11 // pred_check
          %p560 = pneg %p467
        $region34: #{_lambda_.1} parent=11 // pred_check_branch
          %562 = sbr.rel (%p560) target = $region36
        $region35: #{_lambda_.1} parent=11 // pred_region
          _
        $region36: #{_lambda_.1} parent=11 // pred_fallthru
          _
      $region12: #{_lambda_.1} parent=5 // pred_fallthru
        _
      %p563 = scmp.lt.s32.totalorder %s29, 2
      // Predicated region
      $region37: #{_lambda_.1} parent=5 // pred_check
        %p564 = pneg %p563
      $region38: #{_lambda_.1} parent=5 // pred_check_branch
        %566 = sbr.rel (%p564) target = $region40
      $region39: #{_lambda_.1} parent=5 // pred_region
        // Predicated region
        $region41: #{_lambda_.1} parent=39 // pred_check
          %p567 = pneg %p133
        $region42: #{_lambda_.1} parent=39 // pred_check_branch
          %569 = sbr.rel (%p567) target = $region44
        $region43: #{_lambda_.1} parent=39 // pred_region
          %p570 = scmp.lt.s32.totalorder %s29, 1
          %s571 = scalar_select %p570, %s29, 1
          %s572 = smul.addr %s571, 4
          %s573 = smul.addr %s572, 4
          %s574 = scalar_lea.vmem %s4, %s573
        $region44: #{_lambda_.1} parent=39 // pred_fallthru
          _
        // Predicated region
        $region45: #{_lambda_.1} parent=39 // pred_check
          %p575 = pneg %p159
        $region46: #{_lambda_.1} parent=39 // pred_check_branch
          %577 = sbr.rel (%p575) target = $region48
        $region47: #{_lambda_.1} parent=39 // pred_region
          %p578 = scmp.lt.s32.totalorder %s29, 1
          %s579 = scalar_select %p578, %s29, 1
          %s580 = scalar_lea.vmem %s5, %s579
        $region48: #{_lambda_.1} parent=39 // pred_fallthru
          _
        // Predicated region
        $region49: #{_lambda_.1} parent=39 // pred_check
          %p581 = pneg %p185
        $region50: #{_lambda_.1} parent=39 // pred_check_branch
          %583 = sbr.rel (%p581) target = $region52
        $region51: #{_lambda_.1} parent=39 // pred_region
          %p584 = scmp.lt.s32.totalorder %s29, 1
          %s585 = scalar_select %p584, %s29, 1
          %s586 = smul.addr %s585, 4
          %s587 = smul.addr %s586, 4
          %s588 = scalar_lea.vmem %s6, %s587
        $region52: #{_lambda_.1} parent=39 // pred_fallthru
          _
        // Predicated region
        $region53: #{_lambda_.1} parent=39 // pred_check
          %p589 = pneg %p211
        $region54: #{_lambda_.1} parent=39 // pred_check_branch
          %591 = sbr.rel (%p589) target = $region56
        $region55: #{_lambda_.1} parent=39 // pred_region
          %p592 = scmp.lt.s32.totalorder %s29, 1
          %s593 = scalar_select %p592, %s29, 1
          %s594 = scalar_lea.vmem %s7, %s593
        $region56: #{_lambda_.1} parent=39 // pred_fallthru
          _
        // Predicated region
        $region57: #{_lambda_.1} parent=39 // pred_check
          %p595 = pneg %p237
        $region58: #{_lambda_.1} parent=39 // pred_check_branch
          %597 = sbr.rel (%p595) target = $region60
        $region59: #{_lambda_.1} parent=39 // pred_region
          %p598 = scmp.lt.s32.totalorder %s29, 1
          %s599 = scalar_select %p598, %s29, 1
          %s600 = smul.addr %s599, 64
          %s601 = smul.addr %s600, 4
          %s602 = scalar_lea.vmem %s8, %s601
        $region60: #{_lambda_.1} parent=39 // pred_fallthru
          _
        // Predicated region
        $region61: #{_lambda_.1} parent=39 // pred_check
          %p603 = pneg %p263
        $region62: #{_lambda_.1} parent=39 // pred_check_branch
          %605 = sbr.rel (%p603) target = $region64
        $region63: #{_lambda_.1} parent=39 // pred_region
          %p606 = scmp.lt.s32.totalorder %s29, 1
          %s607 = scalar_select %p606, %s29, 1
          %s608 = smul.addr %s607, 16
          %s609 = scalar_lea.vmem %s9, %s608
        $region64: #{_lambda_.1} parent=39 // pred_fallthru
          _
        // Predicated region
        $region65: #{_lambda_.1} parent=39 // pred_check
          %p610 = pneg %p289
        $region66: #{_lambda_.1} parent=39 // pred_check_branch
          %612 = sbr.rel (%p610) target = $region68
        $region67: #{_lambda_.1} parent=39 // pred_region
          %p613 = scmp.lt.s32.totalorder %s29, 1
          %s614 = scalar_select %p613, %s29, 1
          %s615 = smul.addr %s614, 256
          %s616 = smul.addr %s615, 4
          %s617 = scalar_lea.vmem %s10, %s616
        $region68: #{_lambda_.1} parent=39 // pred_fallthru
          _
        // Predicated region
        $region69: #{_lambda_.1} parent=39 // pred_check
          %p618 = pneg %p315
        $region70: #{_lambda_.1} parent=39 // pred_check_branch
          %620 = sbr.rel (%p618) target = $region72
        $region71: #{_lambda_.1} parent=39 // pred_region
          %p621 = scmp.lt.s32.totalorder %s29, 1
          %s622 = scalar_select %p621, %s29, 1
          %s623 = scalar_lea.vmem %s11, %s622
        $region72: #{_lambda_.1} parent=39 // pred_fallthru
          _
        // Predicated region
        $region73: #{_lambda_.1} parent=39 // pred_check
          %p624 = pneg %p341
        $region74: #{_lambda_.1} parent=39 // pred_check_branch
          %626 = sbr.rel (%p624) target = $region76
        $region75: #{_lambda_.1} parent=39 // pred_region
          %p627 = scmp.lt.s32.totalorder %s29, 1
          %s628 = scalar_select %p627, %s29, 1
          %s629 = scalar_lea.vmem %s12, %s628
        $region76: #{_lambda_.1} parent=39 // pred_fallthru
          _
        // Predicated region
        $region77: #{_lambda_.1} parent=39 // pred_check
          %p630 = pneg %p367
        $region78: #{_lambda_.1} parent=39 // pred_check_branch
          %632 = sbr.rel (%p630) target = $region80
        $region79: #{_lambda_.1} parent=39 // pred_region
          %p633 = scmp.lt.s32.totalorder %s29, 1
          %s634 = scalar_select %p633, %s29, 1
          %s635 = scalar_lea.vmem %s13, %s634
        $region80: #{_lambda_.1} parent=39 // pred_fallthru
          _
        // Predicated region
        $region81: #{_lambda_.1} parent=39 // pred_check
          %p636 = pneg %p393
        $region82: #{_lambda_.1} parent=39 // pred_check_branch
          %638 = sbr.rel (%p636) target = $region84
        $region83: #{_lambda_.1} parent=39 // pred_region
          %p639 = scmp.lt.s32.totalorder %s29, 1
          %s640 = scalar_select %p639, %s29, 1
          %s641 = scalar_lea.vmem %s14, %s640
        $region84: #{_lambda_.1} parent=39 // pred_fallthru
          _
        // Predicated region
        $region85: #{_lambda_.1} parent=39 // pred_check
          %p642 = pneg %p419
        $region86: #{_lambda_.1} parent=39 // pred_check_branch
          %644 = sbr.rel (%p642) target = $region88
        $region87: #{_lambda_.1} parent=39 // pred_region
          %p645 = scmp.lt.s32.totalorder %s29, 1
          %s646 = scalar_select %p645, %s29, 1
          %s647 = scalar_lea.vmem %s15, %s646
        $region88: #{_lambda_.1} parent=39 // pred_fallthru
          _
      $region40: #{_lambda_.1} parent=5 // pred_fallthru
        _
      %p648 = scmp.le.s32.totalorder 1, %s29
      %p649 = scmp.lt.s32.totalorder %s29, 3
      %p650 = pnand %p648, %p649
      %p651 = pneg %p650
      // Predicated region
      $region89: #{_lambda_.1} parent=5 // pred_check
        _
      $region90: #{_lambda_.1} parent=5 // pred_check_branch
        %653 = sbr.rel (%p650) target = $region92
      $region91: #{_lambda_.1} parent=5 // pred_region
        %s654 = ssub.s32 %s29, 1
        %p655 = pneg %p50
        %p656 = pneg %p47
        %p657 = pneg %p71
        %p658 = pneg %p68
        %p659 = pneg %p92
        %p660 = pneg %p89
        %p661 = pneg %p113
        %p662 = pneg %p110
        %p663 = scmp.lt.s32.totalorder %s34, 1
        %s664 = scalar_select %p663, %s34, 1
        %s665 = smul.addr %s664, 4
        %s666 = smul.addr %s665, 4
        %s667 = scalar_lea.vmem %s4, %s666
        %p668 = pneg %p139
        %p669 = pneg %p136
        %p670 = scmp.lt.s32.totalorder %s34, 1
        %s671 = scalar_select %p670, %s34, 1
        %s672 = scalar_lea.vmem %s5, %s671
        %p673 = pneg %p165
        %p674 = pneg %p162
        %p675 = scmp.lt.s32.totalorder %s34, 1
        %s676 = scalar_select %p675, %s34, 1
        %s677 = smul.addr %s676, 4
        %s678 = smul.addr %s677, 4
        %s679 = scalar_lea.vmem %s6, %s678
        %p680 = pneg %p191
        %p681 = pneg %p188
        %p682 = scmp.lt.s32.totalorder %s34, 1
        %s683 = scalar_select %p682, %s34, 1
        %s684 = scalar_lea.vmem %s7, %s683
        %p685 = pneg %p217
        %p686 = pneg %p214
        %p687 = scmp.lt.s32.totalorder %s34, 1
        %s688 = scalar_select %p687, %s34, 1
        %s689 = smul.addr %s688, 64
        %s690 = smul.addr %s689, 4
        %s691 = scalar_lea.vmem %s8, %s690
        %p692 = pneg %p243
        %p693 = pneg %p240
        %p694 = scmp.lt.s32.totalorder %s34, 1
        %s695 = scalar_select %p694, %s34, 1
        %s696 = smul.addr %s695, 16
        %s697 = scalar_lea.vmem %s9, %s696
        %p698 = pneg %p269
        %p699 = pneg %p266
        %p700 = scmp.lt.s32.totalorder %s34, 1
        %s701 = scalar_select %p700, %s34, 1
        %s702 = smul.addr %s701, 256
        %s703 = smul.addr %s702, 4
        %s704 = scalar_lea.vmem %s10, %s703
        %p705 = pneg %p295
        %p706 = pneg %p292
        %p707 = scmp.lt.s32.totalorder %s34, 1
        %s708 = scalar_select %p707, %s34, 1
        %s709 = scalar_lea.vmem %s11, %s708
        %p710 = pneg %p321
        %p711 = pneg %p318
        %p712 = scmp.lt.s32.totalorder %s34, 1
        %s713 = scalar_select %p712, %s34, 1
        %s714 = scalar_lea.vmem %s12, %s713
        %p715 = pneg %p347
        %p716 = pneg %p344
        %p717 = scmp.lt.s32.totalorder %s34, 1
        %s718 = scalar_select %p717, %s34, 1
        %s719 = scalar_lea.vmem %s13, %s718
        %p720 = pneg %p373
        %p721 = pneg %p370
        %p722 = scmp.lt.s32.totalorder %s34, 1
        %s723 = scalar_select %p722, %s34, 1
        %s724 = scalar_lea.vmem %s14, %s723
        %p725 = pneg %p399
        %p726 = pneg %p396
        %p727 = scmp.lt.s32.totalorder %s34, 1
        %s728 = scalar_select %p727, %s34, 1
        %s729 = scalar_lea.vmem %s15, %s728
        %p730 = pneg %p425
        %p731 = pneg %p422
        %p732 = pneg %p446
        %p733 = pneg %p443
        %p734 = pneg %p467
        %p735 = pneg %p464
        %p736 = pneg %p488
        %p737 = pneg %p485
        %p738 = pneg %p509
        %p739 = pneg %p506
        %p740 = pneg %p530
        %p741 = pneg %p527
        %p742 = scmp.lt.s32.totalorder %s34, 1
        %s743 = scalar_select %p742, %s34, 1
        %s744 = smul.addr %s743, 4
        %s745 = smul.addr %s744, 4
        %s746 = scalar_lea.vmem %s4, %s745
        %p747 = scmp.lt.s32.totalorder %s34, 1
        %s748 = scalar_select %p747, %s34, 1
        %s749 = scalar_lea.vmem %s5, %s748
        %p750 = scmp.lt.s32.totalorder %s34, 1
        %s751 = scalar_select %p750, %s34, 1
        %s752 = smul.addr %s751, 4
        %s753 = smul.addr %s752, 4
        %s754 = scalar_lea.vmem %s6, %s753
        %p755 = scmp.lt.s32.totalorder %s34, 1
        %s756 = scalar_select %p755, %s34, 1
        %s757 = scalar_lea.vmem %s7, %s756
        %p758 = scmp.lt.s32.totalorder %s34, 1
        %s759 = scalar_select %p758, %s34, 1
        %s760 = smul.addr %s759, 64
        %s761 = smul.addr %s760, 4
        %s762 = scalar_lea.vmem %s8, %s761
        %p763 = scmp.lt.s32.totalorder %s34, 1
        %s764 = scalar_select %p763, %s34, 1
        %s765 = smul.addr %s764, 16
        %s766 = scalar_lea.vmem %s9, %s765
        %p767 = scmp.lt.s32.totalorder %s34, 1
        %s768 = scalar_select %p767, %s34, 1
        %s769 = smul.addr %s768, 256
        %s770 = smul.addr %s769, 4
        %s771 = scalar_lea.vmem %s10, %s770
        %p772 = scmp.lt.s32.totalorder %s34, 1
        %s773 = scalar_select %p772, %s34, 1
        %s774 = scalar_lea.vmem %s11, %s773
        %p775 = scmp.lt.s32.totalorder %s34, 1
        %s776 = scalar_select %p775, %s34, 1
        %s777 = scalar_lea.vmem %s12, %s776
        %p778 = scmp.lt.s32.totalorder %s34, 1
        %s779 = scalar_select %p778, %s34, 1
        %s780 = scalar_lea.vmem %s13, %s779
        %p781 = scmp.lt.s32.totalorder %s34, 1
        %s782 = scalar_select %p781, %s34, 1
        %s783 = scalar_lea.vmem %s14, %s782
        %p784 = scmp.lt.s32.totalorder %s34, 1
        %s785 = scalar_select %p784, %s34, 1
        %s786 = scalar_lea.vmem %s15, %s785
        %p788 = scmp.eq.s32.totalorder %s34, 0
        // Predicated region
        $region93: #{_lambda_.1} parent=91 // pred_check
          %p789 = pneg %p788
        $region94: #{_lambda_.1} parent=91 // pred_check_branch
          %791 = sbr.rel (%p789) target = $region96
        $region95: #{_lambda_.1} parent=91 // pred_region
          %v792 = vld [vmem:[%s0] sm:$0xff]
          %v793 = vld [vmem:[%s0 + $0x8] sm:$0xff]
          %v794 = vpack.c.bf16 %v793, %v792
          %v795 = vld [vmem:[%s2] sm:$0xf]
          %v796 = vld [vmem:[%s2 + $0x4] sm:$0xf]
          %v797 = vld [vmem:[%s3] sm:$0x1]
          %v799 = vperm.slane %v797, 0
          %v803 = vunpack.c.l.b16 %v795
          %v804 = vunpack.c.l.b16 %v796
          %v805 = vpack.c.b16 %v804, %v803
          %vm807 = vcmask 130048
          %v809 = vsel %vm807, %v794, 0
          %811 = vmatpush.bf16.msra.mxu0 0
          %812 = vmatpush.bf16.msra.mxu0 0
          %813 = vmatpush.bf16.msra.mxu0 0
          %814 = vmatpush.bf16.msra.mxu0 0
          %815 = vmatpush.bf16.msra.mxu0 0
          %816 = vmatpush.bf16.msra.mxu0 0
          %817 = vmatpush.bf16.msra.mxu0 0
          %818 = vmatpush.bf16.msra.mxu0 %v805
          %819 = vmatmul.bf16.gmra.mxu0 %v809
          %v820 = vpop.f32.mrf.mxu0
          %v821 = vadd.f32 %v799, %v820
          %v822 = vpop.f32.mrf.mxu0
          %v823 = vadd.f32 %v799, %v822
          %824 = vdwg.mxu0
          %vm825 = vcmask 261120
          %826 = vst.msk [vmem:[#allocation2] sm:$0xff] %vm825, %v821
          %827 = vst.msk [vmem:[#allocation2 + $0x8] sm:$0xff] %vm825, %v823
          %828 = vst.msk [vmem:[#allocation3] sm:$0xff] %vm825, %v821
          %829 = vst.msk [vmem:[#allocation3 + $0x8] sm:$0xff] %vm825, %v823
        $region96: #{_lambda_.1} parent=91 // pred_fallthru
          _
        %v830 = vld [vmem:[#allocation2] sm:$0xff]
        %v831 = vld [vmem:[#allocation2 + $0x8] sm:$0xff]
        %v832 = vpack.c.bf16 %v831, %v830
        %v833 = vld [vmem:[%s746] sm:$0xf]
        %v834 = vld [vmem:[%s746 + $0x4] sm:$0xf]
        %v835 = vld [vmem:[%s746 + $0x8] sm:$0xf]
        %v836 = vld [vmem:[%s746 + $0xc] sm:$0xf]
        %v837 = vld [vmem:[%s749] sm:$0x1]
        %v839 = vperm.slane %v837, 0
        %v845 = vunpack.c.l.b16 %v833
        %v846 = vunpack.c.l.b16 %v834
        %v847 = vunpack.c.l.b16 %v835
        %v848 = vunpack.c.l.b16 %v836
        %v849 = vpack.c.b16 %v846, %v845
        %v850 = vpack.c.b16 %v848, %v847
        %vm853 = vcmask 261120
        %v855 = vsel %vm853, %v832, 0
        %857 = vmatpush.bf16.msra.mxu0 0
        %858 = vmatpush.bf16.msra.mxu0 0
        %859 = vmatpush.bf16.msra.mxu0 0
        %860 = vmatpush.bf16.msra.mxu0 0
        %861 = vmatpush.bf16.msra.mxu0 0
        %862 = vmatpush.bf16.msra.mxu0 0
        %863 = vmatpush.bf16.msra.mxu0 %v850
        %864 = vmatpush.bf16.msra.mxu0 %v849
        %865 = vmatmul.bf16.gmra.mxu0 %v855
        %v866 = vpop.f32.mrf.mxu0
        %v867 = vadd.f32 %v839, %v866
        %v868 = vpop.f32.mrf.mxu0
        %v869 = vadd.f32 %v839, %v868
        %870 = vdwg.mxu0
        %v871 = vmul.f32 %v867, 0.35355338
        %v872 = vmul.f32 %v869, 0.35355338
        %v873 = vpack.c.bf16 %v872, %v871
        %v874 = vpack.c.bf16 %v869, %v867
        %876 = vrot.lane.b32.xlu0 %v874, 96
        %v877 = vpop.permute.xlu0 %876
        %vm878 = vcmask 64512
        %v880 = vsel %vm878, %v873, 0
        %v883 = vsel %vm878, %v877, 0
        %885 = vmatpush.bf16.xpose.msra.mxu0 0
        %886 = vmatpush.bf16.xpose.msra.mxu0 0
        %887 = vmatpush.bf16.xpose.msra.mxu0 0
        %888 = vmatpush.bf16.xpose.msra.mxu0 0
        %889 = vmatpush.bf16.xpose.msra.mxu0 0
        %890 = vmatpush.bf16.xpose.msra.mxu0 0
        %891 = vmatpush.bf16.xpose.msra.mxu0 0
        %892 = vmatpush.bf16.xpose.msra.mxu0 %v883
        %893 = vmatmul.bf16.gmra.mxu0 %v880
        %v894 = vpop.f32.mrf.mxu0
        %v895 = vadd.f32 0.0, %v894
        %v896 = vpop.f32.mrf.mxu0
        %v897 = vadd.f32 0.0, %v896
        %898 = vdwg.mxu0
        %vm899 = vcmask 130048
        %v900 = vsel %vm899, %v895, -inf
        %901 = vmax.xlane.f32.xlu0 %v900
        %v902 = vpop.xlane.xlu0 %901
        %v903 = vsel %vm899, %v897, -inf
        %904 = vmax.xlane.f32.xlu0 %v903
        %v905 = vpop.xlane.xlu0 %904
        %v906 = vsub.f32 %v895, %v902
        %v907 = vsub.f32 %v897, %v905
        %v908 = vmul.f32 %v906, 1.442695
        %v909 = vpow.pop %v908
        %v910 = vmul.f32 %v907, 1.442695
        %v911 = vpow.pop %v910
        %v912 = vsel %vm899, %v909, 0.0
        %913 = vadd.xlane.f32.xlu0 %v912
        %v914 = vpop.xlane.xlu0 %913
        %v915 = vsel %vm899, %v911, 0.0
        %916 = vadd.xlane.f32.xlu0 %v915
        %v917 = vpop.xlane.xlu0 %916
        %v918 = vrcp.pop %v914
        %v919 = vrcp.pop %v917
        %v920 = vmul.f32 %v909, %v918
        %v921 = vmul.f32 %v911, %v919
        %v922 = vpack.c.bf16 %v921, %v920
        %923 = vrot.lane.b32.xlu0 %v874, 64
        %v924 = vpop.permute.xlu0 %923
        %v927 = vsel %vm899, %v922, 0
        %929 = vmatpush.bf16.msra.mxu0 0
        %930 = vmatpush.bf16.msra.mxu0 0
        %931 = vmatpush.bf16.msra.mxu0 0
        %932 = vmatpush.bf16.msra.mxu0 0
        %933 = vmatpush.bf16.msra.mxu0 0
        %934 = vmatpush.bf16.msra.mxu0 0
        %935 = vmatpush.bf16.msra.mxu0 0
        %936 = vmatpush.bf16.msra.mxu0 %v924
        %937 = vmatmul.bf16.gmra.mxu0 %v927
        %v938 = vpop.f32.mrf.mxu0
        %v939 = vadd.f32 0.0, %v938
        %v940 = vpop.f32.mrf.mxu0
        %v941 = vadd.f32 0.0, %v940
        %942 = vdwg.mxu0
        %944 = vrot.lane.b32.xlu0 %v873, 120
        %v945 = vpop.permute.xlu0 %944
        %946 = vrot.lane.b32.xlu0 %v874, 88
        %v947 = vpop.permute.xlu0 %946
        %v949 = vsel %vm878, %v945, 0
        %v952 = vsel %vm878, %v947, 0
        %954 = vmatpush.bf16.xpose.msra.mxu0 0
        %955 = vmatpush.bf16.xpose.msra.mxu0 0
        %956 = vmatpush.bf16.xpose.msra.mxu0 0
        %957 = vmatpush.bf16.xpose.msra.mxu0 0
        %958 = vmatpush.bf16.xpose.msra.mxu0 0
        %959 = vmatpush.bf16.xpose.msra.mxu0 0
        %960 = vmatpush.bf16.xpose.msra.mxu0 0
        %961 = vmatpush.bf16.xpose.msra.mxu0 %v952
        %962 = vmatmul.bf16.gmra.mxu0 %v949
        %v963 = vpop.f32.mrf.mxu0
        %v964 = vadd.f32 0.0, %v963
        %v965 = vpop.f32.mrf.mxu0
        %v966 = vadd.f32 0.0, %v965
        %967 = vdwg.mxu0
        %v968 = vsel %vm899, %v964, -inf
        %969 = vmax.xlane.f32.xlu0 %v968
        %v970 = vpop.xlane.xlu0 %969
        %v971 = vsel %vm899, %v966, -inf
        %972 = vmax.xlane.f32.xlu0 %v971
        %v973 = vpop.xlane.xlu0 %972
        %v974 = vsub.f32 %v964, %v970
        %v975 = vsub.f32 %v966, %v973
        %v976 = vmul.f32 %v974, 1.442695
        %v977 = vpow.pop %v976
        %v978 = vmul.f32 %v975, 1.442695
        %v979 = vpow.pop %v978
        %v980 = vsel %vm899, %v977, 0.0
        %981 = vadd.xlane.f32.xlu0 %v980
        %v982 = vpop.xlane.xlu0 %981
        %v983 = vsel %vm899, %v979, 0.0
        %984 = vadd.xlane.f32.xlu0 %v983
        %v985 = vpop.xlane.xlu0 %984
        %v986 = vrcp.pop %v982
        %v987 = vrcp.pop %v985
        %v988 = vmul.f32 %v977, %v986
        %v989 = vmul.f32 %v979, %v987
        %v990 = vpack.c.bf16 %v989, %v988
        %991 = vrot.lane.b32.xlu0 %v874, 56
        %v992 = vpop.permute.xlu0 %991
        %v995 = vsel %vm899, %v990, 0
        %997 = vmatpush.bf16.msra.mxu0 0
        %998 = vmatpush.bf16.msra.mxu0 0
        %999 = vmatpush.bf16.msra.mxu0 0
        %1000 = vmatpush.bf16.msra.mxu0 0
        %1001 = vmatpush.bf16.msra.mxu0 0
        %1002 = vmatpush.bf16.msra.mxu0 0
        %1003 = vmatpush.bf16.msra.mxu0 0
        %1004 = vmatpush.bf16.msra.mxu0 %v992
        %1005 = vmatmul.bf16.gmra.mxu0 %v995
        %v1006 = vpop.f32.mrf.mxu0
        %v1007 = vadd.f32 0.0, %v1006
        %v1008 = vpop.f32.mrf.mxu0
        %v1009 = vadd.f32 0.0, %v1008
        %1010 = vdwg.mxu0
        %1011 = vrot.lane.b32.xlu0 %v873, 112
        %v1012 = vpop.permute.xlu0 %1011
        %1013 = vrot.lane.b32.xlu0 %v874, 80
        %v1014 = vpop.permute.xlu0 %1013
        %v1016 = vsel %vm878, %v1012, 0
        %v1019 = vsel %vm878, %v1014, 0
        %1021 = vmatpush.bf16.xpose.msra.mxu0 0
        %1022 = vmatpush.bf16.xpose.msra.mxu0 0
        %1023 = vmatpush.bf16.xpose.msra.mxu0 0
        %1024 = vmatpush.bf16.xpose.msra.mxu0 0
        %1025 = vmatpush.bf16.xpose.msra.mxu0 0
        %1026 = vmatpush.bf16.xpose.msra.mxu0 0
        %1027 = vmatpush.bf16.xpose.msra.mxu0 0
        %1028 = vmatpush.bf16.xpose.msra.mxu0 %v1019
        %1029 = vmatmul.bf16.gmra.mxu0 %v1016
        %v1030 = vpop.f32.mrf.mxu0
        %v1031 = vadd.f32 0.0, %v1030
        %v1032 = vpop.f32.mrf.mxu0
        %v1033 = vadd.f32 0.0, %v1032
        %1034 = vdwg.mxu0
        %v1035 = vsel %vm899, %v1031, -inf
        %1036 = vmax.xlane.f32.xlu0 %v1035
        %v1037 = vpop.xlane.xlu0 %1036
        %v1038 = vsel %vm899, %v1033, -inf
        %1039 = vmax.xlane.f32.xlu0 %v1038
        %v1040 = vpop.xlane.xlu0 %1039
        %v1041 = vsub.f32 %v1031, %v1037
        %v1042 = vsub.f32 %v1033, %v1040
        %v1043 = vmul.f32 %v1041, 1.442695
        %v1044 = vpow.pop %v1043
        %v1045 = vmul.f32 %v1042, 1.442695
        %v1046 = vpow.pop %v1045
        %v1047 = vsel %vm899, %v1044, 0.0
        %1048 = vadd.xlane.f32.xlu0 %v1047
        %v1049 = vpop.xlane.xlu0 %1048
        %v1050 = vsel %vm899, %v1046, 0.0
        %1051 = vadd.xlane.f32.xlu0 %v1050
        %v1052 = vpop.xlane.xlu0 %1051
        %v1053 = vrcp.pop %v1049
        %v1054 = vrcp.pop %v1052
        %v1055 = vmul.f32 %v1044, %v1053
        %v1056 = vmul.f32 %v1046, %v1054
        %v1057 = vpack.c.bf16 %v1056, %v1055
        %1058 = vrot.lane.b32.xlu0 %v874, 48
        %v1059 = vpop.permute.xlu0 %1058
        %v1062 = vsel %vm899, %v1057, 0
        %1064 = vmatpush.bf16.msra.mxu0 0
        %1065 = vmatpush.bf16.msra.mxu0 0
        %1066 = vmatpush.bf16.msra.mxu0 0
        %1067 = vmatpush.bf16.msra.mxu0 0
        %1068 = vmatpush.bf16.msra.mxu0 0
        %1069 = vmatpush.bf16.msra.mxu0 0
        %1070 = vmatpush.bf16.msra.mxu0 0
        %1071 = vmatpush.bf16.msra.mxu0 %v1059
        %1072 = vmatmul.bf16.gmra.mxu0 %v1062
        %v1073 = vpop.f32.mrf.mxu0
        %v1074 = vadd.f32 0.0, %v1073
        %v1075 = vpop.f32.mrf.mxu0
        %v1076 = vadd.f32 0.0, %v1075
        %1077 = vdwg.mxu0
        %1078 = vrot.lane.b32.xlu0 %v873, 104
        %v1079 = vpop.permute.xlu0 %1078
        %1080 = vrot.lane.b32.xlu0 %v874, 72
        %v1081 = vpop.permute.xlu0 %1080
        %v1083 = vsel %vm878, %v1079, 0
        %v1086 = vsel %vm878, %v1081, 0
        %1088 = vmatpush.bf16.xpose.msra.mxu0 0
        %1089 = vmatpush.bf16.xpose.msra.mxu0 0
        %1090 = vmatpush.bf16.xpose.msra.mxu0 0
        %1091 = vmatpush.bf16.xpose.msra.mxu0 0
        %1092 = vmatpush.bf16.xpose.msra.mxu0 0
        %1093 = vmatpush.bf16.xpose.msra.mxu0 0
        %1094 = vmatpush.bf16.xpose.msra.mxu0 0
        %1095 = vmatpush.bf16.xpose.msra.mxu0 %v1086
        %1096 = vmatmul.bf16.gmra.mxu0 %v1083
        %v1097 = vpop.f32.mrf.mxu0
        %v1098 = vadd.f32 0.0, %v1097
        %v1099 = vpop.f32.mrf.mxu0
        %v1100 = vadd.f32 0.0, %v1099
        %1101 = vdwg.mxu0
        %v1102 = vsel %vm899, %v1098, -inf
        %1103 = vmax.xlane.f32.xlu0 %v1102
        %v1104 = vpop.xlane.xlu0 %1103
        %v1105 = vsel %vm899, %v1100, -inf
        %1106 = vmax.xlane.f32.xlu0 %v1105
        %v1107 = vpop.xlane.xlu0 %1106
        %v1108 = vsub.f32 %v1098, %v1104
        %v1109 = vsub.f32 %v1100, %v1107
        %v1110 = vmul.f32 %v1108, 1.442695
        %v1111 = vpow.pop %v1110
        %v1112 = vmul.f32 %v1109, 1.442695
        %v1113 = vpow.pop %v1112
        %v1114 = vsel %vm899, %v1111, 0.0
        %1115 = vadd.xlane.f32.xlu0 %v1114
        %v1116 = vpop.xlane.xlu0 %1115
        %v1117 = vsel %vm899, %v1113, 0.0
        %1118 = vadd.xlane.f32.xlu0 %v1117
        %v1119 = vpop.xlane.xlu0 %1118
        %v1120 = vrcp.pop %v1116
        %v1121 = vrcp.pop %v1119
        %v1122 = vmul.f32 %v1111, %v1120
        %v1123 = vmul.f32 %v1113, %v1121
        %v1124 = vpack.c.bf16 %v1123, %v1122
        %1125 = vrot.lane.b32.xlu0 %v874, 40
        %v1126 = vpop.permute.xlu0 %1125
        %v1129 = vsel %vm899, %v1124, 0
        %1131 = vmatpush.bf16.msra.mxu0 0
        %1132 = vmatpush.bf16.msra.mxu0 0
        %1133 = vmatpush.bf16.msra.mxu0 0
        %1134 = vmatpush.bf16.msra.mxu0 0
        %1135 = vmatpush.bf16.msra.mxu0 0
        %1136 = vmatpush.bf16.msra.mxu0 0
        %1137 = vmatpush.bf16.msra.mxu0 0
        %1138 = vmatpush.bf16.msra.mxu0 %v1126
        %1139 = vmatmul.bf16.gmra.mxu0 %v1129
        %v1140 = vpop.f32.mrf.mxu0
        %v1141 = vadd.f32 0.0, %v1140
        %v1142 = vpop.f32.mrf.mxu0
        %v1143 = vadd.f32 0.0, %v1142
        %1144 = vdwg.mxu0
        %1147 = vrot.lane.b32.xlu0 %v1007, 8
        %v1148 = vpop.permute.xlu0 %1147
        %1149 = vrot.lane.b32.xlu0 %v1009, 8
        %v1150 = vpop.permute.xlu0 %1149
        %1155 = vrot.lane.b32.xlu0 %v1074, 16
        %v1156 = vpop.permute.xlu0 %1155
        %1157 = vrot.lane.b32.xlu0 %v1076, 16
        %v1158 = vpop.permute.xlu0 %1157
        %1163 = vrot.lane.b32.xlu0 %v1141, 24
        %v1164 = vpop.permute.xlu0 %1163
        %1165 = vrot.lane.b32.xlu0 %v1143, 24
        %v1166 = vpop.permute.xlu0 %1165
        %v1169 = vsel %vm878, %v939, %v1148
        %v1170 = vsel %vm878, %v941, %v1150
        %v1171 = vsel %vm899, %v1169, %v1156
        %v1172 = vsel %vm899, %v1170, %v1158
        %vm1173 = vcmask 195584
        %v1174 = vsel %vm1173, %v1171, %v1164
        %v1175 = vsel %vm1173, %v1172, %v1166
        %v1176 = vpack.c.bf16 %v1175, %v1174
        %v1177 = vld [vmem:[%s754] sm:$0xf]
        %v1178 = vld [vmem:[%s754 + $0x4] sm:$0xf]
        %v1179 = vld [vmem:[%s754 + $0x8] sm:$0xf]
        %v1180 = vld [vmem:[%s754 + $0xc] sm:$0xf]
        %v1181 = vld [vmem:[%s757] sm:$0x1]
        %v1183 = vperm.slane %v1181, 0
        %v1189 = vunpack.c.l.b16 %v1177
        %v1190 = vunpack.c.l.b16 %v1178
        %v1191 = vunpack.c.l.b16 %v1179
        %v1192 = vunpack.c.l.b16 %v1180
        %v1193 = vpack.c.b16 %v1190, %v1189
        %v1194 = vpack.c.b16 %v1192, %v1191
        %v1198 = vsel %vm853, %v1176, 0
        %1200 = vmatpush.bf16.msra.mxu0 0
        %1201 = vmatpush.bf16.msra.mxu0 0
        %1202 = vmatpush.bf16.msra.mxu0 0
        %1203 = vmatpush.bf16.msra.mxu0 0
        %1204 = vmatpush.bf16.msra.mxu0 0
        %1205 = vmatpush.bf16.msra.mxu0 0
        %1206 = vmatpush.bf16.msra.mxu0 %v1194
        %1207 = vmatpush.bf16.msra.mxu0 %v1193
        %1208 = vmatmul.bf16.gmra.mxu0 %v1198
        %v1209 = vpop.f32.mrf.mxu0
        %v1210 = vadd.f32 %v1183, %v1209
        %v1211 = vpop.f32.mrf.mxu0
        %v1212 = vadd.f32 %v1183, %v1211
        %1213 = vdwg.mxu0
        %v1214 = vadd.f32 %v830, %v1210
        %v1215 = vadd.f32 %v831, %v1212
        %v1216 = vld [vmem:[%s777] sm:$0x1]
        %v1217 = vld [vmem:[%s780] sm:$0x1]
        %v1218 = vsel %vm853, %v1214, 0.0
        %1219 = vadd.xlane.f32.xlu0 %v1218
        %v1220 = vpop.xlane.xlu0 %1219
        %v1221 = vsel %vm853, %v1215, 0.0
        %1222 = vadd.xlane.f32.xlu0 %v1221
        %v1223 = vpop.xlane.xlu0 %1222
        %v1224 = vrcp.pop 32.0
        %v1225 = vmul.f32 32.0, %v1224
        %v1226 = vsub.f32 1.0, %v1225
        %v1227 = vmul.f32 %v1224, %v1226
        %v1228 = vadd.f32 %v1224, %v1227
        %vm1229 = vweird.f32 %v1224
        %v1230 = vsel %vm1229, %v1224, %v1228
        %v1231 = vmul.f32 %v1220, %v1230
        %v1232 = vmul.f32 %v1223, %v1230
        %v1233 = vsub.f32 %v1214, %v1231
        %v1234 = vsub.f32 %v1215, %v1232
        %v1235 = vmul.f32 %v1233, %v1233
        %v1236 = vmul.f32 %v1234, %v1234
        %v1237 = vsel %vm853, %v1235, 0.0
        %1238 = vadd.xlane.f32.xlu0 %v1237
        %v1239 = vpop.xlane.xlu0 %1238
        %v1240 = vsel %vm853, %v1236, 0.0
        %1241 = vadd.xlane.f32.xlu0 %v1240
        %v1242 = vpop.xlane.xlu0 %1241
        %v1243 = vmul.f32 %v1239, %v1230
        %v1244 = vmul.f32 %v1242, %v1230
        %v1245 = vadd.f32 %v1243, 1e-05
        %v1246 = vadd.f32 %v1244, 1e-05
        %v1247 = vrsqrt.pop %v1245
        %v1248 = vmul.f32 %v1247, %v1245
        %v1249 = vmul.f32 %v1248, %v1247
        %v1250 = vmul.f32 0.5, %v1249
        %v1251 = vsub.f32 1.5, %v1250
        %v1252 = vmul.f32 %v1247, %v1251
        %vm1253 = vweird.f32 %v1245
        %vm1254 = vweird.f32 %v1247
        %vm1255 = vmor %vm1253, %vm1254
        %v1256 = vsel %vm1255, %v1247, %v1252
        %v1257 = vrsqrt.pop %v1246
        %v1258 = vmul.f32 %v1257, %v1246
        %v1259 = vmul.f32 %v1258, %v1257
        %v1260 = vmul.f32 0.5, %v1259
        %v1261 = vsub.f32 1.5, %v1260
        %v1262 = vmul.f32 %v1257, %v1261
        %vm1263 = vweird.f32 %v1246
        %vm1264 = vweird.f32 %v1257
        %vm1265 = vmor %vm1263, %vm1264
        %v1266 = vsel %vm1265, %v1257, %v1262
        %v1267 = vmul.f32 %v1233, %v1256
        %v1268 = vmul.f32 %v1234, %v1266
        %v1270 = vperm.slane %v1216, 0
        %v1272 = vmul.f32 %v1267, %v1270
        %v1273 = vmul.f32 %v1268, %v1270
        %v1275 = vperm.slane %v1217, 0
        %v1277 = vadd.f32 %v1272, %v1275
        %v1278 = vadd.f32 %v1273, %v1275
        %v1279 = vpack.c.bf16 %v1278, %v1277
        %v1280 = vld [vmem:[%s762] sm:$0xff]
        %v1281 = vld [vmem:[%s762 + $0x8] sm:$0xff]
        %v1282 = vld [vmem:[%s762 + $0x10] sm:$0xff]
        %v1283 = vld [vmem:[%s762 + $0x18] sm:$0xff]
        %v1284 = vld [vmem:[%s762 + $0x20] sm:$0xff]
        %v1285 = vld [vmem:[%s762 + $0x28] sm:$0xff]
        %v1286 = vld [vmem:[%s762 + $0x30] sm:$0xff]
        %v1287 = vld [vmem:[%s762 + $0x38] sm:$0xff]
        %v1288 = vld [vmem:[%s762 + $0x40] sm:$0xff]
        %v1289 = vld [vmem:[%s762 + $0x48] sm:$0xff]
        %v1290 = vld [vmem:[%s762 + $0x50] sm:$0xff]
        %v1291 = vld [vmem:[%s762 + $0x58] sm:$0xff]
        %v1292 = vld [vmem:[%s762 + $0x60] sm:$0xff]
        %v1293 = vld [vmem:[%s762 + $0x68] sm:$0xff]
        %v1294 = vld [vmem:[%s762 + $0x70] sm:$0xff]
        %v1295 = vld [vmem:[%s762 + $0x78] sm:$0xff]
        %v1296 = vld [vmem:[%s762 + $0x80] sm:$0xff]
        %v1297 = vld [vmem:[%s762 + $0x88] sm:$0xff]
        %v1298 = vld [vmem:[%s762 + $0x90] sm:$0xff]
        %v1299 = vld [vmem:[%s762 + $0x98] sm:$0xff]
        %v1300 = vld [vmem:[%s762 + $0xa0] sm:$0xff]
        %v1301 = vld [vmem:[%s762 + $0xa8] sm:$0xff]
        %v1302 = vld [vmem:[%s762 + $0xb0] sm:$0xff]
        %v1303 = vld [vmem:[%s762 + $0xb8] sm:$0xff]
        %v1304 = vld [vmem:[%s762 + $0xc0] sm:$0xff]
        %v1305 = vld [vmem:[%s762 + $0xc8] sm:$0xff]
        %v1306 = vld [vmem:[%s762 + $0xd0] sm:$0xff]
        %v1307 = vld [vmem:[%s762 + $0xd8] sm:$0xff]
        %v1308 = vld [vmem:[%s762 + $0xe0] sm:$0xff]
        %v1309 = vld [vmem:[%s762 + $0xe8] sm:$0xff]
        %v1310 = vld [vmem:[%s762 + $0xf0] sm:$0xff]
        %v1311 = vld [vmem:[%s762 + $0xf8] sm:$0xff]
        %v1312 = vld [vmem:[%s766] sm:$0xff]
        %v1313 = vld [vmem:[%s766 + $0x8] sm:$0xff]
        %v1316 = vperm.slane %v1312, 0
        %v1317 = vperm.slane %v1312, 1
        %v1318 = vperm.slane %v1312, 2
        %v1319 = vperm.slane %v1312, 3
        %v1320 = vperm.slane %v1312, 4
        %v1321 = vperm.slane %v1312, 5
        %v1322 = vperm.slane %v1312, 6
        %v1323 = vperm.slane %v1312, 7
        %v1324 = vperm.slane %v1313, 0
        %v1325 = vperm.slane %v1313, 1
        %v1326 = vperm.slane %v1313, 2
        %v1327 = vperm.slane %v1313, 3
        %v1328 = vperm.slane %v1313, 4
        %v1329 = vperm.slane %v1313, 5
        %v1330 = vperm.slane %v1313, 6
        %v1331 = vperm.slane %v1313, 7
        %v1380 = vunpack.c.l.b16 %v1280
        %v1381 = vunpack.c.h.b16 %v1280
        %v1382 = vunpack.c.l.b16 %v1281
        %v1383 = vunpack.c.h.b16 %v1281
        %v1384 = vunpack.c.l.b16 %v1282
        %v1385 = vunpack.c.h.b16 %v1282
        %v1386 = vunpack.c.l.b16 %v1283
        %v1387 = vunpack.c.h.b16 %v1283
        %v1388 = vunpack.c.l.b16 %v1284
        %v1389 = vunpack.c.h.b16 %v1284
        %v1390 = vunpack.c.l.b16 %v1285
        %v1391 = vunpack.c.h.b16 %v1285
        %v1392 = vunpack.c.l.b16 %v1286
        %v1393 = vunpack.c.h.b16 %v1286
        %v1394 = vunpack.c.l.b16 %v1287
        %v1395 = vunpack.c.h.b16 %v1287
        %v1396 = vunpack.c.l.b16 %v1288
        %v1397 = vunpack.c.h.b16 %v1288
        %v1398 = vunpack.c.l.b16 %v1289
        %v1399 = vunpack.c.h.b16 %v1289
        %v1400 = vunpack.c.l.b16 %v1290
        %v1401 = vunpack.c.h.b16 %v1290
        %v1402 = vunpack.c.l.b16 %v1291
        %v1403 = vunpack.c.h.b16 %v1291
        %v1404 = vunpack.c.l.b16 %v1292
        %v1405 = vunpack.c.h.b16 %v1292
        %v1406 = vunpack.c.l.b16 %v1293
        %v1407 = vunpack.c.h.b16 %v1293
        %v1408 = vunpack.c.l.b16 %v1294
        %v1409 = vunpack.c.h.b16 %v1294
        %v1410 = vunpack.c.l.b16 %v1295
        %v1411 = vunpack.c.h.b16 %v1295
        %v1412 = vunpack.c.l.b16 %v1296
        %v1413 = vunpack.c.h.b16 %v1296
        %v1414 = vunpack.c.l.b16 %v1297
        %v1415 = vunpack.c.h.b16 %v1297
        %v1416 = vunpack.c.l.b16 %v1298
        %v1417 = vunpack.c.h.b16 %v1298
        %v1418 = vunpack.c.l.b16 %v1299
        %v1419 = vunpack.c.h.b16 %v1299
        %v1420 = vunpack.c.l.b16 %v1300
        %v1421 = vunpack.c.h.b16 %v1300
        %v1422 = vunpack.c.l.b16 %v1301
        %v1423 = vunpack.c.h.b16 %v1301
        %v1424 = vunpack.c.l.b16 %v1302
        %v1425 = vunpack.c.h.b16 %v1302
        %v1426 = vunpack.c.l.b16 %v1303
        %v1427 = vunpack.c.h.b16 %v1303
        %v1428 = vunpack.c.l.b16 %v1304
        %v1429 = vunpack.c.h.b16 %v1304
        %v1430 = vunpack.c.l.b16 %v1305
        %v1431 = vunpack.c.h.b16 %v1305
        %v1432 = vunpack.c.l.b16 %v1306
        %v1433 = vunpack.c.h.b16 %v1306
        %v1434 = vunpack.c.l.b16 %v1307
        %v1435 = vunpack.c.h.b16 %v1307
        %v1436 = vunpack.c.l.b16 %v1308
        %v1437 = vunpack.c.h.b16 %v1308
        %v1438 = vunpack.c.l.b16 %v1309
        %v1439 = vunpack.c.h.b16 %v1309
        %v1440 = vunpack.c.l.b16 %v1310
        %v1441 = vunpack.c.h.b16 %v1310
        %v1442 = vunpack.c.l.b16 %v1311
        %v1443 = vunpack.c.h.b16 %v1311
        %v1444 = vpack.c.b16 %v1396, %v1380
        %v1445 = vpack.c.b16 %v1397, %v1381
        %v1446 = vpack.c.b16 %v1398, %v1382
        %v1447 = vpack.c.b16 %v1399, %v1383
        %v1448 = vpack.c.b16 %v1400, %v1384
        %v1449 = vpack.c.b16 %v1401, %v1385
        %v1450 = vpack.c.b16 %v1402, %v1386
        %v1451 = vpack.c.b16 %v1403, %v1387
        %v1452 = vpack.c.b16 %v1404, %v1388
        %v1453 = vpack.c.b16 %v1405, %v1389
        %v1454 = vpack.c.b16 %v1406, %v1390
        %v1455 = vpack.c.b16 %v1407, %v1391
        %v1456 = vpack.c.b16 %v1408, %v1392
        %v1457 = vpack.c.b16 %v1409, %v1393
        %v1458 = vpack.c.b16 %v1410, %v1394
        %v1459 = vpack.c.b16 %v1411, %v1395
        %v1460 = vpack.c.b16 %v1428, %v1412
        %v1461 = vpack.c.b16 %v1429, %v1413
        %v1462 = vpack.c.b16 %v1430, %v1414
        %v1463 = vpack.c.b16 %v1431, %v1415
        %v1464 = vpack.c.b16 %v1432, %v1416
        %v1465 = vpack.c.b16 %v1433, %v1417
        %v1466 = vpack.c.b16 %v1434, %v1418
        %v1467 = vpack.c.b16 %v1435, %v1419
        %v1468 = vpack.c.b16 %v1436, %v1420
        %v1469 = vpack.c.b16 %v1437, %v1421
        %v1470 = vpack.c.b16 %v1438, %v1422
        %v1471 = vpack.c.b16 %v1439, %v1423
        %v1472 = vpack.c.b16 %v1440, %v1424
        %v1473 = vpack.c.b16 %v1441, %v1425
        %v1474 = vpack.c.b16 %v1442, %v1426
        %v1475 = vpack.c.b16 %v1443, %v1427
        %v1509 = vsel %vm853, %v1279, 0
        %1511 = vmatpush.bf16.msra.mxu0 0
        %1512 = vmatpush.bf16.msra.mxu0 0
        %1513 = vmatpush.bf16.msra.mxu0 0
        %1514 = vmatpush.bf16.msra.mxu0 0
        %1515 = vmatpush.bf16.msra.mxu0 0
        %1516 = vmatpush.bf16.msra.mxu0 0
        %1517 = vmatpush.bf16.msra.mxu0 %v1460
        %1518 = vmatpush.bf16.msra.mxu0 %v1444
        %1519 = vmatmul.bf16.gmra.mxu0 %v1509
        %v1520 = vpop.f32.mrf.mxu0
        %v1521 = vadd.f32 %v1316, %v1520
        %v1522 = vpop.f32.mrf.mxu0
        %v1523 = vadd.f32 %v1316, %v1522
        %1524 = vdwg.mxu0
        %1525 = vmatpush.bf16.msra.mxu0 0
        %1526 = vmatpush.bf16.msra.mxu0 0
        %1527 = vmatpush.bf16.msra.mxu0 0
        %1528 = vmatpush.bf16.msra.mxu0 0
        %1529 = vmatpush.bf16.msra.mxu0 0
        %1530 = vmatpush.bf16.msra.mxu0 0
        %1531 = vmatpush.bf16.msra.mxu0 %v1461
        %1532 = vmatpush.bf16.msra.mxu0 %v1445
        %1533 = vmatmul.bf16.gmra.mxu0 %v1509
        %v1534 = vpop.f32.mrf.mxu0
        %v1535 = vadd.f32 %v1317, %v1534
        %v1536 = vpop.f32.mrf.mxu0
        %v1537 = vadd.f32 %v1317, %v1536
        %1538 = vdwg.mxu0
        %1539 = vmatpush.bf16.msra.mxu0 0
        %1540 = vmatpush.bf16.msra.mxu0 0
        %1541 = vmatpush.bf16.msra.mxu0 0
        %1542 = vmatpush.bf16.msra.mxu0 0
        %1543 = vmatpush.bf16.msra.mxu0 0
        %1544 = vmatpush.bf16.msra.mxu0 0
        %1545 = vmatpush.bf16.msra.mxu0 %v1462
        %1546 = vmatpush.bf16.msra.mxu0 %v1446
        %1547 = vmatmul.bf16.gmra.mxu0 %v1509
        %v1548 = vpop.f32.mrf.mxu0
        %v1549 = vadd.f32 %v1318, %v1548
        %v1550 = vpop.f32.mrf.mxu0
        %v1551 = vadd.f32 %v1318, %v1550
        %1552 = vdwg.mxu0
        %1553 = vmatpush.bf16.msra.mxu0 0
        %1554 = vmatpush.bf16.msra.mxu0 0
        %1555 = vmatpush.bf16.msra.mxu0 0
        %1556 = vmatpush.bf16.msra.mxu0 0
        %1557 = vmatpush.bf16.msra.mxu0 0
        %1558 = vmatpush.bf16.msra.mxu0 0
        %1559 = vmatpush.bf16.msra.mxu0 %v1463
        %1560 = vmatpush.bf16.msra.mxu0 %v1447
        %1561 = vmatmul.bf16.gmra.mxu0 %v1509
        %v1562 = vpop.f32.mrf.mxu0
        %v1563 = vadd.f32 %v1319, %v1562
        %v1564 = vpop.f32.mrf.mxu0
        %v1565 = vadd.f32 %v1319, %v1564
        %1566 = vdwg.mxu0
        %1567 = vmatpush.bf16.msra.mxu0 0
        %1568 = vmatpush.bf16.msra.mxu0 0
        %1569 = vmatpush.bf16.msra.mxu0 0
        %1570 = vmatpush.bf16.msra.mxu0 0
        %1571 = vmatpush.bf16.msra.mxu0 0
        %1572 = vmatpush.bf16.msra.mxu0 0
        %1573 = vmatpush.bf16.msra.mxu0 %v1464
        %1574 = vmatpush.bf16.msra.mxu0 %v1448
        %1575 = vmatmul.bf16.gmra.mxu0 %v1509
        %v1576 = vpop.f32.mrf.mxu0
        %v1577 = vadd.f32 %v1320, %v1576
        %v1578 = vpop.f32.mrf.mxu0
        %v1579 = vadd.f32 %v1320, %v1578
        %1580 = vdwg.mxu0
        %1581 = vmatpush.bf16.msra.mxu0 0
        %1582 = vmatpush.bf16.msra.mxu0 0
        %1583 = vmatpush.bf16.msra.mxu0 0
        %1584 = vmatpush.bf16.msra.mxu0 0
        %1585 = vmatpush.bf16.msra.mxu0 0
        %1586 = vmatpush.bf16.msra.mxu0 0
        %1587 = vmatpush.bf16.msra.mxu0 %v1465
        %1588 = vmatpush.bf16.msra.mxu0 %v1449
        %1589 = vmatmul.bf16.gmra.mxu0 %v1509
        %v1590 = vpop.f32.mrf.mxu0
        %v1591 = vadd.f32 %v1321, %v1590
        %v1592 = vpop.f32.mrf.mxu0
        %v1593 = vadd.f32 %v1321, %v1592
        %1594 = vdwg.mxu0
        %1595 = vmatpush.bf16.msra.mxu0 0
        %1596 = vmatpush.bf16.msra.mxu0 0
        %1597 = vmatpush.bf16.msra.mxu0 0
        %1598 = vmatpush.bf16.msra.mxu0 0
        %1599 = vmatpush.bf16.msra.mxu0 0
        %1600 = vmatpush.bf16.msra.mxu0 0
        %1601 = vmatpush.bf16.msra.mxu0 %v1466
        %1602 = vmatpush.bf16.msra.mxu0 %v1450
        %1603 = vmatmul.bf16.gmra.mxu0 %v1509
        %v1604 = vpop.f32.mrf.mxu0
        %v1605 = vadd.f32 %v1322, %v1604
        %v1606 = vpop.f32.mrf.mxu0
        %v1607 = vadd.f32 %v1322, %v1606
        %1608 = vdwg.mxu0
        %1609 = vmatpush.bf16.msra.mxu0 0
        %1610 = vmatpush.bf16.msra.mxu0 0
        %1611 = vmatpush.bf16.msra.mxu0 0
        %1612 = vmatpush.bf16.msra.mxu0 0
        %1613 = vmatpush.bf16.msra.mxu0 0
        %1614 = vmatpush.bf16.msra.mxu0 0
        %1615 = vmatpush.bf16.msra.mxu0 %v1467
        %1616 = vmatpush.bf16.msra.mxu0 %v1451
        %1617 = vmatmul.bf16.gmra.mxu0 %v1509
        %v1618 = vpop.f32.mrf.mxu0
        %v1619 = vadd.f32 %v1323, %v1618
        %v1620 = vpop.f32.mrf.mxu0
        %v1621 = vadd.f32 %v1323, %v1620
        %1622 = vdwg.mxu0
        %1623 = vmatpush.bf16.msra.mxu0 0
        %1624 = vmatpush.bf16.msra.mxu0 0
        %1625 = vmatpush.bf16.msra.mxu0 0
        %1626 = vmatpush.bf16.msra.mxu0 0
        %1627 = vmatpush.bf16.msra.mxu0 0
        %1628 = vmatpush.bf16.msra.mxu0 0
        %1629 = vmatpush.bf16.msra.mxu0 %v1468
        %1630 = vmatpush.bf16.msra.mxu0 %v1452
        %1631 = vmatmul.bf16.gmra.mxu0 %v1509
        %v1632 = vpop.f32.mrf.mxu0
        %v1633 = vadd.f32 %v1324, %v1632
        %v1634 = vpop.f32.mrf.mxu0
        %v1635 = vadd.f32 %v1324, %v1634
        %1636 = vdwg.mxu0
        %1637 = vmatpush.bf16.msra.mxu0 0
        %1638 = vmatpush.bf16.msra.mxu0 0
        %1639 = vmatpush.bf16.msra.mxu0 0
        %1640 = vmatpush.bf16.msra.mxu0 0
        %1641 = vmatpush.bf16.msra.mxu0 0
        %1642 = vmatpush.bf16.msra.mxu0 0
        %1643 = vmatpush.bf16.msra.mxu0 %v1469
        %1644 = vmatpush.bf16.msra.mxu0 %v1453
        %1645 = vmatmul.bf16.gmra.mxu0 %v1509
        %v1646 = vpop.f32.mrf.mxu0
        %v1647 = vadd.f32 %v1325, %v1646
        %v1648 = vpop.f32.mrf.mxu0
        %v1649 = vadd.f32 %v1325, %v1648
        %1650 = vdwg.mxu0
        %1651 = vmatpush.bf16.msra.mxu0 0
        %1652 = vmatpush.bf16.msra.mxu0 0
        %1653 = vmatpush.bf16.msra.mxu0 0
        %1654 = vmatpush.bf16.msra.mxu0 0
        %1655 = vmatpush.bf16.msra.mxu0 0
        %1656 = vmatpush.bf16.msra.mxu0 0
        %1657 = vmatpush.bf16.msra.mxu0 %v1470
        %1658 = vmatpush.bf16.msra.mxu0 %v1454
        %1659 = vmatmul.bf16.gmra.mxu0 %v1509
        %v1660 = vpop.f32.mrf.mxu0
        %v1661 = vadd.f32 %v1326, %v1660
        %v1662 = vpop.f32.mrf.mxu0
        %v1663 = vadd.f32 %v1326, %v1662
        %1664 = vdwg.mxu0
        %1665 = vmatpush.bf16.msra.mxu0 0
        %1666 = vmatpush.bf16.msra.mxu0 0
        %1667 = vmatpush.bf16.msra.mxu0 0
        %1668 = vmatpush.bf16.msra.mxu0 0
        %1669 = vmatpush.bf16.msra.mxu0 0
        %1670 = vmatpush.bf16.msra.mxu0 0
        %1671 = vmatpush.bf16.msra.mxu0 %v1471
        %1672 = vmatpush.bf16.msra.mxu0 %v1455
        %1673 = vmatmul.bf16.gmra.mxu0 %v1509
        %v1674 = vpop.f32.mrf.mxu0
        %v1675 = vadd.f32 %v1327, %v1674
        %v1676 = vpop.f32.mrf.mxu0
        %v1677 = vadd.f32 %v1327, %v1676
        %1678 = vdwg.mxu0
        %1679 = vmatpush.bf16.msra.mxu0 0
        %1680 = vmatpush.bf16.msra.mxu0 0
        %1681 = vmatpush.bf16.msra.mxu0 0
        %1682 = vmatpush.bf16.msra.mxu0 0
        %1683 = vmatpush.bf16.msra.mxu0 0
        %1684 = vmatpush.bf16.msra.mxu0 0
        %1685 = vmatpush.bf16.msra.mxu0 %v1472
        %1686 = vmatpush.bf16.msra.mxu0 %v1456
        %1687 = vmatmul.bf16.gmra.mxu0 %v1509
        %v1688 = vpop.f32.mrf.mxu0
        %v1689 = vadd.f32 %v1328, %v1688
        %v1690 = vpop.f32.mrf.mxu0
        %v1691 = vadd.f32 %v1328, %v1690
        %1692 = vdwg.mxu0
        %1693 = vmatpush.bf16.msra.mxu0 0
        %1694 = vmatpush.bf16.msra.mxu0 0
        %1695 = vmatpush.bf16.msra.mxu0 0
        %1696 = vmatpush.bf16.msra.mxu0 0
        %1697 = vmatpush.bf16.msra.mxu0 0
        %1698 = vmatpush.bf16.msra.mxu0 0
        %1699 = vmatpush.bf16.msra.mxu0 %v1473
        %1700 = vmatpush.bf16.msra.mxu0 %v1457
        %1701 = vmatmul.bf16.gmra.mxu0 %v1509
        %v1702 = vpop.f32.mrf.mxu0
        %v1703 = vadd.f32 %v1329, %v1702
        %v1704 = vpop.f32.mrf.mxu0
        %v1705 = vadd.f32 %v1329, %v1704
        %1706 = vdwg.mxu0
        %1707 = vmatpush.bf16.msra.mxu0 0
        %1708 = vmatpush.bf16.msra.mxu0 0
        %1709 = vmatpush.bf16.msra.mxu0 0
        %1710 = vmatpush.bf16.msra.mxu0 0
        %1711 = vmatpush.bf16.msra.mxu0 0
        %1712 = vmatpush.bf16.msra.mxu0 0
        %1713 = vmatpush.bf16.msra.mxu0 %v1474
        %1714 = vmatpush.bf16.msra.mxu0 %v1458
        %1715 = vmatmul.bf16.gmra.mxu0 %v1509
        %v1716 = vpop.f32.mrf.mxu0
        %v1717 = vadd.f32 %v1330, %v1716
        %v1718 = vpop.f32.mrf.mxu0
        %v1719 = vadd.f32 %v1330, %v1718
        %1720 = vdwg.mxu0
        %1721 = vmatpush.bf16.msra.mxu0 0
        %1722 = vmatpush.bf16.msra.mxu0 0
        %1723 = vmatpush.bf16.msra.mxu0 0
        %1724 = vmatpush.bf16.msra.mxu0 0
        %1725 = vmatpush.bf16.msra.mxu0 0
        %1726 = vmatpush.bf16.msra.mxu0 0
        %1727 = vmatpush.bf16.msra.mxu0 %v1475
        %1728 = vmatpush.bf16.msra.mxu0 %v1459
        %1729 = vmatmul.bf16.gmra.mxu0 %v1509
        %v1730 = vpop.f32.mrf.mxu0
        %v1731 = vadd.f32 %v1331, %v1730
        %v1732 = vpop.f32.mrf.mxu0
        %v1733 = vadd.f32 %v1331, %v1732
        %1734 = vdwg.mxu0
        %v1735 = vmax.f32 %v1521, 0.0
        %v1736 = vmax.f32 %v1535, 0.0
        %v1737 = vmax.f32 %v1549, 0.0
        %v1738 = vmax.f32 %v1563, 0.0
        %v1739 = vmax.f32 %v1577, 0.0
        %v1740 = vmax.f32 %v1591, 0.0
        %v1741 = vmax.f32 %v1605, 0.0
        %v1742 = vmax.f32 %v1619, 0.0
        %v1743 = vmax.f32 %v1633, 0.0
        %v1744 = vmax.f32 %v1647, 0.0
        %v1745 = vmax.f32 %v1661, 0.0
        %v1746 = vmax.f32 %v1675, 0.0
        %v1747 = vmax.f32 %v1689, 0.0
        %v1748 = vmax.f32 %v1703, 0.0
        %v1749 = vmax.f32 %v1717, 0.0
        %v1750 = vmax.f32 %v1731, 0.0
        %v1751 = vmax.f32 %v1523, 0.0
        %v1752 = vmax.f32 %v1537, 0.0
        %v1753 = vmax.f32 %v1551, 0.0
        %v1754 = vmax.f32 %v1565, 0.0
        %v1755 = vmax.f32 %v1579, 0.0
        %v1756 = vmax.f32 %v1593, 0.0
        %v1757 = vmax.f32 %v1607, 0.0
        %v1758 = vmax.f32 %v1621, 0.0
        %v1759 = vmax.f32 %v1635, 0.0
        %v1760 = vmax.f32 %v1649, 0.0
        %v1761 = vmax.f32 %v1663, 0.0
        %v1762 = vmax.f32 %v1677, 0.0
        %v1763 = vmax.f32 %v1691, 0.0
        %v1764 = vmax.f32 %v1705, 0.0
        %v1765 = vmax.f32 %v1719, 0.0
        %v1766 = vmax.f32 %v1733, 0.0
        %v1767 = vpack.c.bf16 %v1751, %v1735
        %v1768 = vpack.c.bf16 %v1752, %v1736
        %v1769 = vpack.c.bf16 %v1753, %v1737
        %v1770 = vpack.c.bf16 %v1754, %v1738
        %v1771 = vpack.c.bf16 %v1755, %v1739
        %v1772 = vpack.c.bf16 %v1756, %v1740
        %v1773 = vpack.c.bf16 %v1757, %v1741
        %v1774 = vpack.c.bf16 %v1758, %v1742
        %v1775 = vpack.c.bf16 %v1759, %v1743
        %v1776 = vpack.c.bf16 %v1760, %v1744
        %v1777 = vpack.c.bf16 %v1761, %v1745
        %v1778 = vpack.c.bf16 %v1762, %v1746
        %v1779 = vpack.c.bf16 %v1763, %v1747
        %v1780 = vpack.c.bf16 %v1764, %v1748
        %v1781 = vpack.c.bf16 %v1765, %v1749
        %v1782 = vpack.c.bf16 %v1766, %v1750
        %v1783 = vld [vmem:[%s771] sm:$0xf]
        %v1784 = vld [vmem:[%s771 + $0x4] sm:$0xf]
        %v1785 = vld [vmem:[%s771 + $0x8] sm:$0xf]
        %v1786 = vld [vmem:[%s771 + $0xc] sm:$0xf]
        %v1787 = vld [vmem:[%s771 + $0x10] sm:$0xf]
        %v1788 = vld [vmem:[%s771 + $0x14] sm:$0xf]
        %v1789 = vld [vmem:[%s771 + $0x18] sm:$0xf]
        %v1790 = vld [vmem:[%s771 + $0x1c] sm:$0xf]
        %v1791 = vld [vmem:[%s771 + $0x20] sm:$0xf]
        %v1792 = vld [vmem:[%s771 + $0x24] sm:$0xf]
        %v1793 = vld [vmem:[%s771 + $0x28] sm:$0xf]
        %v1794 = vld [vmem:[%s771 + $0x2c] sm:$0xf]
        %v1795 = vld [vmem:[%s771 + $0x30] sm:$0xf]
        %v1796 = vld [vmem:[%s771 + $0x34] sm:$0xf]
        %v1797 = vld [vmem:[%s771 + $0x38] sm:$0xf]
        %v1798 = vld [vmem:[%s771 + $0x3c] sm:$0xf]
        %v1799 = vld [vmem:[%s771 + $0x40] sm:$0xf]
        %v1800 = vld [vmem:[%s771 + $0x44] sm:$0xf]
        %v1801 = vld [vmem:[%s771 + $0x48] sm:$0xf]
        %v1802 = vld [vmem:[%s771 + $0x4c] sm:$0xf]
        %v1803 = vld [vmem:[%s771 + $0x50] sm:$0xf]
        %v1804 = vld [vmem:[%s771 + $0x54] sm:$0xf]
        %v1805 = vld [vmem:[%s771 + $0x58] sm:$0xf]
        %v1806 = vld [vmem:[%s771 + $0x5c] sm:$0xf]
        %v1807 = vld [vmem:[%s771 + $0x60] sm:$0xf]
        %v1808 = vld [vmem:[%s771 + $0x64] sm:$0xf]
        %v1809 = vld [vmem:[%s771 + $0x68] sm:$0xf]
        %v1810 = vld [vmem:[%s771 + $0x6c] sm:$0xf]
        %v1811 = vld [vmem:[%s771 + $0x70] sm:$0xf]
        %v1812 = vld [vmem:[%s771 + $0x74] sm:$0xf]
        %v1813 = vld [vmem:[%s771 + $0x78] sm:$0xf]
        %v1814 = vld [vmem:[%s771 + $0x7c] sm:$0xf]
        %v1815 = vld [vmem:[%s771 + $0x80] sm:$0xf]
        %v1816 = vld [vmem:[%s771 + $0x84] sm:$0xf]
        %v1817 = vld [vmem:[%s771 + $0x88] sm:$0xf]
        %v1818 = vld [vmem:[%s771 + $0x8c] sm:$0xf]
        %v1819 = vld [vmem:[%s771 + $0x90] sm:$0xf]
        %v1820 = vld [vmem:[%s771 + $0x94] sm:$0xf]
        %v1821 = vld [vmem:[%s771 + $0x98] sm:$0xf]
        %v1822 = vld [vmem:[%s771 + $0x9c] sm:$0xf]
        %v1823 = vld [vmem:[%s771 + $0xa0] sm:$0xf]
        %v1824 = vld [vmem:[%s771 + $0xa4] sm:$0xf]
        %v1825 = vld [vmem:[%s771 + $0xa8] sm:$0xf]
        %v1826 = vld [vmem:[%s771 + $0xac] sm:$0xf]
        %v1827 = vld [vmem:[%s771 + $0xb0] sm:$0xf]
        %v1828 = vld [vmem:[%s771 + $0xb4] sm:$0xf]
        %v1829 = vld [vmem:[%s771 + $0xb8] sm:$0xf]
        %v1830 = vld [vmem:[%s771 + $0xbc] sm:$0xf]
        %v1831 = vld [vmem:[%s771 + $0xc0] sm:$0xf]
        %v1832 = vld [vmem:[%s771 + $0xc4] sm:$0xf]
        %v1833 = vld [vmem:[%s771 + $0xc8] sm:$0xf]
        %v1834 = vld [vmem:[%s771 + $0xcc] sm:$0xf]
        %v1835 = vld [vmem:[%s771 + $0xd0] sm:$0xf]
        %v1836 = vld [vmem:[%s771 + $0xd4] sm:$0xf]
        %v1837 = vld [vmem:[%s771 + $0xd8] sm:$0xf]
        %v1838 = vld [vmem:[%s771 + $0xdc] sm:$0xf]
        %v1839 = vld [vmem:[%s771 + $0xe0] sm:$0xf]
        %v1840 = vld [vmem:[%s771 + $0xe4] sm:$0xf]
        %v1841 = vld [vmem:[%s771 + $0xe8] sm:$0xf]
        %v1842 = vld [vmem:[%s771 + $0xec] sm:$0xf]
        %v1843 = vld [vmem:[%s771 + $0xf0] sm:$0xf]
        %v1844 = vld [vmem:[%s771 + $0xf4] sm:$0xf]
        %v1845 = vld [vmem:[%s771 + $0xf8] sm:$0xf]
        %v1846 = vld [vmem:[%s771 + $0xfc] sm:$0xf]
        %v1847 = vld [vmem:[%s771 + $0x100] sm:$0xf]
        %v1848 = vld [vmem:[%s771 + $0x104] sm:$0xf]
        %v1849 = vld [vmem:[%s771 + $0x108] sm:$0xf]
        %v1850 = vld [vmem:[%s771 + $0x10c] sm:$0xf]
        %v1851 = vld [vmem:[%s771 + $0x110] sm:$0xf]
        %v1852 = vld [vmem:[%s771 + $0x114] sm:$0xf]
        %v1853 = vld [vmem:[%s771 + $0x118] sm:$0xf]
        %v1854 = vld [vmem:[%s771 + $0x11c] sm:$0xf]
        %v1855 = vld [vmem:[%s771 + $0x120] sm:$0xf]
        %v1856 = vld [vmem:[%s771 + $0x124] sm:$0xf]
        %v1857 = vld [vmem:[%s771 + $0x128] sm:$0xf]
        %v1858 = vld [vmem:[%s771 + $0x12c] sm:$0xf]
        %v1859 = vld [vmem:[%s771 + $0x130] sm:$0xf]
        %v1860 = vld [vmem:[%s771 + $0x134] sm:$0xf]
        %v1861 = vld [vmem:[%s771 + $0x138] sm:$0xf]
        %v1862 = vld [vmem:[%s771 + $0x13c] sm:$0xf]
        %v1863 = vld [vmem:[%s771 + $0x140] sm:$0xf]
        %v1864 = vld [vmem:[%s771 + $0x144] sm:$0xf]
        %v1865 = vld [vmem:[%s771 + $0x148] sm:$0xf]
        %v1866 = vld [vmem:[%s771 + $0x14c] sm:$0xf]
        %v1867 = vld [vmem:[%s771 + $0x150] sm:$0xf]
        %v1868 = vld [vmem:[%s771 + $0x154] sm:$0xf]
        %v1869 = vld [vmem:[%s771 + $0x158] sm:$0xf]
        %v1870 = vld [vmem:[%s771 + $0x15c] sm:$0xf]
        %v1871 = vld [vmem:[%s771 + $0x160] sm:$0xf]
        %v1872 = vld [vmem:[%s771 + $0x164] sm:$0xf]
        %v1873 = vld [vmem:[%s771 + $0x168] sm:$0xf]
        %v1874 = vld [vmem:[%s771 + $0x16c] sm:$0xf]
        %v1875 = vld [vmem:[%s771 + $0x170] sm:$0xf]
        %v1876 = vld [vmem:[%s771 + $0x174] sm:$0xf]
        %v1877 = vld [vmem:[%s771 + $0x178] sm:$0xf]
        %v1878 = vld [vmem:[%s771 + $0x17c] sm:$0xf]
        %v1879 = vld [vmem:[%s771 + $0x180] sm:$0xf]
        %v1880 = vld [vmem:[%s771 + $0x184] sm:$0xf]
        %v1881 = vld [vmem:[%s771 + $0x188] sm:$0xf]
        %v1882 = vld [vmem:[%s771 + $0x18c] sm:$0xf]
        %v1883 = vld [vmem:[%s771 + $0x190] sm:$0xf]
        %v1884 = vld [vmem:[%s771 + $0x194] sm:$0xf]
        %v1885 = vld [vmem:[%s771 + $0x198] sm:$0xf]
        %v1886 = vld [vmem:[%s771 + $0x19c] sm:$0xf]
        %v1887 = vld [vmem:[%s771 + $0x1a0] sm:$0xf]
        %v1888 = vld [vmem:[%s771 + $0x1a4] sm:$0xf]
        %v1889 = vld [vmem:[%s771 + $0x1a8] sm:$0xf]
        %v1890 = vld [vmem:[%s771 + $0x1ac] sm:$0xf]
        %v1891 = vld [vmem:[%s771 + $0x1b0] sm:$0xf]
        %v1892 = vld [vmem:[%s771 + $0x1b4] sm:$0xf]
        %v1893 = vld [vmem:[%s771 + $0x1b8] sm:$0xf]
        %v1894 = vld [vmem:[%s771 + $0x1bc] sm:$0xf]
        %v1895 = vld [vmem:[%s771 + $0x1c0] sm:$0xf]
        %v1896 = vld [vmem:[%s771 + $0x1c4] sm:$0xf]
        %v1897 = vld [vmem:[%s771 + $0x1c8] sm:$0xf]
        %v1898 = vld [vmem:[%s771 + $0x1cc] sm:$0xf]
        %v1899 = vld [vmem:[%s771 + $0x1d0] sm:$0xf]
        %v1900 = vld [vmem:[%s771 + $0x1d4] sm:$0xf]
        %v1901 = vld [vmem:[%s771 + $0x1d8] sm:$0xf]
        %v1902 = vld [vmem:[%s771 + $0x1dc] sm:$0xf]
        %v1903 = vld [vmem:[%s771 + $0x1e0] sm:$0xf]
        %v1904 = vld [vmem:[%s771 + $0x1e4] sm:$0xf]
        %v1905 = vld [vmem:[%s771 + $0x1e8] sm:$0xf]
        %v1906 = vld [vmem:[%s771 + $0x1ec] sm:$0xf]
        %v1907 = vld [vmem:[%s771 + $0x1f0] sm:$0xf]
        %v1908 = vld [vmem:[%s771 + $0x1f4] sm:$0xf]
        %v1909 = vld [vmem:[%s771 + $0x1f8] sm:$0xf]
        %v1910 = vld [vmem:[%s771 + $0x1fc] sm:$0xf]
        %v1911 = vld [vmem:[%s771 + $0x200] sm:$0xf]
        %v1912 = vld [vmem:[%s771 + $0x204] sm:$0xf]
        %v1913 = vld [vmem:[%s771 + $0x208] sm:$0xf]
        %v1914 = vld [vmem:[%s771 + $0x20c] sm:$0xf]
        %v1915 = vld [vmem:[%s771 + $0x210] sm:$0xf]
        %v1916 = vld [vmem:[%s771 + $0x214] sm:$0xf]
        %v1917 = vld [vmem:[%s771 + $0x218] sm:$0xf]
        %v1918 = vld [vmem:[%s771 + $0x21c] sm:$0xf]
        %v1919 = vld [vmem:[%s771 + $0x220] sm:$0xf]
        %v1920 = vld [vmem:[%s771 + $0x224] sm:$0xf]
        %v1921 = vld [vmem:[%s771 + $0x228] sm:$0xf]
        %v1922 = vld [vmem:[%s771 + $0x22c] sm:$0xf]
        %v1923 = vld [vmem:[%s771 + $0x230] sm:$0xf]
        %v1924 = vld [vmem:[%s771 + $0x234] sm:$0xf]
        %v1925 = vld [vmem:[%s771 + $0x238] sm:$0xf]
        %v1926 = vld [vmem:[%s771 + $0x23c] sm:$0xf]
        %v1927 = vld [vmem:[%s771 + $0x240] sm:$0xf]
        %v1928 = vld [vmem:[%s771 + $0x244] sm:$0xf]
        %v1929 = vld [vmem:[%s771 + $0x248] sm:$0xf]
        %v1930 = vld [vmem:[%s771 + $0x24c] sm:$0xf]
        %v1931 = vld [vmem:[%s771 + $0x250] sm:$0xf]
        %v1932 = vld [vmem:[%s771 + $0x254] sm:$0xf]
        %v1933 = vld [vmem:[%s771 + $0x258] sm:$0xf]
        %v1934 = vld [vmem:[%s771 + $0x25c] sm:$0xf]
        %v1935 = vld [vmem:[%s771 + $0x260] sm:$0xf]
        %v1936 = vld [vmem:[%s771 + $0x264] sm:$0xf]
        %v1937 = vld [vmem:[%s771 + $0x268] sm:$0xf]
        %v1938 = vld [vmem:[%s771 + $0x26c] sm:$0xf]
        %v1939 = vld [vmem:[%s771 + $0x270] sm:$0xf]
        %v1940 = vld [vmem:[%s771 + $0x274] sm:$0xf]
        %v1941 = vld [vmem:[%s771 + $0x278] sm:$0xf]
        %v1942 = vld [vmem:[%s771 + $0x27c] sm:$0xf]
        %v1943 = vld [vmem:[%s771 + $0x280] sm:$0xf]
        %v1944 = vld [vmem:[%s771 + $0x284] sm:$0xf]
        %v1945 = vld [vmem:[%s771 + $0x288] sm:$0xf]
        %v1946 = vld [vmem:[%s771 + $0x28c] sm:$0xf]
        %v1947 = vld [vmem:[%s771 + $0x290] sm:$0xf]
        %v1948 = vld [vmem:[%s771 + $0x294] sm:$0xf]
        %v1949 = vld [vmem:[%s771 + $0x298] sm:$0xf]
        %v1950 = vld [vmem:[%s771 + $0x29c] sm:$0xf]
        %v1951 = vld [vmem:[%s771 + $0x2a0] sm:$0xf]
        %v1952 = vld [vmem:[%s771 + $0x2a4] sm:$0xf]
        %v1953 = vld [vmem:[%s771 + $0x2a8] sm:$0xf]
        %v1954 = vld [vmem:[%s771 + $0x2ac] sm:$0xf]
        %v1955 = vld [vmem:[%s771 + $0x2b0] sm:$0xf]
        %v1956 = vld [vmem:[%s771 + $0x2b4] sm:$0xf]
        %v1957 = vld [vmem:[%s771 + $0x2b8] sm:$0xf]
        %v1958 = vld [vmem:[%s771 + $0x2bc] sm:$0xf]
        %v1959 = vld [vmem:[%s771 + $0x2c0] sm:$0xf]
        %v1960 = vld [vmem:[%s771 + $0x2c4] sm:$0xf]
        %v1961 = vld [vmem:[%s771 + $0x2c8] sm:$0xf]
        %v1962 = vld [vmem:[%s771 + $0x2cc] sm:$0xf]
        %v1963 = vld [vmem:[%s771 + $0x2d0] sm:$0xf]
        %v1964 = vld [vmem:[%s771 + $0x2d4] sm:$0xf]
        %v1965 = vld [vmem:[%s771 + $0x2d8] sm:$0xf]
        %v1966 = vld [vmem:[%s771 + $0x2dc] sm:$0xf]
        %v1967 = vld [vmem:[%s771 + $0x2e0] sm:$0xf]
        %v1968 = vld [vmem:[%s771 + $0x2e4] sm:$0xf]
        %v1969 = vld [vmem:[%s771 + $0x2e8] sm:$0xf]
        %v1970 = vld [vmem:[%s771 + $0x2ec] sm:$0xf]
        %v1971 = vld [vmem:[%s771 + $0x2f0] sm:$0xf]
        %v1972 = vld [vmem:[%s771 + $0x2f4] sm:$0xf]
        %v1973 = vld [vmem:[%s771 + $0x2f8] sm:$0xf]
        %v1974 = vld [vmem:[%s771 + $0x2fc] sm:$0xf]
        %v1975 = vld [vmem:[%s771 + $0x300] sm:$0xf]
        %v1976 = vld [vmem:[%s771 + $0x304] sm:$0xf]
        %v1977 = vld [vmem:[%s771 + $0x308] sm:$0xf]
        %v1978 = vld [vmem:[%s771 + $0x30c] sm:$0xf]
        %v1979 = vld [vmem:[%s771 + $0x310] sm:$0xf]
        %v1980 = vld [vmem:[%s771 + $0x314] sm:$0xf]
        %v1981 = vld [vmem:[%s771 + $0x318] sm:$0xf]
        %v1982 = vld [vmem:[%s771 + $0x31c] sm:$0xf]
        %v1983 = vld [vmem:[%s771 + $0x320] sm:$0xf]
        %v1984 = vld [vmem:[%s771 + $0x324] sm:$0xf]
        %v1985 = vld [vmem:[%s771 + $0x328] sm:$0xf]
        %v1986 = vld [vmem:[%s771 + $0x32c] sm:$0xf]
        %v1987 = vld [vmem:[%s771 + $0x330] sm:$0xf]
        %v1988 = vld [vmem:[%s771 + $0x334] sm:$0xf]
        %v1989 = vld [vmem:[%s771 + $0x338] sm:$0xf]
        %v1990 = vld [vmem:[%s771 + $0x33c] sm:$0xf]
        %v1991 = vld [vmem:[%s771 + $0x340] sm:$0xf]
        %v1992 = vld [vmem:[%s771 + $0x344] sm:$0xf]
        %v1993 = vld [vmem:[%s771 + $0x348] sm:$0xf]
        %v1994 = vld [vmem:[%s771 + $0x34c] sm:$0xf]
        %v1995 = vld [vmem:[%s771 + $0x350] sm:$0xf]
        %v1996 = vld [vmem:[%s771 + $0x354] sm:$0xf]
        %v1997 = vld [vmem:[%s771 + $0x358] sm:$0xf]
        %v1998 = vld [vmem:[%s771 + $0x35c] sm:$0xf]
        %v1999 = vld [vmem:[%s771 + $0x360] sm:$0xf]
        %v2000 = vld [vmem:[%s771 + $0x364] sm:$0xf]
        %v2001 = vld [vmem:[%s771 + $0x368] sm:$0xf]
        %v2002 = vld [vmem:[%s771 + $0x36c] sm:$0xf]
        %v2003 = vld [vmem:[%s771 + $0x370] sm:$0xf]
        %v2004 = vld [vmem:[%s771 + $0x374] sm:$0xf]
        %v2005 = vld [vmem:[%s771 + $0x378] sm:$0xf]
        %v2006 = vld [vmem:[%s771 + $0x37c] sm:$0xf]
        %v2007 = vld [vmem:[%s771 + $0x380] sm:$0xf]
        %v2008 = vld [vmem:[%s771 + $0x384] sm:$0xf]
        %v2009 = vld [vmem:[%s771 + $0x388] sm:$0xf]
        %v2010 = vld [vmem:[%s771 + $0x38c] sm:$0xf]
        %v2011 = vld [vmem:[%s771 + $0x390] sm:$0xf]
        %v2012 = vld [vmem:[%s771 + $0x394] sm:$0xf]
        %v2013 = vld [vmem:[%s771 + $0x398] sm:$0xf]
        %v2014 = vld [vmem:[%s771 + $0x39c] sm:$0xf]
        %v2015 = vld [vmem:[%s771 + $0x3a0] sm:$0xf]
        %v2016 = vld [vmem:[%s771 + $0x3a4] sm:$0xf]
        %v2017 = vld [vmem:[%s771 + $0x3a8] sm:$0xf]
        %v2018 = vld [vmem:[%s771 + $0x3ac] sm:$0xf]
        %v2019 = vld [vmem:[%s771 + $0x3b0] sm:$0xf]
        %v2020 = vld [vmem:[%s771 + $0x3b4] sm:$0xf]
        %v2021 = vld [vmem:[%s771 + $0x3b8] sm:$0xf]
        %v2022 = vld [vmem:[%s771 + $0x3bc] sm:$0xf]
        %v2023 = vld [vmem:[%s771 + $0x3c0] sm:$0xf]
        %v2024 = vld [vmem:[%s771 + $0x3c4] sm:$0xf]
        %v2025 = vld [vmem:[%s771 + $0x3c8] sm:$0xf]
        %v2026 = vld [vmem:[%s771 + $0x3cc] sm:$0xf]
        %v2027 = vld [vmem:[%s771 + $0x3d0] sm:$0xf]
        %v2028 = vld [vmem:[%s771 + $0x3d4] sm:$0xf]
        %v2029 = vld [vmem:[%s771 + $0x3d8] sm:$0xf]
        %v2030 = vld [vmem:[%s771 + $0x3dc] sm:$0xf]
        %v2031 = vld [vmem:[%s771 + $0x3e0] sm:$0xf]
        %v2032 = vld [vmem:[%s771 + $0x3e4] sm:$0xf]
        %v2033 = vld [vmem:[%s771 + $0x3e8] sm:$0xf]
        %v2034 = vld [vmem:[%s771 + $0x3ec] sm:$0xf]
        %v2035 = vld [vmem:[%s771 + $0x3f0] sm:$0xf]
        %v2036 = vld [vmem:[%s771 + $0x3f4] sm:$0xf]
        %v2037 = vld [vmem:[%s771 + $0x3f8] sm:$0xf]
        %v2038 = vld [vmem:[%s771 + $0x3fc] sm:$0xf]
        %v2039 = vld [vmem:[%s774] sm:$0x1]
        %v2041 = vperm.slane %v2039, 0
        %v2299 = vunpack.c.l.b16 %v1783
        %v2300 = vunpack.c.l.b16 %v1784
        %v2301 = vunpack.c.l.b16 %v1785
        %v2302 = vunpack.c.l.b16 %v1786
        %v2303 = vunpack.c.l.b16 %v1787
        %v2304 = vunpack.c.l.b16 %v1788
        %v2305 = vunpack.c.l.b16 %v1789
        %v2306 = vunpack.c.l.b16 %v1790
        %v2307 = vunpack.c.l.b16 %v1791
        %v2308 = vunpack.c.l.b16 %v1792
        %v2309 = vunpack.c.l.b16 %v1793
        %v2310 = vunpack.c.l.b16 %v1794
        %v2311 = vunpack.c.l.b16 %v1795
        %v2312 = vunpack.c.l.b16 %v1796
        %v2313 = vunpack.c.l.b16 %v1797
        %v2314 = vunpack.c.l.b16 %v1798
        %v2315 = vunpack.c.l.b16 %v1799
        %v2316 = vunpack.c.l.b16 %v1800
        %v2317 = vunpack.c.l.b16 %v1801
        %v2318 = vunpack.c.l.b16 %v1802
        %v2319 = vunpack.c.l.b16 %v1803
        %v2320 = vunpack.c.l.b16 %v1804
        %v2321 = vunpack.c.l.b16 %v1805
        %v2322 = vunpack.c.l.b16 %v1806
        %v2323 = vunpack.c.l.b16 %v1807
        %v2324 = vunpack.c.l.b16 %v1808
        %v2325 = vunpack.c.l.b16 %v1809
        %v2326 = vunpack.c.l.b16 %v1810
        %v2327 = vunpack.c.l.b16 %v1811
        %v2328 = vunpack.c.l.b16 %v1812
        %v2329 = vunpack.c.l.b16 %v1813
        %v2330 = vunpack.c.l.b16 %v1814
        %v2331 = vunpack.c.l.b16 %v1815
        %v2332 = vunpack.c.l.b16 %v1816
        %v2333 = vunpack.c.l.b16 %v1817
        %v2334 = vunpack.c.l.b16 %v1818
        %v2335 = vunpack.c.l.b16 %v1819
        %v2336 = vunpack.c.l.b16 %v1820
        %v2337 = vunpack.c.l.b16 %v1821
        %v2338 = vunpack.c.l.b16 %v1822
        %v2339 = vunpack.c.l.b16 %v1823
        %v2340 = vunpack.c.l.b16 %v1824
        %v2341 = vunpack.c.l.b16 %v1825
        %v2342 = vunpack.c.l.b16 %v1826
        %v2343 = vunpack.c.l.b16 %v1827
        %v2344 = vunpack.c.l.b16 %v1828
        %v2345 = vunpack.c.l.b16 %v1829
        %v2346 = vunpack.c.l.b16 %v1830
        %v2347 = vunpack.c.l.b16 %v1831
        %v2348 = vunpack.c.l.b16 %v1832
        %v2349 = vunpack.c.l.b16 %v1833
        %v2350 = vunpack.c.l.b16 %v1834
        %v2351 = vunpack.c.l.b16 %v1835
        %v2352 = vunpack.c.l.b16 %v1836
        %v2353 = vunpack.c.l.b16 %v1837
        %v2354 = vunpack.c.l.b16 %v1838
        %v2355 = vunpack.c.l.b16 %v1839
        %v2356 = vunpack.c.l.b16 %v1840
        %v2357 = vunpack.c.l.b16 %v1841
        %v2358 = vunpack.c.l.b16 %v1842
        %v2359 = vunpack.c.l.b16 %v1843
        %v2360 = vunpack.c.l.b16 %v1844
        %v2361 = vunpack.c.l.b16 %v1845
        %v2362 = vunpack.c.l.b16 %v1846
        %v2363 = vunpack.c.l.b16 %v1847
        %v2364 = vunpack.c.l.b16 %v1848
        %v2365 = vunpack.c.l.b16 %v1849
        %v2366 = vunpack.c.l.b16 %v1850
        %v2367 = vunpack.c.l.b16 %v1851
        %v2368 = vunpack.c.l.b16 %v1852
        %v2369 = vunpack.c.l.b16 %v1853
        %v2370 = vunpack.c.l.b16 %v1854
        %v2371 = vunpack.c.l.b16 %v1855
        %v2372 = vunpack.c.l.b16 %v1856
        %v2373 = vunpack.c.l.b16 %v1857
        %v2374 = vunpack.c.l.b16 %v1858
        %v2375 = vunpack.c.l.b16 %v1859
        %v2376 = vunpack.c.l.b16 %v1860
        %v2377 = vunpack.c.l.b16 %v1861
        %v2378 = vunpack.c.l.b16 %v1862
        %v2379 = vunpack.c.l.b16 %v1863
        %v2380 = vunpack.c.l.b16 %v1864
        %v2381 = vunpack.c.l.b16 %v1865
        %v2382 = vunpack.c.l.b16 %v1866
        %v2383 = vunpack.c.l.b16 %v1867
        %v2384 = vunpack.c.l.b16 %v1868
        %v2385 = vunpack.c.l.b16 %v1869
        %v2386 = vunpack.c.l.b16 %v1870
        %v2387 = vunpack.c.l.b16 %v1871
        %v2388 = vunpack.c.l.b16 %v1872
        %v2389 = vunpack.c.l.b16 %v1873
        %v2390 = vunpack.c.l.b16 %v1874
        %v2391 = vunpack.c.l.b16 %v1875
        %v2392 = vunpack.c.l.b16 %v1876
        %v2393 = vunpack.c.l.b16 %v1877
        %v2394 = vunpack.c.l.b16 %v1878
        %v2395 = vunpack.c.l.b16 %v1879
        %v2396 = vunpack.c.l.b16 %v1880
        %v2397 = vunpack.c.l.b16 %v1881
        %v2398 = vunpack.c.l.b16 %v1882
        %v2399 = vunpack.c.l.b16 %v1883
        %v2400 = vunpack.c.l.b16 %v1884
        %v2401 = vunpack.c.l.b16 %v1885
        %v2402 = vunpack.c.l.b16 %v1886
        %v2403 = vunpack.c.l.b16 %v1887
        %v2404 = vunpack.c.l.b16 %v1888
        %v2405 = vunpack.c.l.b16 %v1889
        %v2406 = vunpack.c.l.b16 %v1890
        %v2407 = vunpack.c.l.b16 %v1891
        %v2408 = vunpack.c.l.b16 %v1892
        %v2409 = vunpack.c.l.b16 %v1893
        %v2410 = vunpack.c.l.b16 %v1894
        %v2411 = vunpack.c.l.b16 %v1895
        %v2412 = vunpack.c.l.b16 %v1896
        %v2413 = vunpack.c.l.b16 %v1897
        %v2414 = vunpack.c.l.b16 %v1898
        %v2415 = vunpack.c.l.b16 %v1899
        %v2416 = vunpack.c.l.b16 %v1900
        %v2417 = vunpack.c.l.b16 %v1901
        %v2418 = vunpack.c.l.b16 %v1902
        %v2419 = vunpack.c.l.b16 %v1903
        %v2420 = vunpack.c.l.b16 %v1904
        %v2421 = vunpack.c.l.b16 %v1905
        %v2422 = vunpack.c.l.b16 %v1906
        %v2423 = vunpack.c.l.b16 %v1907
        %v2424 = vunpack.c.l.b16 %v1908
        %v2425 = vunpack.c.l.b16 %v1909
        %v2426 = vunpack.c.l.b16 %v1910
        %v2427 = vunpack.c.l.b16 %v1911
        %v2428 = vunpack.c.l.b16 %v1912
        %v2429 = vunpack.c.l.b16 %v1913
        %v2430 = vunpack.c.l.b16 %v1914
        %v2431 = vunpack.c.l.b16 %v1915
        %v2432 = vunpack.c.l.b16 %v1916
        %v2433 = vunpack.c.l.b16 %v1917
        %v2434 = vunpack.c.l.b16 %v1918
        %v2435 = vunpack.c.l.b16 %v1919
        %v2436 = vunpack.c.l.b16 %v1920
        %v2437 = vunpack.c.l.b16 %v1921
        %v2438 = vunpack.c.l.b16 %v1922
        %v2439 = vunpack.c.l.b16 %v1923
        %v2440 = vunpack.c.l.b16 %v1924
        %v2441 = vunpack.c.l.b16 %v1925
        %v2442 = vunpack.c.l.b16 %v1926
        %v2443 = vunpack.c.l.b16 %v1927
        %v2444 = vunpack.c.l.b16 %v1928
        %v2445 = vunpack.c.l.b16 %v1929
        %v2446 = vunpack.c.l.b16 %v1930
        %v2447 = vunpack.c.l.b16 %v1931
        %v2448 = vunpack.c.l.b16 %v1932
        %v2449 = vunpack.c.l.b16 %v1933
        %v2450 = vunpack.c.l.b16 %v1934
        %v2451 = vunpack.c.l.b16 %v1935
        %v2452 = vunpack.c.l.b16 %v1936
        %v2453 = vunpack.c.l.b16 %v1937
        %v2454 = vunpack.c.l.b16 %v1938
        %v2455 = vunpack.c.l.b16 %v1939
        %v2456 = vunpack.c.l.b16 %v1940
        %v2457 = vunpack.c.l.b16 %v1941
        %v2458 = vunpack.c.l.b16 %v1942
        %v2459 = vunpack.c.l.b16 %v1943
        %v2460 = vunpack.c.l.b16 %v1944
        %v2461 = vunpack.c.l.b16 %v1945
        %v2462 = vunpack.c.l.b16 %v1946
        %v2463 = vunpack.c.l.b16 %v1947
        %v2464 = vunpack.c.l.b16 %v1948
        %v2465 = vunpack.c.l.b16 %v1949
        %v2466 = vunpack.c.l.b16 %v1950
        %v2467 = vunpack.c.l.b16 %v1951
        %v2468 = vunpack.c.l.b16 %v1952
        %v2469 = vunpack.c.l.b16 %v1953
        %v2470 = vunpack.c.l.b16 %v1954
        %v2471 = vunpack.c.l.b16 %v1955
        %v2472 = vunpack.c.l.b16 %v1956
        %v2473 = vunpack.c.l.b16 %v1957
        %v2474 = vunpack.c.l.b16 %v1958
        %v2475 = vunpack.c.l.b16 %v1959
        %v2476 = vunpack.c.l.b16 %v1960
        %v2477 = vunpack.c.l.b16 %v1961
        %v2478 = vunpack.c.l.b16 %v1962
        %v2479 = vunpack.c.l.b16 %v1963
        %v2480 = vunpack.c.l.b16 %v1964
        %v2481 = vunpack.c.l.b16 %v1965
        %v2482 = vunpack.c.l.b16 %v1966
        %v2483 = vunpack.c.l.b16 %v1967
        %v2484 = vunpack.c.l.b16 %v1968
        %v2485 = vunpack.c.l.b16 %v1969
        %v2486 = vunpack.c.l.b16 %v1970
        %v2487 = vunpack.c.l.b16 %v1971
        %v2488 = vunpack.c.l.b16 %v1972
        %v2489 = vunpack.c.l.b16 %v1973
        %v2490 = vunpack.c.l.b16 %v1974
        %v2491 = vunpack.c.l.b16 %v1975
        %v2492 = vunpack.c.l.b16 %v1976
        %v2493 = vunpack.c.l.b16 %v1977
        %v2494 = vunpack.c.l.b16 %v1978
        %v2495 = vunpack.c.l.b16 %v1979
        %v2496 = vunpack.c.l.b16 %v1980
        %v2497 = vunpack.c.l.b16 %v1981
        %v2498 = vunpack.c.l.b16 %v1982
        %v2499 = vunpack.c.l.b16 %v1983
        %v2500 = vunpack.c.l.b16 %v1984
        %v2501 = vunpack.c.l.b16 %v1985
        %v2502 = vunpack.c.l.b16 %v1986
        %v2503 = vunpack.c.l.b16 %v1987
        %v2504 = vunpack.c.l.b16 %v1988
        %v2505 = vunpack.c.l.b16 %v1989
        %v2506 = vunpack.c.l.b16 %v1990
        %v2507 = vunpack.c.l.b16 %v1991
        %v2508 = vunpack.c.l.b16 %v1992
        %v2509 = vunpack.c.l.b16 %v1993
        %v2510 = vunpack.c.l.b16 %v1994
        %v2511 = vunpack.c.l.b16 %v1995
        %v2512 = vunpack.c.l.b16 %v1996
        %v2513 = vunpack.c.l.b16 %v1997
        %v2514 = vunpack.c.l.b16 %v1998
        %v2515 = vunpack.c.l.b16 %v1999
        %v2516 = vunpack.c.l.b16 %v2000
        %v2517 = vunpack.c.l.b16 %v2001
        %v2518 = vunpack.c.l.b16 %v2002
        %v2519 = vunpack.c.l.b16 %v2003
        %v2520 = vunpack.c.l.b16 %v2004
        %v2521 = vunpack.c.l.b16 %v2005
        %v2522 = vunpack.c.l.b16 %v2006
        %v2523 = vunpack.c.l.b16 %v2007
        %v2524 = vunpack.c.l.b16 %v2008
        %v2525 = vunpack.c.l.b16 %v2009
        %v2526 = vunpack.c.l.b16 %v2010
        %v2527 = vunpack.c.l.b16 %v2011
        %v2528 = vunpack.c.l.b16 %v2012
        %v2529 = vunpack.c.l.b16 %v2013
        %v2530 = vunpack.c.l.b16 %v2014
        %v2531 = vunpack.c.l.b16 %v2015
        %v2532 = vunpack.c.l.b16 %v2016
        %v2533 = vunpack.c.l.b16 %v2017
        %v2534 = vunpack.c.l.b16 %v2018
        %v2535 = vunpack.c.l.b16 %v2019
        %v2536 = vunpack.c.l.b16 %v2020
        %v2537 = vunpack.c.l.b16 %v2021
        %v2538 = vunpack.c.l.b16 %v2022
        %v2539 = vunpack.c.l.b16 %v2023
        %v2540 = vunpack.c.l.b16 %v2024
        %v2541 = vunpack.c.l.b16 %v2025
        %v2542 = vunpack.c.l.b16 %v2026
        %v2543 = vunpack.c.l.b16 %v2027
        %v2544 = vunpack.c.l.b16 %v2028
        %v2545 = vunpack.c.l.b16 %v2029
        %v2546 = vunpack.c.l.b16 %v2030
        %v2547 = vunpack.c.l.b16 %v2031
        %v2548 = vunpack.c.l.b16 %v2032
        %v2549 = vunpack.c.l.b16 %v2033
        %v2550 = vunpack.c.l.b16 %v2034
        %v2551 = vunpack.c.l.b16 %v2035
        %v2552 = vunpack.c.l.b16 %v2036
        %v2553 = vunpack.c.l.b16 %v2037
        %v2554 = vunpack.c.l.b16 %v2038
        %v2555 = vpack.c.b16 %v2300, %v2299
        %v2556 = vpack.c.b16 %v2302, %v2301
        %v2557 = vpack.c.b16 %v2304, %v2303
        %v2558 = vpack.c.b16 %v2306, %v2305
        %v2559 = vpack.c.b16 %v2308, %v2307
        %v2560 = vpack.c.b16 %v2310, %v2309
        %v2561 = vpack.c.b16 %v2312, %v2311
        %v2562 = vpack.c.b16 %v2314, %v2313
        %v2563 = vpack.c.b16 %v2316, %v2315
        %v2564 = vpack.c.b16 %v2318, %v2317
        %v2565 = vpack.c.b16 %v2320, %v2319
        %v2566 = vpack.c.b16 %v2322, %v2321
        %v2567 = vpack.c.b16 %v2324, %v2323
        %v2568 = vpack.c.b16 %v2326, %v2325
        %v2569 = vpack.c.b16 %v2328, %v2327
        %v2570 = vpack.c.b16 %v2330, %v2329
        %v2571 = vpack.c.b16 %v2332, %v2331
        %v2572 = vpack.c.b16 %v2334, %v2333
        %v2573 = vpack.c.b16 %v2336, %v2335
        %v2574 = vpack.c.b16 %v2338, %v2337
        %v2575 = vpack.c.b16 %v2340, %v2339
        %v2576 = vpack.c.b16 %v2342, %v2341
        %v2577 = vpack.c.b16 %v2344, %v2343
        %v2578 = vpack.c.b16 %v2346, %v2345
        %v2579 = vpack.c.b16 %v2348, %v2347
        %v2580 = vpack.c.b16 %v2350, %v2349
        %v2581 = vpack.c.b16 %v2352, %v2351
        %v2582 = vpack.c.b16 %v2354, %v2353
        %v2583 = vpack.c.b16 %v2356, %v2355
        %v2584 = vpack.c.b16 %v2358, %v2357
        %v2585 = vpack.c.b16 %v2360, %v2359
        %v2586 = vpack.c.b16 %v2362, %v2361
        %v2587 = vpack.c.b16 %v2364, %v2363
        %v2588 = vpack.c.b16 %v2366, %v2365
        %v2589 = vpack.c.b16 %v2368, %v2367
        %v2590 = vpack.c.b16 %v2370, %v2369
        %v2591 = vpack.c.b16 %v2372, %v2371
        %v2592 = vpack.c.b16 %v2374, %v2373
        %v2593 = vpack.c.b16 %v2376, %v2375
        %v2594 = vpack.c.b16 %v2378, %v2377
        %v2595 = vpack.c.b16 %v2380, %v2379
        %v2596 = vpack.c.b16 %v2382, %v2381
        %v2597 = vpack.c.b16 %v2384, %v2383
        %v2598 = vpack.c.b16 %v2386, %v2385
        %v2599 = vpack.c.b16 %v2388, %v2387
        %v2600 = vpack.c.b16 %v2390, %v2389
        %v2601 = vpack.c.b16 %v2392, %v2391
        %v2602 = vpack.c.b16 %v2394, %v2393
        %v2603 = vpack.c.b16 %v2396, %v2395
        %v2604 = vpack.c.b16 %v2398, %v2397
        %v2605 = vpack.c.b16 %v2400, %v2399
        %v2606 = vpack.c.b16 %v2402, %v2401
        %v2607 = vpack.c.b16 %v2404, %v2403
        %v2608 = vpack.c.b16 %v2406, %v2405
        %v2609 = vpack.c.b16 %v2408, %v2407
        %v2610 = vpack.c.b16 %v2410, %v2409
        %v2611 = vpack.c.b16 %v2412, %v2411
        %v2612 = vpack.c.b16 %v2414, %v2413
        %v2613 = vpack.c.b16 %v2416, %v2415
        %v2614 = vpack.c.b16 %v2418, %v2417
        %v2615 = vpack.c.b16 %v2420, %v2419
        %v2616 = vpack.c.b16 %v2422, %v2421
        %v2617 = vpack.c.b16 %v2424, %v2423
        %v2618 = vpack.c.b16 %v2426, %v2425
        %v2619 = vpack.c.b16 %v2428, %v2427
        %v2620 = vpack.c.b16 %v2430, %v2429
        %v2621 = vpack.c.b16 %v2432, %v2431
        %v2622 = vpack.c.b16 %v2434, %v2433
        %v2623 = vpack.c.b16 %v2436, %v2435
        %v2624 = vpack.c.b16 %v2438, %v2437
        %v2625 = vpack.c.b16 %v2440, %v2439
        %v2626 = vpack.c.b16 %v2442, %v2441
        %v2627 = vpack.c.b16 %v2444, %v2443
        %v2628 = vpack.c.b16 %v2446, %v2445
        %v2629 = vpack.c.b16 %v2448, %v2447
        %v2630 = vpack.c.b16 %v2450, %v2449
        %v2631 = vpack.c.b16 %v2452, %v2451
        %v2632 = vpack.c.b16 %v2454, %v2453
        %v2633 = vpack.c.b16 %v2456, %v2455
        %v2634 = vpack.c.b16 %v2458, %v2457
        %v2635 = vpack.c.b16 %v2460, %v2459
        %v2636 = vpack.c.b16 %v2462, %v2461
        %v2637 = vpack.c.b16 %v2464, %v2463
        %v2638 = vpack.c.b16 %v2466, %v2465
        %v2639 = vpack.c.b16 %v2468, %v2467
        %v2640 = vpack.c.b16 %v2470, %v2469
        %v2641 = vpack.c.b16 %v2472, %v2471
        %v2642 = vpack.c.b16 %v2474, %v2473
        %v2643 = vpack.c.b16 %v2476, %v2475
        %v2644 = vpack.c.b16 %v2478, %v2477
        %v2645 = vpack.c.b16 %v2480, %v2479
        %v2646 = vpack.c.b16 %v2482, %v2481
        %v2647 = vpack.c.b16 %v2484, %v2483
        %v2648 = vpack.c.b16 %v2486, %v2485
        %v2649 = vpack.c.b16 %v2488, %v2487
        %v2650 = vpack.c.b16 %v2490, %v2489
        %v2651 = vpack.c.b16 %v2492, %v2491
        %v2652 = vpack.c.b16 %v2494, %v2493
        %v2653 = vpack.c.b16 %v2496, %v2495
        %v2654 = vpack.c.b16 %v2498, %v2497
        %v2655 = vpack.c.b16 %v2500, %v2499
        %v2656 = vpack.c.b16 %v2502, %v2501
        %v2657 = vpack.c.b16 %v2504, %v2503
        %v2658 = vpack.c.b16 %v2506, %v2505
        %v2659 = vpack.c.b16 %v2508, %v2507
        %v2660 = vpack.c.b16 %v2510, %v2509
        %v2661 = vpack.c.b16 %v2512, %v2511
        %v2662 = vpack.c.b16 %v2514, %v2513
        %v2663 = vpack.c.b16 %v2516, %v2515
        %v2664 = vpack.c.b16 %v2518, %v2517
        %v2665 = vpack.c.b16 %v2520, %v2519
        %v2666 = vpack.c.b16 %v2522, %v2521
        %v2667 = vpack.c.b16 %v2524, %v2523
        %v2668 = vpack.c.b16 %v2526, %v2525
        %v2669 = vpack.c.b16 %v2528, %v2527
        %v2670 = vpack.c.b16 %v2530, %v2529
        %v2671 = vpack.c.b16 %v2532, %v2531
        %v2672 = vpack.c.b16 %v2534, %v2533
        %v2673 = vpack.c.b16 %v2536, %v2535
        %v2674 = vpack.c.b16 %v2538, %v2537
        %v2675 = vpack.c.b16 %v2540, %v2539
        %v2676 = vpack.c.b16 %v2542, %v2541
        %v2677 = vpack.c.b16 %v2544, %v2543
        %v2678 = vpack.c.b16 %v2546, %v2545
        %v2679 = vpack.c.b16 %v2548, %v2547
        %v2680 = vpack.c.b16 %v2550, %v2549
        %v2681 = vpack.c.b16 %v2552, %v2551
        %v2682 = vpack.c.b16 %v2554, %v2553
        %2811 = vmatpush.bf16.msra.mxu0 %v2562
        %2812 = vmatpush.bf16.msra.mxu0 %v2561
        %2813 = vmatpush.bf16.msra.mxu0 %v2560
        %2814 = vmatpush.bf16.msra.mxu0 %v2559
        %2815 = vmatpush.bf16.msra.mxu0 %v2558
        %2816 = vmatpush.bf16.msra.mxu0 %v2557
        %2817 = vmatpush.bf16.msra.mxu0 %v2556
        %2818 = vmatpush.bf16.msra.mxu0 %v2555
        %2819 = vmatmul.bf16.gmra.mxu0 %v1767
        %v2820 = vpop.f32.mrf.mxu0
        %v2821 = vadd.f32 %v2041, %v2820
        %v2822 = vpop.f32.mrf.mxu0
        %v2823 = vadd.f32 %v2041, %v2822
        %2824 = vdwg.mxu0
        %2825 = vmatpush.bf16.msra.mxu0 %v2570
        %2826 = vmatpush.bf16.msra.mxu0 %v2569
        %2827 = vmatpush.bf16.msra.mxu0 %v2568
        %2828 = vmatpush.bf16.msra.mxu0 %v2567
        %2829 = vmatpush.bf16.msra.mxu0 %v2566
        %2830 = vmatpush.bf16.msra.mxu0 %v2565
        %2831 = vmatpush.bf16.msra.mxu0 %v2564
        %2832 = vmatpush.bf16.msra.mxu0 %v2563
        %2833 = vmatmul.bf16.gmra.mxu0 %v1768
        %v2834 = vpop.f32.mrf.mxu0
        %v2835 = vadd.f32 %v2821, %v2834
        %v2836 = vpop.f32.mrf.mxu0
        %v2837 = vadd.f32 %v2823, %v2836
        %2838 = vdwg.mxu0
        %2839 = vmatpush.bf16.msra.mxu0 %v2578
        %2840 = vmatpush.bf16.msra.mxu0 %v2577
        %2841 = vmatpush.bf16.msra.mxu0 %v2576
        %2842 = vmatpush.bf16.msra.mxu0 %v2575
        %2843 = vmatpush.bf16.msra.mxu0 %v2574
        %2844 = vmatpush.bf16.msra.mxu0 %v2573
        %2845 = vmatpush.bf16.msra.mxu0 %v2572
        %2846 = vmatpush.bf16.msra.mxu0 %v2571
        %2847 = vmatmul.bf16.gmra.mxu0 %v1769
        %v2848 = vpop.f32.mrf.mxu0
        %v2849 = vadd.f32 %v2835, %v2848
        %v2850 = vpop.f32.mrf.mxu0
        %v2851 = vadd.f32 %v2837, %v2850
        %2852 = vdwg.mxu0
        %2853 = vmatpush.bf16.msra.mxu0 %v2586
        %2854 = vmatpush.bf16.msra.mxu0 %v2585
        %2855 = vmatpush.bf16.msra.mxu0 %v2584
        %2856 = vmatpush.bf16.msra.mxu0 %v2583
        %2857 = vmatpush.bf16.msra.mxu0 %v2582
        %2858 = vmatpush.bf16.msra.mxu0 %v2581
        %2859 = vmatpush.bf16.msra.mxu0 %v2580
        %2860 = vmatpush.bf16.msra.mxu0 %v2579
        %2861 = vmatmul.bf16.gmra.mxu0 %v1770
        %v2862 = vpop.f32.mrf.mxu0
        %v2863 = vadd.f32 %v2849, %v2862
        %v2864 = vpop.f32.mrf.mxu0
        %v2865 = vadd.f32 %v2851, %v2864
        %2866 = vdwg.mxu0
        %2867 = vmatpush.bf16.msra.mxu0 %v2594
        %2868 = vmatpush.bf16.msra.mxu0 %v2593
        %2869 = vmatpush.bf16.msra.mxu0 %v2592
        %2870 = vmatpush.bf16.msra.mxu0 %v2591
        %2871 = vmatpush.bf16.msra.mxu0 %v2590
        %2872 = vmatpush.bf16.msra.mxu0 %v2589
        %2873 = vmatpush.bf16.msra.mxu0 %v2588
        %2874 = vmatpush.bf16.msra.mxu0 %v2587
        %2875 = vmatmul.bf16.gmra.mxu0 %v1771
        %v2876 = vpop.f32.mrf.mxu0
        %v2877 = vadd.f32 %v2863, %v2876
        %v2878 = vpop.f32.mrf.mxu0
        %v2879 = vadd.f32 %v2865, %v2878
        %2880 = vdwg.mxu0
        %2881 = vmatpush.bf16.msra.mxu0 %v2602
        %2882 = vmatpush.bf16.msra.mxu0 %v2601
        %2883 = vmatpush.bf16.msra.mxu0 %v2600
        %2884 = vmatpush.bf16.msra.mxu0 %v2599
        %2885 = vmatpush.bf16.msra.mxu0 %v2598
        %2886 = vmatpush.bf16.msra.mxu0 %v2597
        %2887 = vmatpush.bf16.msra.mxu0 %v2596
        %2888 = vmatpush.bf16.msra.mxu0 %v2595
        %2889 = vmatmul.bf16.gmra.mxu0 %v1772
        %v2890 = vpop.f32.mrf.mxu0
        %v2891 = vadd.f32 %v2877, %v2890
        %v2892 = vpop.f32.mrf.mxu0
        %v2893 = vadd.f32 %v2879, %v2892
        %2894 = vdwg.mxu0
        %2895 = vmatpush.bf16.msra.mxu0 %v2610
        %2896 = vmatpush.bf16.msra.mxu0 %v2609
        %2897 = vmatpush.bf16.msra.mxu0 %v2608
        %2898 = vmatpush.bf16.msra.mxu0 %v2607
        %2899 = vmatpush.bf16.msra.mxu0 %v2606
        %2900 = vmatpush.bf16.msra.mxu0 %v2605
        %2901 = vmatpush.bf16.msra.mxu0 %v2604
        %2902 = vmatpush.bf16.msra.mxu0 %v2603
        %2903 = vmatmul.bf16.gmra.mxu0 %v1773
        %v2904 = vpop.f32.mrf.mxu0
        %v2905 = vadd.f32 %v2891, %v2904
        %v2906 = vpop.f32.mrf.mxu0
        %v2907 = vadd.f32 %v2893, %v2906
        %2908 = vdwg.mxu0
        %2909 = vmatpush.bf16.msra.mxu0 %v2618
        %2910 = vmatpush.bf16.msra.mxu0 %v2617
        %2911 = vmatpush.bf16.msra.mxu0 %v2616
        %2912 = vmatpush.bf16.msra.mxu0 %v2615
        %2913 = vmatpush.bf16.msra.mxu0 %v2614
        %2914 = vmatpush.bf16.msra.mxu0 %v2613
        %2915 = vmatpush.bf16.msra.mxu0 %v2612
        %2916 = vmatpush.bf16.msra.mxu0 %v2611
        %2917 = vmatmul.bf16.gmra.mxu0 %v1774
        %v2918 = vpop.f32.mrf.mxu0
        %v2919 = vadd.f32 %v2905, %v2918
        %v2920 = vpop.f32.mrf.mxu0
        %v2921 = vadd.f32 %v2907, %v2920
        %2922 = vdwg.mxu0
        %2923 = vmatpush.bf16.msra.mxu0 %v2626
        %2924 = vmatpush.bf16.msra.mxu0 %v2625
        %2925 = vmatpush.bf16.msra.mxu0 %v2624
        %2926 = vmatpush.bf16.msra.mxu0 %v2623
        %2927 = vmatpush.bf16.msra.mxu0 %v2622
        %2928 = vmatpush.bf16.msra.mxu0 %v2621
        %2929 = vmatpush.bf16.msra.mxu0 %v2620
        %2930 = vmatpush.bf16.msra.mxu0 %v2619
        %2931 = vmatmul.bf16.gmra.mxu0 %v1775
        %v2932 = vpop.f32.mrf.mxu0
        %v2933 = vadd.f32 %v2919, %v2932
        %v2934 = vpop.f32.mrf.mxu0
        %v2935 = vadd.f32 %v2921, %v2934
        %2936 = vdwg.mxu0
        %2937 = vmatpush.bf16.msra.mxu0 %v2634
        %2938 = vmatpush.bf16.msra.mxu0 %v2633
        %2939 = vmatpush.bf16.msra.mxu0 %v2632
        %2940 = vmatpush.bf16.msra.mxu0 %v2631
        %2941 = vmatpush.bf16.msra.mxu0 %v2630
        %2942 = vmatpush.bf16.msra.mxu0 %v2629
        %2943 = vmatpush.bf16.msra.mxu0 %v2628
        %2944 = vmatpush.bf16.msra.mxu0 %v2627
        %2945 = vmatmul.bf16.gmra.mxu0 %v1776
        %v2946 = vpop.f32.mrf.mxu0
        %v2947 = vadd.f32 %v2933, %v2946
        %v2948 = vpop.f32.mrf.mxu0
        %v2949 = vadd.f32 %v2935, %v2948
        %2950 = vdwg.mxu0
        %2951 = vmatpush.bf16.msra.mxu0 %v2642
        %2952 = vmatpush.bf16.msra.mxu0 %v2641
        %2953 = vmatpush.bf16.msra.mxu0 %v2640
        %2954 = vmatpush.bf16.msra.mxu0 %v2639
        %2955 = vmatpush.bf16.msra.mxu0 %v2638
        %2956 = vmatpush.bf16.msra.mxu0 %v2637
        %2957 = vmatpush.bf16.msra.mxu0 %v2636
        %2958 = vmatpush.bf16.msra.mxu0 %v2635
        %2959 = vmatmul.bf16.gmra.mxu0 %v1777
        %v2960 = vpop.f32.mrf.mxu0
        %v2961 = vadd.f32 %v2947, %v2960
        %v2962 = vpop.f32.mrf.mxu0
        %v2963 = vadd.f32 %v2949, %v2962
        %2964 = vdwg.mxu0
        %2965 = vmatpush.bf16.msra.mxu0 %v2650
        %2966 = vmatpush.bf16.msra.mxu0 %v2649
        %2967 = vmatpush.bf16.msra.mxu0 %v2648
        %2968 = vmatpush.bf16.msra.mxu0 %v2647
        %2969 = vmatpush.bf16.msra.mxu0 %v2646
        %2970 = vmatpush.bf16.msra.mxu0 %v2645
        %2971 = vmatpush.bf16.msra.mxu0 %v2644
        %2972 = vmatpush.bf16.msra.mxu0 %v2643
        %2973 = vmatmul.bf16.gmra.mxu0 %v1778
        %v2974 = vpop.f32.mrf.mxu0
        %v2975 = vadd.f32 %v2961, %v2974
        %v2976 = vpop.f32.mrf.mxu0
        %v2977 = vadd.f32 %v2963, %v2976
        %2978 = vdwg.mxu0
        %2979 = vmatpush.bf16.msra.mxu0 %v2658
        %2980 = vmatpush.bf16.msra.mxu0 %v2657
        %2981 = vmatpush.bf16.msra.mxu0 %v2656
        %2982 = vmatpush.bf16.msra.mxu0 %v2655
        %2983 = vmatpush.bf16.msra.mxu0 %v2654
        %2984 = vmatpush.bf16.msra.mxu0 %v2653
        %2985 = vmatpush.bf16.msra.mxu0 %v2652
        %2986 = vmatpush.bf16.msra.mxu0 %v2651
        %2987 = vmatmul.bf16.gmra.mxu0 %v1779
        %v2988 = vpop.f32.mrf.mxu0
        %v2989 = vadd.f32 %v2975, %v2988
        %v2990 = vpop.f32.mrf.mxu0
        %v2991 = vadd.f32 %v2977, %v2990
        %2992 = vdwg.mxu0
        %2993 = vmatpush.bf16.msra.mxu0 %v2666
        %2994 = vmatpush.bf16.msra.mxu0 %v2665
        %2995 = vmatpush.bf16.msra.mxu0 %v2664
        %2996 = vmatpush.bf16.msra.mxu0 %v2663
        %2997 = vmatpush.bf16.msra.mxu0 %v2662
        %2998 = vmatpush.bf16.msra.mxu0 %v2661
        %2999 = vmatpush.bf16.msra.mxu0 %v2660
        %3000 = vmatpush.bf16.msra.mxu0 %v2659
        %3001 = vmatmul.bf16.gmra.mxu0 %v1780
        %v3002 = vpop.f32.mrf.mxu0
        %v3003 = vadd.f32 %v2989, %v3002
        %v3004 = vpop.f32.mrf.mxu0
        %v3005 = vadd.f32 %v2991, %v3004
        %3006 = vdwg.mxu0
        %3007 = vmatpush.bf16.msra.mxu0 %v2674
        %3008 = vmatpush.bf16.msra.mxu0 %v2673
        %3009 = vmatpush.bf16.msra.mxu0 %v2672
        %3010 = vmatpush.bf16.msra.mxu0 %v2671
        %3011 = vmatpush.bf16.msra.mxu0 %v2670
        %3012 = vmatpush.bf16.msra.mxu0 %v2669
        %3013 = vmatpush.bf16.msra.mxu0 %v2668
        %3014 = vmatpush.bf16.msra.mxu0 %v2667
        %3015 = vmatmul.bf16.gmra.mxu0 %v1781
        %v3016 = vpop.f32.mrf.mxu0
        %v3017 = vadd.f32 %v3003, %v3016
        %v3018 = vpop.f32.mrf.mxu0
        %v3019 = vadd.f32 %v3005, %v3018
        %3020 = vdwg.mxu0
        %3021 = vmatpush.bf16.msra.mxu0 %v2682
        %3022 = vmatpush.bf16.msra.mxu0 %v2681
        %3023 = vmatpush.bf16.msra.mxu0 %v2680
        %3024 = vmatpush.bf16.msra.mxu0 %v2679
        %3025 = vmatpush.bf16.msra.mxu0 %v2678
        %3026 = vmatpush.bf16.msra.mxu0 %v2677
        %3027 = vmatpush.bf16.msra.mxu0 %v2676
        %3028 = vmatpush.bf16.msra.mxu0 %v2675
        %3029 = vmatmul.bf16.gmra.mxu0 %v1782
        %v3030 = vpop.f32.mrf.mxu0
        %v3031 = vadd.f32 %v3017, %v3030
        %v3032 = vpop.f32.mrf.mxu0
        %v3033 = vadd.f32 %v3019, %v3032
        %3034 = vdwg.mxu0
        %v3035 = vadd.f32 %v1277, %v3031
        %v3036 = vadd.f32 %v1278, %v3033
        %v3037 = vld [vmem:[%s783] sm:$0x1]
        %v3038 = vld [vmem:[%s786] sm:$0x1]
        %v3039 = vsel %vm853, %v3035, 0.0
        %3040 = vadd.xlane.f32.xlu0 %v3039
        %v3041 = vpop.xlane.xlu0 %3040
        %v3042 = vsel %vm853, %v3036, 0.0
        %3043 = vadd.xlane.f32.xlu0 %v3042
        %v3044 = vpop.xlane.xlu0 %3043
        %v3045 = vmul.f32 %v3041, %v1230
        %v3046 = vmul.f32 %v3044, %v1230
        %v3047 = vsub.f32 %v3035, %v3045
        %v3048 = vsub.f32 %v3036, %v3046
        %v3049 = vmul.f32 %v3047, %v3047
        %v3050 = vmul.f32 %v3048, %v3048
        %v3051 = vsel %vm853, %v3049, 0.0
        %3052 = vadd.xlane.f32.xlu0 %v3051
        %v3053 = vpop.xlane.xlu0 %3052
        %v3054 = vsel %vm853, %v3050, 0.0
        %3055 = vadd.xlane.f32.xlu0 %v3054
        %v3056 = vpop.xlane.xlu0 %3055
        %v3057 = vmul.f32 %v3053, %v1230
        %v3058 = vmul.f32 %v3056, %v1230
        %v3059 = vadd.f32 %v3057, 1e-05
        %v3060 = vadd.f32 %v3058, 1e-05
        %v3061 = vrsqrt.pop %v3059
        %v3062 = vmul.f32 %v3061, %v3059
        %v3063 = vmul.f32 %v3062, %v3061
        %v3064 = vmul.f32 0.5, %v3063
        %v3065 = vsub.f32 1.5, %v3064
        %v3066 = vmul.f32 %v3061, %v3065
        %vm3067 = vweird.f32 %v3059
        %vm3068 = vweird.f32 %v3061
        %vm3069 = vmor %vm3067, %vm3068
        %v3070 = vsel %vm3069, %v3061, %v3066
        %v3071 = vrsqrt.pop %v3060
        %v3072 = vmul.f32 %v3071, %v3060
        %v3073 = vmul.f32 %v3072, %v3071
        %v3074 = vmul.f32 0.5, %v3073
        %v3075 = vsub.f32 1.5, %v3074
        %v3076 = vmul.f32 %v3071, %v3075
        %vm3077 = vweird.f32 %v3060
        %vm3078 = vweird.f32 %v3071
        %vm3079 = vmor %vm3077, %vm3078
        %v3080 = vsel %vm3079, %v3071, %v3076
        %v3081 = vmul.f32 %v3047, %v3070
        %v3082 = vmul.f32 %v3048, %v3080
        %v3084 = vperm.slane %v3037, 0
        %v3086 = vmul.f32 %v3081, %v3084
        %v3087 = vmul.f32 %v3082, %v3084
        %v3089 = vperm.slane %v3038, 0
        %v3091 = vadd.f32 %v3086, %v3089
        %v3092 = vadd.f32 %v3087, %v3089
        %3093 = vst.msk [vmem:[#allocation2] sm:$0xff] %vm853, %v3091
        %3094 = vst.msk [vmem:[#allocation2 + $0x8] sm:$0xff] %vm853, %v3092
        %p3095 = scmp.eq.s32.totalorder %s34, 1
        // Predicated region
        $region97: #{_lambda_.1} parent=91 // pred_check
          %p3096 = pneg %p3095
        $region98: #{_lambda_.1} parent=91 // pred_check_branch
          %3098 = sbr.rel (%p3096) target = $region100
        $region99: #{_lambda_.1} parent=91 // pred_region
          %3099 = vst.msk [vmem:[#allocation5] sm:$0xff] %vm853, %v3091
          %3100 = vst.msk [vmem:[#allocation5 + $0x8] sm:$0xff] %vm853, %v3092
          %v3101 = vpack.c.bf16 %v3092, %v3091
          %v3102 = vld [vmem:[%s16] sm:$0xf]
          %v3103 = vld [vmem:[%s16 + $0x4] sm:$0xf]
          %v3104 = vld [vmem:[%s16 + $0x8] sm:$0xf]
          %v3105 = vld [vmem:[%s16 + $0xc] sm:$0xf]
          %v3106 = vld [vmem:[%s17] sm:$0x1]
          %v3108 = vperm.slane %v3106, 0
          %v3114 = vunpack.c.l.b16 %v3102
          %v3115 = vunpack.c.l.b16 %v3103
          %v3116 = vunpack.c.l.b16 %v3104
          %v3117 = vunpack.c.l.b16 %v3105
          %v3118 = vpack.c.b16 %v3115, %v3114
          %v3119 = vpack.c.b16 %v3117, %v3116
          %v3123 = vsel %vm853, %v3101, 0
          %3125 = vmatpush.bf16.msra.mxu0 0
          %3126 = vmatpush.bf16.msra.mxu0 0
          %3127 = vmatpush.bf16.msra.mxu0 0
          %3128 = vmatpush.bf16.msra.mxu0 0
          %3129 = vmatpush.bf16.msra.mxu0 0
          %3130 = vmatpush.bf16.msra.mxu0 0
          %3131 = vmatpush.bf16.msra.mxu0 %v3119
          %3132 = vmatpush.bf16.msra.mxu0 %v3118
          %3133 = vmatmul.bf16.gmra.mxu0 %v3123
          %v3134 = vpop.f32.mrf.mxu0
          %v3135 = vadd.f32 %v3108, %v3134
          %v3136 = vpop.f32.mrf.mxu0
          %v3137 = vadd.f32 %v3108, %v3136
          %3138 = vdwg.mxu0
          %v3139 = vld [vmem:[%s1] sm:$0xff]
          %v3140 = vld [vmem:[%s1 + $0x8] sm:$0xff]
          %v3141 = vmul.f32 %v3135, 0.5
          %v3142 = vmul.f32 %v3137, 0.5
          %v3143 = vmul.f32 %v3141, 1.442695
          %v3144 = vpow.pop %v3143
          %v3145 = vmul.f32 %v3142, 1.442695
          %v3146 = vpow.pop %v3145
          %3149 = vrot.lane.b32.xlu0 %v3144, 120
          %v3150 = vpop.permute.xlu0 %3149
          %3151 = vrot.lane.b32.xlu0 %v3146, 120
          %v3152 = vpop.permute.xlu0 %3151
          %v3155 = vmul.f32 %v3139, %v3150
          %v3156 = vmul.f32 %v3140, %v3152
          %v3157 = vadd.f32 %v3155, %v3135
          %v3158 = vadd.f32 %v3156, %v3137
          %3161 = vrot.lane.b32.xlu0 %v3135, 8
          %v3162 = vpop.permute.xlu0 %3161
          %3163 = vrot.lane.b32.xlu0 %v3137, 8
          %v3164 = vpop.permute.xlu0 %3163
          %v3167 = vsel %vm878, %v3157, %v3162
          %v3168 = vsel %vm878, %v3158, %v3164
          %v3169 = vsel %vm899, %v3167, %v3162
          %v3170 = vsel %vm899, %v3168, %v3164
          %v3171 = vsel %vm1173, %v3169, 0.0
          %v3172 = vsel %vm1173, %v3170, 0.0
          %3173 = vst [vmem:[%s18] sm:$0xff] %v3171
          %3174 = vst [vmem:[%s18 + $0x8] sm:$0xff] %v3172
        $region100: #{_lambda_.1} parent=91 // pred_fallthru
          _
        // Predicated region
        $region101: #{_lambda_.1} parent=91 // pred_check
          %p3175 = pneg %p485
        $region102: #{_lambda_.1} parent=91 // pred_check_branch
          %3177 = sbr.rel (%p3175) target = $region104
        $region103: #{_lambda_.1} parent=91 // pred_region
          _
        $region104: #{_lambda_.1} parent=91 // pred_fallthru
          _
        // Predicated region
        $region105: #{_lambda_.1} parent=91 // pred_check
          %p3178 = pneg %p506
        $region106: #{_lambda_.1} parent=91 // pred_check_branch
          %3180 = sbr.rel (%p3178) target = $region108
        $region107: #{_lambda_.1} parent=91 // pred_region
          %3182 = vsyncadd [#allocation4], 0
          %s3183 = sshll.u32 [#allocation3], 4
          %s3184 = int_to_ptr.vmem [resolvable:$true] %s3183
          %s3185 = sshll.u32 %s19, 4
          %s3186 = int_to_ptr.hbm [resolvable:$true] %s3185
          %3191 = dma.vmem_to_hbm [thread:$0]  %s3184, 256, %s3186, [#allocation4], 128, 128, 8
        $region108: #{_lambda_.1} parent=91 // pred_fallthru
          _
        // Predicated region
        $region109: #{_lambda_.1} parent=91 // pred_check
          %p3192 = pneg %p527
        $region110: #{_lambda_.1} parent=91 // pred_check_branch
          %3194 = sbr.rel (%p3192) target = $region112
        $region111: #{_lambda_.1} parent=91 // pred_region
          %3196 = vsyncadd [#allocation6], 0
          %s3197 = sshll.u32 [#allocation5], 4
          %s3198 = int_to_ptr.vmem [resolvable:$true] %s3197
          %s3199 = sshll.u32 %s20, 4
          %s3200 = int_to_ptr.hbm [resolvable:$true] %s3199
          %3205 = dma.vmem_to_hbm [thread:$0]  %s3198, 256, %s3200, [#allocation6], 128, 128, 8
        $region112: #{_lambda_.1} parent=91 // pred_fallthru
          _
        // Predicated region
        $region113: #{_lambda_.1} parent=91 // pred_check
          %p3206 = pneg %p485
        $region114: #{_lambda_.1} parent=91 // pred_check_branch
          %3208 = sbr.rel (%p3206) target = $region116
        $region115: #{_lambda_.1} parent=91 // pred_region
          _
        $region116: #{_lambda_.1} parent=91 // pred_fallthru
          _
        // Predicated region
        $region117: #{_lambda_.1} parent=91 // pred_check
          %p3209 = pneg %p506
        $region118: #{_lambda_.1} parent=91 // pred_check_branch
          %3211 = sbr.rel (%p3209) target = $region120
        $region119: #{_lambda_.1} parent=91 // pred_region
          %3213 = dma.done [#allocation4], 256
        $region120: #{_lambda_.1} parent=91 // pred_fallthru
          _
        // Predicated region
        $region121: #{_lambda_.1} parent=91 // pred_check
          %p3214 = pneg %p527
        $region122: #{_lambda_.1} parent=91 // pred_check_branch
          %3216 = sbr.rel (%p3214) target = $region124
        $region123: #{_lambda_.1} parent=91 // pred_region
          %3218 = dma.done [#allocation6], 256
        $region124: #{_lambda_.1} parent=91 // pred_fallthru
          _
      $region92: #{_lambda_.1} parent=5 // pred_fallthru
        _
      %p3219 = scmp.le.s32.totalorder 2, %s29
      // Predicated region
      $region125: #{_lambda_.1} parent=5 // pred_check
        %p3220 = pneg %p3219
      $region126: #{_lambda_.1} parent=5 // pred_check_branch
        %3222 = sbr.rel (%p3220) target = $region128
      $region127: #{_lambda_.1} parent=5 // pred_region
        %s3223 = ssub.s32 %s29, 2
      $region128: #{_lambda_.1} parent=5 // pred_fallthru
        _
    $region6: #{_lambda_.1} parent=1 // loop_footer
      %s33 = sadd.s32 1, %s29
    $region7: #{_lambda_.1} parent=1 // loop_footer_branch
      %28 = sbr.rel target = $region3
    $region8: #{_lambda_.1} parent=1 // loop_exit
      _
    %3224 = vsyncpa [#allocation4], 1
    %s3225 = scalar_lea.sflag [#allocation4], 1
    %3226 = vsyncpa %s3225, 1
    %3227 = vsyncpa [#allocation6], 1

</llo_original>
